<compile_context>
chip_gen: v7x
topology: tpu7x:2x2x1
jax: 0.10.0
libtpu: 0.0.40
codegen_flags: <defaults>
</compile_context>

<pallas_src>
import functools
import numpy as np

import jax
import jax.numpy as jnp
from jax.experimental import pallas as pl
from jax.experimental.pallas import tpu as pltpu


# ----------------------------- shared math ---------------------------------


def _layernorm(x, g, b, eps=1e-5):
    # PyTorch nn.LayerNorm: biased variance over the last dim, eps=1e-5.
    mean = jnp.mean(x, axis=-1, keepdims=True)
    var = jnp.mean((x - mean) ** 2, axis=-1, keepdims=True)
    return (x - mean) * jax.lax.rsqrt(var + eps) * g + b


# ------------------- fused encoder-stack + head kernel ----------------------


def kbert_kernel(
    x_emb_hbm, pad_ref,
    wq_ref, bq_ref, wk_ref, bk_ref, wv_ref, bv_ref, wo_ref, bo_ref,
    g1_ref, b1_ref, w1_ref, w2_ref, g2_ref, b2_ref,
    wfc_ref, bfc_ref, bng_ref, bnb_ref, wcls_ref, bcls_ref,
    logits_ref,
    x_scr, dma_sem,
    *, B, S, D, H, d_k, d_v, n_layers,
):
    l = pl.program_id(0)
    BS = B * S
    HB = H * B

    # Layer 0: DMA the embedding output (kept in HBM, memory_space=pl.ANY)
    # into the resident VMEM hidden state once.
    @pl.when(l == 0)
    def _():
        cp = pltpu.make_async_copy(x_emb_hbm, x_scr, dma_sem)
        cp.start()
        cp.wait()

    x = x_scr[...]                                        # (B*S, D) f32
    xb = x.astype(jnp.bfloat16)

    # ---------------- multi-head self-attention ----------------------------
    # Three lane-dense 2-D matmuls (bf16 in, f32 accumulate). The 1/sqrt(d_k)
    # scale is folded into Wq/bq at pack time.
    q2 = jnp.dot(xb, wq_ref[0], preferred_element_type=jnp.float32) + bq_ref[0]
    k2 = jnp.dot(xb, wk_ref[0], preferred_element_type=jnp.float32) + bk_ref[0]
    v2 = jnp.dot(xb, wv_ref[0], preferred_element_type=jnp.float32) + bv_ref[0]

    # Split heads onto the (cheap) leading batch axis: (BS, H*d) -> (H*B, S, d)
    # via static leading-dim reshapes + axis-0 concat (head-major ordering).
    def split_heads(t2, d):
        return jnp.concatenate(
            [t2[:, h * d:(h + 1) * d].reshape(B, S, d) for h in range(H)],
            axis=0)

    q = split_heads(q2, d_k).astype(jnp.bfloat16)          # (H*B, S, d_k)
    k = split_heads(k2, d_k).astype(jnp.bfloat16)
    v = split_heads(v2, d_v).astype(jnp.bfloat16)

    # Additive key-pad bias (-1e9 on PAD keys), precomputed in the wrapper.
    bias = jnp.broadcast_to(pad_ref[...][None], (H, B, 1, S)).reshape(HB, 1, S)

    s = jnp.einsum("bqd,bkd->bqk", q, k,
                   preferred_element_type=jnp.float32) + bias      # (H*B, S, S)
    s = s - jnp.max(s, axis=-1, keepdims=True)
    e = jnp.exp(s)
    attn = e * pl.reciprocal(jnp.sum(e, axis=-1, keepdims=True), approx=True)
    ctx = jnp.einsum("bqk,bkd->bqd", attn.astype(jnp.bfloat16), v,
                     preferred_element_type=jnp.float32)           # (H*B, S, d_v)

    # Merge heads back to (BS, H*d_v) and do ONE output-projection matmul so
    # the MXU accumulates over heads via the K dimension.
    ctx2 = jnp.concatenate(
        [ctx[h * B:(h + 1) * B].reshape(BS, d_v) for h in range(H)], axis=-1)
    attn_out = jnp.dot(ctx2.astype(jnp.bfloat16), wo_ref[0],
                       preferred_element_type=jnp.float32) + bo_ref[0]
    y = _layernorm(attn_out + x, g1_ref[0], b1_ref[0])

    # ---------------- position-wise FFN -------------------------------------
    ff = jnp.maximum(
        jnp.dot(y.astype(jnp.bfloat16), w1_ref[0],
                preferred_element_type=jnp.float32), 0.0)
    ff = jnp.dot(ff.astype(jnp.bfloat16), w2_ref[0],
                 preferred_element_type=jnp.float32)
    out = _layernorm(ff + y, g2_ref[0], b2_ref[0])

    x_scr[...] = out                                      # carry to next layer

    # ---------------- classification head (fused into last layer) -----------
    @pl.when(l == n_layers - 1)
    def _():
        # h_global = output[:, 0] -> one strided sublane read (rows 0, S, 2S..)
        h_global = x_scr[pl.ds(0, B, stride=S), :]                  # (B, D)
        z = jnp.dot(h_global, wfc_ref[...],
                    preferred_element_type=jnp.float32) + bfc_ref[...]
        z = jnp.maximum(z, 0.0)
        # BatchNorm1d, training-mode batch statistics (module's default state).
        mean = jnp.mean(z, axis=0, keepdims=True)
        var = jnp.mean((z - mean) ** 2, axis=0, keepdims=True)
        zn = (z - mean) * jax.lax.rsqrt(var + 1e-5) * bng_ref[...] + bnb_ref[...]
        logits_ref[...] = (jnp.dot(zn, wcls_ref[...],
                                   preferred_element_type=jnp.float32)
                           + bcls_ref[...])


def kbert_encoder_head(x_emb, pad_bias, packed, head_p, cfg):
    B, _, S = pad_bias.shape
    D, H = cfg["d_model"], cfg["n_heads"]
    dk, dv, dff, nL = cfg["d_k"], cfg["d_v"], cfg["d_ff"], cfg["n_layers"]
    G = head_p["wcls"].shape[1]
    BS = B * S

    x2 = x_emb.reshape(BS, D)

    def per_layer(shape):
        nd = len(shape)
        return pl.BlockSpec((1,) + shape, lambda l, nd=nd: (l,) + (0,) * nd)

    def const(shape):
        nd = len(shape)
        return pl.BlockSpec(shape, lambda l, nd=nd: (0,) * nd)

    kern = functools.partial(kbert_kernel, B=B, S=S, D=D, H=H,
                             d_k=dk, d_v=dv, n_layers=nL)

    # Advisory cost estimate for XLA scheduling around the custom call.
    flops_layer = (2 * BS * D * (2 * H * dk + H * dv)   # Q/K/V projections
                   + 2 * H * B * S * S * dk             # scores
                   + 2 * H * B * S * S * dv             # context
                   + 2 * BS * (H * dv) * D              # output projection
                   + 4 * BS * D * dff)                  # FFN
    flops = nL * flops_layer + 2 * B * D * D + 2 * B * D * G
    transc = nL * H * B * S * S
    bytes_acc = int(sum(int(a.nbytes) for a in
                        [x2, pad_bias] + list(packed.values()) + list(head_p.values()))
                    + B * G * 4)

    # Explicit VMEM budget: resident scratch + 2x (double-buffered) per-layer
    # weights + const head weights + live score/activation tensors + headroom.
    per_layer_bytes = sum(int(v.nbytes) for v in packed.values()) // nL
    const_bytes = sum(int(v.nbytes) for v in head_p.values()) + int(pad_bias.nbytes)
    live_act_bytes = 4 * (3 * H * B * S * S
                          + 8 * BS * max(D, dff, 2 * H * dk + H * dv))
    vmem_est = 2 * per_layer_bytes + const_bytes + live_act_bytes + BS * D * 4
    vmem_limit = int(min(max(2 * vmem_est, 32 * 2**20), 64 * 2**20))

    grid_spec = pltpu.PrefetchScalarGridSpec(
        num_scalar_prefetch=0,
        grid=(nL,),
        in_specs=[
            pl.BlockSpec(memory_space=pl.ANY),          # embedding out (HBM)
            const((B, 1, S)),                           # additive key-pad bias
            per_layer((D, H * dk)), per_layer((1, H * dk)),   # Wq (bf16), bq
            per_layer((D, H * dk)), per_layer((1, H * dk)),   # Wk, bk
            per_layer((D, H * dv)), per_layer((1, H * dv)),   # Wv, bv
            per_layer((H * dv, D)), per_layer((1, D)),        # Wo, bo
            per_layer((1, D)), per_layer((1, D)),             # LN1 gamma/beta
            per_layer((D, dff)), per_layer((dff, D)),         # FFN weights
            per_layer((1, D)), per_layer((1, D)),             # LN2 gamma/beta
            const((D, D)), const((1, D)),               # head fc
            const((1, D)), const((1, D)),               # BatchNorm1d gamma/beta
            const((D, G)), const((1, G)),               # classifier_global
        ],
        out_specs=pl.BlockSpec((B, G), lambda l: (0, 0)),
        scratch_shapes=[pltpu.VMEM((BS, D), jnp.float32),    # resident hidden
                        pltpu.SemaphoreType.DMA],            # layer-0 copy sem
    )

    return pl.pallas_call(
        kern,
        out_shape=jax.ShapeDtypeStruct((B, G), jnp.float32),
        grid_spec=grid_spec,
        compiler_params=pltpu.CompilerParams(
            dimension_semantics=("arbitrary",),
            vmem_limit_bytes=vmem_limit),
        cost_estimate=pl.CostEstimate(flops=int(flops),
                                      transcendentals=int(transc),
                                      bytes_accessed=bytes_acc),
    )(x2, pad_bias,
      packed["wq"], packed["bq"], packed["wk"], packed["bk"],
      packed["wv"], packed["bv"], packed["wo"], packed["bo"],
      packed["g1"], packed["b1"], packed["w1"], packed["w2"],
      packed["g2"], packed["b2"],
      head_p["wfc"], head_p["bfc"], head_p["bn_g"], head_p["bn_b"],
      head_p["wcls"], head_p["bcls"])


# ------------------------------ full model ----------------------------------


def embed(input_ids, p):
    S = input_ids.shape[1]
    tok = p["tok_embed"][input_ids]                    # (B, S, D) gather (glue)
    pos = p["pos_embed"][jnp.arange(S)][None, :, :]    # (1, S, D)
    return _layernorm(tok + pos, p["emb_g"], p["emb_b"])


def k_bert_wcl_forward(input_ids, params, packed_layers, cfg):
    x = embed(input_ids, params)                       # (B, S, D)
    # get_attn_pad_mask key mask as a layer-invariant additive bias (B, 1, S).
    pad_bias = jnp.where(input_ids == 0, jnp.float32(-1e9),
                         jnp.float32(0.0))[:, None, :]
    head_p = {k: params[k] for k in ("wfc", "bfc", "bn_g", "bn_b", "wcls", "bcls")}
    # use_atom=False path: h_mol == h_global (extracted inside the fused kernel).
    # TODO(synk): use_atom=True branch (atom attention-weighted mean) not implemented.
    return kbert_encoder_head(x, pad_bias, packed_layers, head_p, cfg)


# --------------------------- parameter handling ------------------------------


def init_params(key, cfg):
    D, dk, dv, H, dff = cfg["d_model"], cfg["d_k"], cfg["d_v"], cfg["n_heads"], cfg["d_ff"]
    V, L, G = cfg["vocab_size"], cfg["maxlen"], cfg["global_label_dim"]
    nL = cfg["n_layers"]

    keys = iter(jax.random.split(key, 16 + 12 * nL))

    def nrm(shape, scale=0.05):
        return scale * jax.random.normal(next(keys), shape, dtype=jnp.float32)

    ones = lambda n: jnp.ones((1, n), jnp.float32)
    zeros = lambda n: jnp.zeros((1, n), jnp.float32)

    params = {
        "tok_embed": nrm((V, D)),
        "pos_embed": nrm((L, D)),
        "emb_g": ones(D), "emb_b": zeros(D),
        "layers": [],
        "wfc": nrm((D, D)), "bfc": nrm((1, D)),
        "bn_g": ones(D), "bn_b": zeros(D),
        "wcls": nrm((D, G)), "bcls": nrm((1, G)),
    }
    for _ in range(nL):
        params["layers"].append({
            "wq": nrm((D, H * dk)), "bq": nrm((1, H * dk)),
            "wk": nrm((D, H * dk)), "bk": nrm((1, H * dk)),
            "wv": nrm((D, H * dv)), "bv": nrm((1, H * dv)),
            "wo": nrm((H * dv, D)), "bo": nrm((1, D)),
            "g1": ones(D), "b1": zeros(D),
            "w1": nrm((D, dff)), "w2": nrm((dff, D)),
            "g2": ones(D), "b2": zeros(D),
        })
    return params


def pack_layer_params(layers, cfg):
    """Stack per-layer weights (leading layer axis); fold 1/sqrt(d_k) into Wq/bq;
    cast streamed matmul weights to bf16 (biases / LN params stay f32)."""
    scale = np.float32(1.0 / np.sqrt(cfg["d_k"]))

    def pack_one(lp):
        return dict(
            wq=(lp["wq"] * scale).astype(jnp.bfloat16),
            bq=(lp["bq"] * scale),
            wk=lp["wk"].astype(jnp.bfloat16), bk=lp["bk"],
            wv=lp["wv"].astype(jnp.bfloat16), bv=lp["bv"],
            wo=lp["wo"].astype(jnp.bfloat16), bo=lp["bo"],
            g1=lp["g1"], b1=lp["b1"],
            w1=lp["w1"].astype(jnp.bfloat16), w2=lp["w2"].astype(jnp.bfloat16),
            g2=lp["g2"], b2=lp["b2"])

    per = [pack_one(lp) for lp in layers]
    return {k: jnp.stack([p[k] for p in per], axis=0) for k in per[0]}


# --------------------------- pure-JAX reference ------------------------------


def reference_forward(input_ids, params, cfg):
    D, dk, dv, H = cfg["d_model"], cfg["d_k"], cfg["d_v"], cfg["n_heads"]
    B, S = input_ids.shape
    x = embed(input_ids, params)
    pad = (input_ids == 0)
    mask = jnp.broadcast_to(pad[:, None, :], (B, S, S))
    for lp in params["layers"]:
        q = (x @ lp["wq"] + lp["bq"]).reshape(B, S, H, dk).transpose(0, 2, 1, 3)
        k = (x @ lp["wk"] + lp["bk"]).reshape(B, S, H, dk).transpose(0, 2, 1, 3)
        v = (x @ lp["wv"] + lp["bv"]).reshape(B, S, H, dv).transpose(0, 2, 1, 3)
        s = jnp.einsum("bhqd,bhkd->bhqk", q, k) / np.sqrt(dk)
        s = jnp.where(mask[:, None, :, :], -1e9, s)
        attn = jax.nn.softmax(s, axis=-1)
        ctx = jnp.einsum("bhqk,bhkd->bhqd", attn, v)
        ctx = ctx.transpose(0, 2, 1, 3).reshape(B, S, H * dv)
        y = _layernorm(ctx @ lp["wo"] + lp["bo"] + x, lp["g1"], lp["b1"])
        ff = jnp.maximum(y @ lp["w1"], 0.0) @ lp["w2"]
        x = _layernorm(ff + y, lp["g2"], lp["b2"])
    h = x[:, 0]
    z = jnp.maximum(h @ params["wfc"] + params["bfc"], 0.0)
    mean = jnp.mean(z, axis=0, keepdims=True)
    var = jnp.mean((z - mean) ** 2, axis=0, keepdims=True)
    zn = (z - mean) * jax.lax.rsqrt(var + 1e-5) * params["bn_g"] + params["bn_b"]
    return zn @ params["wcls"] + params["bcls"]


# --------------------------------- main --------------------------------------


if __name__ == "__main__":
    cfg = dict(d_model=32, n_layers=2, vocab_size=20, maxlen=8,
               d_k=16, d_v=16, n_heads=2, d_ff=64,
               global_label_dim=4, atom_label_dim=3)

    key = jax.random.PRNGKey(0)
    pkey, dkey = jax.random.split(key)
    params = init_params(pkey, cfg)
    packed = pack_layer_params(params["layers"], cfg)

    B, S = 4, cfg["maxlen"]
    input_ids = jax.random.randint(dkey, (B, S), 0, cfg["vocab_size"], dtype=jnp.int32)
    # force some PAD (id 0) positions so the attention mask is exercised
    input_ids = input_ids.at[:, -2:].set(0)
    # position 0 is the "global" token; make sure it's non-pad
    input_ids = input_ids.at[:, 0].set(1)

    fwd = jax.jit(functools.partial(k_bert_wcl_forward, cfg=cfg))
    logits = fwd(input_ids, params, packed)
    jax.block_until_ready(logits)
    assert logits.shape == (B, cfg["global_label_dim"])

    # f32 reference; slightly loosened tolerance accounts for the bf16 matmul
    # weights/activations and the approx softmax reciprocal in the kernel.
    ref = reference_forward(input_ids, params, cfg)
    np.testing.assert_allclose(np.asarray(logits), np.asarray(ref),
                               rtol=5e-2, atol=5e-2)
    print("KERNEL_OK")
</pallas_src>

<mosaic_0001>
module attributes {stable_mosaic.version = 11 : i64} {
  func.func @kbert_kernel(%arg0: i32, %arg1: memref<32x32xf32, #tpu.memory_space<any>>, %arg2: memref<4x1x8xf32, #tpu.memory_space<vmem>>, %arg3: memref<1x32x32xbf16, #tpu.memory_space<vmem>>, %arg4: memref<1x1x32xf32, #tpu.memory_space<vmem>>, %arg5: memref<1x32x32xbf16, #tpu.memory_space<vmem>>, %arg6: memref<1x1x32xf32, #tpu.memory_space<vmem>>, %arg7: memref<1x32x32xbf16, #tpu.memory_space<vmem>>, %arg8: memref<1x1x32xf32, #tpu.memory_space<vmem>>, %arg9: memref<1x32x32xbf16, #tpu.memory_space<vmem>>, %arg10: memref<1x1x32xf32, #tpu.memory_space<vmem>>, %arg11: memref<1x1x32xf32, #tpu.memory_space<vmem>>, %arg12: memref<1x1x32xf32, #tpu.memory_space<vmem>>, %arg13: memref<1x32x64xbf16, #tpu.memory_space<vmem>>, %arg14: memref<1x64x32xbf16, #tpu.memory_space<vmem>>, %arg15: memref<1x1x32xf32, #tpu.memory_space<vmem>>, %arg16: memref<1x1x32xf32, #tpu.memory_space<vmem>>, %arg17: memref<32x32xf32, #tpu.memory_space<vmem>>, %arg18: memref<1x32xf32, #tpu.memory_space<vmem>>, %arg19: memref<1x32xf32, #tpu.memory_space<vmem>>, %arg20: memref<1x32xf32, #tpu.memory_space<vmem>>, %arg21: memref<32x4xf32, #tpu.memory_space<vmem>>, %arg22: memref<1x4xf32, #tpu.memory_space<vmem>>, %arg23: memref<4x4xf32, #tpu.memory_space<vmem>>, %arg24: memref<32x32xf32, #tpu.memory_space<vmem>>, %arg25: memref<!tpu.dma_semaphore, #tpu.memory_space<semaphore_mem>>) attributes {dimension_semantics = [#tpu.dimension_semantics<arbitrary>], iteration_bounds = array<i64: 2>, scalar_prefetch = 0 : i64, scratch_operands = 2 : i64, tpu.core_type = #tpu.core_type<tc>, window_params = [{}, {pipeline_mode = #tpu.pipeline_mode<synchronous>, transform_indices = @transform_1, window_bounds = array<i64: 4, 1, 8>}, {transform_indices = @transform_2, window_bounds = array<i64: 1, 32, 32>}, {transform_indices = @transform_3, window_bounds = array<i64: 1, 1, 32>}, {transform_indices = @transform_4, window_bounds = array<i64: 1, 32, 32>}, {transform_indices = @transform_5, window_bounds = array<i64: 1, 1, 32>}, {transform_indices = @transform_6, window_bounds = array<i64: 1, 32, 32>}, {transform_indices = @transform_7, window_bounds = array<i64: 1, 1, 32>}, {transform_indices = @transform_8, window_bounds = array<i64: 1, 32, 32>}, {transform_indices = @transform_9, window_bounds = array<i64: 1, 1, 32>}, {transform_indices = @transform_10, window_bounds = array<i64: 1, 1, 32>}, {transform_indices = @transform_11, window_bounds = array<i64: 1, 1, 32>}, {transform_indices = @transform_12, window_bounds = array<i64: 1, 32, 64>}, {transform_indices = @transform_13, window_bounds = array<i64: 1, 64, 32>}, {transform_indices = @transform_14, window_bounds = array<i64: 1, 1, 32>}, {transform_indices = @transform_15, window_bounds = array<i64: 1, 1, 32>}, {pipeline_mode = #tpu.pipeline_mode<synchronous>, transform_indices = @transform_16, window_bounds = array<i64: 32, 32>}, {pipeline_mode = #tpu.pipeline_mode<synchronous>, transform_indices = @transform_17, window_bounds = array<i64: 1, 32>}, {pipeline_mode = #tpu.pipeline_mode<synchronous>, transform_indices = @transform_18, window_bounds = array<i64: 1, 32>}, {pipeline_mode = #tpu.pipeline_mode<synchronous>, transform_indices = @transform_19, window_bounds = array<i64: 1, 32>}, {pipeline_mode = #tpu.pipeline_mode<synchronous>, transform_indices = @transform_20, window_bounds = array<i64: 32, 4>}, {pipeline_mode = #tpu.pipeline_mode<synchronous>, transform_indices = @transform_21, window_bounds = array<i64: 1, 4>}, {pipeline_mode = #tpu.pipeline_mode<synchronous>, transform_indices = @transform_22, window_bounds = array<i64: 4, 4>}]} {
    %c0_i32 = arith.constant 0 : i32
    %0 = arith.cmpi eq, %arg0, %c0_i32 : i32
    %1 = arith.extui %0 : i1 to i32
    %c0_i32_0 = arith.constant 0 : i32
    %2 = arith.cmpi ne, %1, %c0_i32_0 : i32
    scf.if %2 {
      tpu.enqueue_dma source(%arg1 : memref<32x32xf32, #tpu.memory_space<any>>) target(%arg24 : memref<32x32xf32, #tpu.memory_space<vmem>>) target_semaphore(%arg25 : memref<!tpu.dma_semaphore, #tpu.memory_space<semaphore_mem>>)
      tpu.wait_dma2 semaphore(%arg25 : memref<!tpu.dma_semaphore, #tpu.memory_space<semaphore_mem>>) src(%arg1 : memref<32x32xf32, #tpu.memory_space<any>>) dst(%arg24 : memref<32x32xf32, #tpu.memory_space<vmem>>)
    } else {
    }
    %c0 = arith.constant 0 : index
    %c0_1 = arith.constant 0 : index
    %3 = vector.load %arg24[%c0, %c0_1] : memref<32x32xf32, #tpu.memory_space<vmem>>, vector<32x32xf32>
    %4 = arith.truncf %3 : vector<32x32xf32> to vector<32x32xbf16>
    %c0_2 = arith.constant 0 : index
    %c0_3 = arith.constant 0 : index
    %c0_4 = arith.constant 0 : index
    %5 = vector.load %arg3[%c0_2, %c0_3, %c0_4] : memref<1x32x32xbf16, #tpu.memory_space<vmem>>, vector<1x32x32xbf16>
    %6 = vector.shape_cast %5 : vector<1x32x32xbf16> to vector<32x32xbf16>
    %cst = arith.constant dense<0.000000e+00> : vector<32x32xf32>
    %7 = tpu.matmul %4, %6, %cst {dimension_numbers = #tpu.dot_dimension_numbers<[1], [0], [0], [1], [0, 0, 1, 1], [], []>} : vector<32x32xbf16>, vector<32x32xbf16>, vector<32x32xf32> -> vector<32x32xf32>
    %c0_5 = arith.constant 0 : index
    %c0_6 = arith.constant 0 : index
    %c0_7 = arith.constant 0 : index
    %8 = vector.load %arg4[%c0_5, %c0_6, %c0_7] : memref<1x1x32xf32, #tpu.memory_space<vmem>>, vector<1x1x32xf32>
    %9 = vector.shape_cast %8 : vector<1x1x32xf32> to vector<1x32xf32>
    %10 = vector.broadcast %9 : vector<1x32xf32> to vector<32x32xf32>
    %11 = arith.addf %7, %10 : vector<32x32xf32>
    %c0_8 = arith.constant 0 : index
    %c0_9 = arith.constant 0 : index
    %c0_10 = arith.constant 0 : index
    %12 = vector.load %arg5[%c0_8, %c0_9, %c0_10] : memref<1x32x32xbf16, #tpu.memory_space<vmem>>, vector<1x32x32xbf16>
    %13 = vector.shape_cast %12 : vector<1x32x32xbf16> to vector<32x32xbf16>
    %cst_11 = arith.constant dense<0.000000e+00> : vector<32x32xf32>
    %14 = tpu.matmul %4, %13, %cst_11 {dimension_numbers = #tpu.dot_dimension_numbers<[1], [0], [0], [1], [0, 0, 1, 1], [], []>} : vector<32x32xbf16>, vector<32x32xbf16>, vector<32x32xf32> -> vector<32x32xf32>
    %c0_12 = arith.constant 0 : index
    %c0_13 = arith.constant 0 : index
    %c0_14 = arith.constant 0 : index
    %15 = vector.load %arg6[%c0_12, %c0_13, %c0_14] : memref<1x1x32xf32, #tpu.memory_space<vmem>>, vector<1x1x32xf32>
    %16 = vector.shape_cast %15 : vector<1x1x32xf32> to vector<1x32xf32>
    %17 = vector.broadcast %16 : vector<1x32xf32> to vector<32x32xf32>
    %18 = arith.addf %14, %17 : vector<32x32xf32>
    %c0_15 = arith.constant 0 : index
    %c0_16 = arith.constant 0 : index
    %c0_17 = arith.constant 0 : index
    %19 = vector.load %arg7[%c0_15, %c0_16, %c0_17] : memref<1x32x32xbf16, #tpu.memory_space<vmem>>, vector<1x32x32xbf16>
    %20 = vector.shape_cast %19 : vector<1x32x32xbf16> to vector<32x32xbf16>
    %cst_18 = arith.constant dense<0.000000e+00> : vector<32x32xf32>
    %21 = tpu.matmul %4, %20, %cst_18 {dimension_numbers = #tpu.dot_dimension_numbers<[1], [0], [0], [1], [0, 0, 1, 1], [], []>} : vector<32x32xbf16>, vector<32x32xbf16>, vector<32x32xf32> -> vector<32x32xf32>
    %c0_19 = arith.constant 0 : index
    %c0_20 = arith.constant 0 : index
    %c0_21 = arith.constant 0 : index
    %22 = vector.load %arg8[%c0_19, %c0_20, %c0_21] : memref<1x1x32xf32, #tpu.memory_space<vmem>>, vector<1x1x32xf32>
    %23 = vector.shape_cast %22 : vector<1x1x32xf32> to vector<1x32xf32>
    %24 = vector.broadcast %23 : vector<1x32xf32> to vector<32x32xf32>
    %25 = arith.addf %21, %24 : vector<32x32xf32>
    %26 = vector.extract_strided_slice %11 {offsets = [0, 0], sizes = [32, 16], strides = [1, 1]} : vector<32x32xf32> to vector<32x16xf32>
    %27 = vector.shape_cast %26 : vector<32x16xf32> to vector<4x8x16xf32>
    %28 = vector.extract_strided_slice %11 {offsets = [0, 16], sizes = [32, 16], strides = [1, 1]} : vector<32x32xf32> to vector<32x16xf32>
    %29 = vector.shape_cast %28 : vector<32x16xf32> to vector<4x8x16xf32>
    %30 = tpu.concatenate %27, %29 in 0 : vector<4x8x16xf32>, vector<4x8x16xf32> -> vector<8x8x16xf32>
    %31 = arith.truncf %30 : vector<8x8x16xf32> to vector<8x8x16xbf16>
    %32 = vector.extract_strided_slice %18 {offsets = [0, 0], sizes = [32, 16], strides = [1, 1]} : vector<32x32xf32> to vector<32x16xf32>
    %33 = vector.shape_cast %32 : vector<32x16xf32> to vector<4x8x16xf32>
    %34 = vector.extract_strided_slice %18 {offsets = [0, 16], sizes = [32, 16], strides = [1, 1]} : vector<32x32xf32> to vector<32x16xf32>
    %35 = vector.shape_cast %34 : vector<32x16xf32> to vector<4x8x16xf32>
    %36 = tpu.concatenate %33, %35 in 0 : vector<4x8x16xf32>, vector<4x8x16xf32> -> vector<8x8x16xf32>
    %37 = arith.truncf %36 : vector<8x8x16xf32> to vector<8x8x16xbf16>
    %38 = vector.extract_strided_slice %25 {offsets = [0, 0], sizes = [32, 16], strides = [1, 1]} : vector<32x32xf32> to vector<32x16xf32>
    %39 = vector.shape_cast %38 : vector<32x16xf32> to vector<4x8x16xf32>
    %40 = vector.extract_strided_slice %25 {offsets = [0, 16], sizes = [32, 16], strides = [1, 1]} : vector<32x32xf32> to vector<32x16xf32>
    %41 = vector.shape_cast %40 : vector<32x16xf32> to vector<4x8x16xf32>
    %42 = tpu.concatenate %39, %41 in 0 : vector<4x8x16xf32>, vector<4x8x16xf32> -> vector<8x8x16xf32>
    %43 = arith.truncf %42 : vector<8x8x16xf32> to vector<8x8x16xbf16>
    %c0_22 = arith.constant 0 : index
    %c0_23 = arith.constant 0 : index
    %c0_24 = arith.constant 0 : index
    %44 = vector.load %arg2[%c0_22, %c0_23, %c0_24] : memref<4x1x8xf32, #tpu.memory_space<vmem>>, vector<4x1x8xf32>
    %45 = vector.shape_cast %44 : vector<4x1x8xf32> to vector<1x4x1x8xf32>
    %46 = vector.shape_cast %45 : vector<1x4x1x8xf32> to vector<1x4x1x8xf32>
    %47 = vector.broadcast %46 : vector<1x4x1x8xf32> to vector<2x4x1x8xf32>
    %48 = vector.shape_cast %47 : vector<2x4x1x8xf32> to vector<8x1x8xf32>
    "tpu.trace_start"() <{level = 10 : i32, message = "bqd,bkd->bqk"}> : () -> ()
    %cst_25 = arith.constant dense<0.000000e+00> : vector<8x8x8xf32>
    %49 = tpu.matmul %31, %37, %cst_25 {dimension_numbers = #tpu.dot_dimension_numbers<[2], [2], [1], [1], [0, 0, 0, 1, 1, 1], [0], [0]>} : vector<8x8x16xbf16>, vector<8x8x16xbf16>, vector<8x8x8xf32> -> vector<8x8x8xf32>
    "tpu.trace_stop"() : () -> ()
    %50 = vector.broadcast %48 : vector<8x1x8xf32> to vector<8x8x8xf32>
    %51 = arith.addf %49, %50 : vector<8x8x8xf32>
    %cst_26 = arith.constant dense<0xFF800000> : vector<8x8xf32>
    %52 = vector.multi_reduction <maximumf>, %51, %cst_26 [2] : vector<8x8x8xf32> to vector<8x8xf32>
    %53 = vector.shape_cast %52 : vector<8x8xf32> to vector<8x8x1xf32>
    %54 = vector.broadcast %53 : vector<8x8x1xf32> to vector<8x8x8xf32>
    %55 = arith.subf %51, %54 : vector<8x8x8xf32>
    %56 = math.exp %55 : vector<8x8x8xf32>
    %cst_27 = arith.constant dense<0.000000e+00> : vector<8x8xf32>
    %57 = vector.multi_reduction <add>, %56, %cst_27 [2] : vector<8x8x8xf32> to vector<8x8xf32>
    %58 = vector.shape_cast %57 : vector<8x8xf32> to vector<8x8x1xf32>
    %59 = tpu.reciprocal %58 {approx = true} : vector<8x8x1xf32> -> vector<8x8x1xf32>
    %60 = vector.broadcast %59 : vector<8x8x1xf32> to vector<8x8x8xf32>
    %61 = arith.mulf %56, %60 : vector<8x8x8xf32>
    %62 = arith.truncf %61 : vector<8x8x8xf32> to vector<8x8x8xbf16>
    "tpu.trace_start"() <{level = 10 : i32, message = "bqk,bkd->bqd"}> : () -> ()
    %cst_28 = arith.constant dense<0.000000e+00> : vector<8x8x16xf32>
    %63 = tpu.matmul %62, %43, %cst_28 {dimension_numbers = #tpu.dot_dimension_numbers<[2], [1], [1], [2], [0, 0, 0, 1, 1, 2], [0], [0]>} : vector<8x8x8xbf16>, vector<8x8x16xbf16>, vector<8x8x16xf32> -> vector<8x8x16xf32>
    "tpu.trace_stop"() : () -> ()
    %64 = vector.extract_strided_slice %63 {offsets = [0, 0, 0], sizes = [4, 8, 16], strides = [1, 1, 1]} : vector<8x8x16xf32> to vector<4x8x16xf32>
    %65 = vector.shape_cast %64 : vector<4x8x16xf32> to vector<32x16xf32>
    %66 = vector.extract_strided_slice %63 {offsets = [4, 0, 0], sizes = [4, 8, 16], strides = [1, 1, 1]} : vector<8x8x16xf32> to vector<4x8x16xf32>
    %67 = vector.shape_cast %66 : vector<4x8x16xf32> to vector<32x16xf32>
    %68 = tpu.concatenate %65, %67 in 1 : vector<32x16xf32>, vector<32x16xf32> -> vector<32x32xf32>
    %69 = arith.truncf %68 : vector<32x32xf32> to vector<32x32xbf16>
    %c0_29 = arith.constant 0 : index
    %c0_30 = arith.constant 0 : index
    %c0_31 = arith.constant 0 : index
    %70 = vector.load %arg9[%c0_29, %c0_30, %c0_31] : memref<1x32x32xbf16, #tpu.memory_space<vmem>>, vector<1x32x32xbf16>
    %71 = vector.shape_cast %70 : vector<1x32x32xbf16> to vector<32x32xbf16>
    %cst_32 = arith.constant dense<0.000000e+00> : vector<32x32xf32>
    %72 = tpu.matmul %69, %71, %cst_32 {dimension_numbers = #tpu.dot_dimension_numbers<[1], [0], [0], [1], [0, 0, 1, 1], [], []>} : vector<32x32xbf16>, vector<32x32xbf16>, vector<32x32xf32> -> vector<32x32xf32>
    %c0_33 = arith.constant 0 : index
    %c0_34 = arith.constant 0 : index
    %c0_35 = arith.constant 0 : index
    %73 = vector.load %arg10[%c0_33, %c0_34, %c0_35] : memref<1x1x32xf32, #tpu.memory_space<vmem>>, vector<1x1x32xf32>
    %74 = vector.shape_cast %73 : vector<1x1x32xf32> to vector<1x32xf32>
    %75 = vector.broadcast %74 : vector<1x32xf32> to vector<32x32xf32>
    %76 = arith.addf %72, %75 : vector<32x32xf32>
    %77 = arith.addf %76, %3 : vector<32x32xf32>
    %c0_36 = arith.constant 0 : index
    %c0_37 = arith.constant 0 : index
    %c0_38 = arith.constant 0 : index
    %78 = vector.load %arg11[%c0_36, %c0_37, %c0_38] : memref<1x1x32xf32, #tpu.memory_space<vmem>>, vector<1x1x32xf32>
    %79 = vector.shape_cast %78 : vector<1x1x32xf32> to vector<1x32xf32>
    %c0_39 = arith.constant 0 : index
    %c0_40 = arith.constant 0 : index
    %c0_41 = arith.constant 0 : index
    %80 = vector.load %arg12[%c0_39, %c0_40, %c0_41] : memref<1x1x32xf32, #tpu.memory_space<vmem>>, vector<1x1x32xf32>
    %81 = vector.shape_cast %80 : vector<1x1x32xf32> to vector<1x32xf32>
    %cst_42 = arith.constant dense<0.000000e+00> : vector<32xf32>
    %82 = vector.multi_reduction <add>, %77, %cst_42 [1] : vector<32x32xf32> to vector<32xf32>
    %83 = vector.shape_cast %82 : vector<32xf32> to vector<32x1xf32>
    %cst_43 = arith.constant 3.200000e+01 : f32
    %84 = vector.broadcast %cst_43 : f32 to vector<32x1xf32>
    %85 = arith.divf %83, %84 : vector<32x1xf32>
    %86 = vector.broadcast %85 : vector<32x1xf32> to vector<32x32xf32>
    %87 = arith.subf %77, %86 : vector<32x32xf32>
    %88 = arith.mulf %87, %87 : vector<32x32xf32>
    %cst_44 = arith.constant dense<0.000000e+00> : vector<32xf32>
    %89 = vector.multi_reduction <add>, %88, %cst_44 [1] : vector<32x32xf32> to vector<32xf32>
    %90 = vector.shape_cast %89 : vector<32xf32> to vector<32x1xf32>
    %cst_45 = arith.constant 3.200000e+01 : f32
    %91 = vector.broadcast %cst_45 : f32 to vector<32x1xf32>
    %92 = arith.divf %90, %91 : vector<32x1xf32>
    %93 = vector.broadcast %85 : vector<32x1xf32> to vector<32x32xf32>
    %94 = arith.subf %77, %93 : vector<32x32xf32>
    %cst_46 = arith.constant 9.99999974E-6 : f32
    %95 = vector.broadcast %cst_46 : f32 to vector<32x1xf32>
    %96 = arith.addf %92, %95 : vector<32x1xf32>
    %97 = math.rsqrt %96 : vector<32x1xf32>
    %98 = vector.broadcast %97 : vector<32x1xf32> to vector<32x32xf32>
    %99 = arith.mulf %94, %98 : vector<32x32xf32>
    %100 = vector.broadcast %79 : vector<1x32xf32> to vector<32x32xf32>
    %101 = arith.mulf %99, %100 : vector<32x32xf32>
    %102 = vector.broadcast %81 : vector<1x32xf32> to vector<32x32xf32>
    %103 = arith.addf %101, %102 : vector<32x32xf32>
    %104 = arith.truncf %103 : vector<32x32xf32> to vector<32x32xbf16>
    %c0_47 = arith.constant 0 : index
    %c0_48 = arith.constant 0 : index
    %c0_49 = arith.constant 0 : index
    %105 = vector.load %arg13[%c0_47, %c0_48, %c0_49] : memref<1x32x64xbf16, #tpu.memory_space<vmem>>, vector<1x32x64xbf16>
    %106 = vector.shape_cast %105 : vector<1x32x64xbf16> to vector<32x64xbf16>
    %cst_50 = arith.constant dense<0.000000e+00> : vector<32x64xf32>
    %107 = tpu.matmul %104, %106, %cst_50 {dimension_numbers = #tpu.dot_dimension_numbers<[1], [0], [0], [1], [0, 0, 1, 1], [], []>} : vector<32x32xbf16>, vector<32x64xbf16>, vector<32x64xf32> -> vector<32x64xf32>
    %cst_51 = arith.constant 0.000000e+00 : f32
    %108 = vector.broadcast %cst_51 : f32 to vector<32x64xf32>
    %109 = arith.maximumf %107, %108 : vector<32x64xf32>
    %110 = arith.truncf %109 : vector<32x64xf32> to vector<32x64xbf16>
    %c0_52 = arith.constant 0 : index
    %c0_53 = arith.constant 0 : index
    %c0_54 = arith.constant 0 : index
    %111 = vector.load %arg14[%c0_52, %c0_53, %c0_54] : memref<1x64x32xbf16, #tpu.memory_space<vmem>>, vector<1x64x32xbf16>
    %112 = vector.shape_cast %111 : vector<1x64x32xbf16> to vector<64x32xbf16>
    %cst_55 = arith.constant dense<0.000000e+00> : vector<32x32xf32>
    %113 = tpu.matmul %110, %112, %cst_55 {dimension_numbers = #tpu.dot_dimension_numbers<[1], [0], [0], [1], [0, 0, 1, 1], [], []>} : vector<32x64xbf16>, vector<64x32xbf16>, vector<32x32xf32> -> vector<32x32xf32>
    %114 = arith.addf %113, %103 : vector<32x32xf32>
    %c0_56 = arith.constant 0 : index
    %c0_57 = arith.constant 0 : index
    %c0_58 = arith.constant 0 : index
    %115 = vector.load %arg15[%c0_56, %c0_57, %c0_58] : memref<1x1x32xf32, #tpu.memory_space<vmem>>, vector<1x1x32xf32>
    %116 = vector.shape_cast %115 : vector<1x1x32xf32> to vector<1x32xf32>
    %c0_59 = arith.constant 0 : index
    %c0_60 = arith.constant 0 : index
    %c0_61 = arith.constant 0 : index
    %117 = vector.load %arg16[%c0_59, %c0_60, %c0_61] : memref<1x1x32xf32, #tpu.memory_space<vmem>>, vector<1x1x32xf32>
    %118 = vector.shape_cast %117 : vector<1x1x32xf32> to vector<1x32xf32>
    %cst_62 = arith.constant dense<0.000000e+00> : vector<32xf32>
    %119 = vector.multi_reduction <add>, %114, %cst_62 [1] : vector<32x32xf32> to vector<32xf32>
    %120 = vector.shape_cast %119 : vector<32xf32> to vector<32x1xf32>
    %cst_63 = arith.constant 3.200000e+01 : f32
    %121 = vector.broadcast %cst_63 : f32 to vector<32x1xf32>
    %122 = arith.divf %120, %121 : vector<32x1xf32>
    %123 = vector.broadcast %122 : vector<32x1xf32> to vector<32x32xf32>
    %124 = arith.subf %114, %123 : vector<32x32xf32>
    %125 = arith.mulf %124, %124 : vector<32x32xf32>
    %cst_64 = arith.constant dense<0.000000e+00> : vector<32xf32>
    %126 = vector.multi_reduction <add>, %125, %cst_64 [1] : vector<32x32xf32> to vector<32xf32>
    %127 = vector.shape_cast %126 : vector<32xf32> to vector<32x1xf32>
    %cst_65 = arith.constant 3.200000e+01 : f32
    %128 = vector.broadcast %cst_65 : f32 to vector<32x1xf32>
    %129 = arith.divf %127, %128 : vector<32x1xf32>
    %130 = vector.broadcast %122 : vector<32x1xf32> to vector<32x32xf32>
    %131 = arith.subf %114, %130 : vector<32x32xf32>
    %cst_66 = arith.constant 9.99999974E-6 : f32
    %132 = vector.broadcast %cst_66 : f32 to vector<32x1xf32>
    %133 = arith.addf %129, %132 : vector<32x1xf32>
    %134 = math.rsqrt %133 : vector<32x1xf32>
    %135 = vector.broadcast %134 : vector<32x1xf32> to vector<32x32xf32>
    %136 = arith.mulf %131, %135 : vector<32x32xf32>
    %137 = vector.broadcast %116 : vector<1x32xf32> to vector<32x32xf32>
    %138 = arith.mulf %136, %137 : vector<32x32xf32>
    %139 = vector.broadcast %118 : vector<1x32xf32> to vector<32x32xf32>
    %140 = arith.addf %138, %139 : vector<32x32xf32>
    %c0_67 = arith.constant 0 : index
    %c0_68 = arith.constant 0 : index
    %141 = vector.load %arg24[%c0_67, %c0_68] : memref<32x32xf32, #tpu.memory_space<vmem>>, vector<32x32xf32>
    tpu.vector_store %arg24[%c0_67, %c0_68], %140 {strides = array<i32>} : memref<32x32xf32, #tpu.memory_space<vmem>>, vector<32x32xf32>,
    %c1_i32 = arith.constant 1 : i32
    %142 = arith.cmpi eq, %arg0, %c1_i32 : i32
    %143 = arith.extui %142 : i1 to i32
    %c0_i32_69 = arith.constant 0 : i32
    %144 = arith.cmpi ne, %143, %c0_i32_69 : i32
    scf.if %144 {
      %c0_70 = arith.constant 0 : index
      %c0_71 = arith.constant 0 : index
      %145 = tpu.strided_load %arg24[%c0_70, %c0_71] {strides = array<i32: 8, 1>} : memref<32x32xf32, #tpu.memory_space<vmem>>, vector<4x32xf32>
      %c0_72 = arith.constant 0 : index
      %c0_73 = arith.constant 0 : index
      %146 = vector.load %arg17[%c0_72, %c0_73] : memref<32x32xf32, #tpu.memory_space<vmem>>, vector<32x32xf32>
      %cst_74 = arith.constant dense<0.000000e+00> : vector<4x32xf32>
      %147 = tpu.matmul %145, %146, %cst_74 {dimension_numbers = #tpu.dot_dimension_numbers<[1], [0], [0], [1], [0, 0, 1, 1], [], []>} : vector<4x32xf32>, vector<32x32xf32>, vector<4x32xf32> -> vector<4x32xf32>
      %c0_75 = arith.constant 0 : index
      %c0_76 = arith.constant 0 : index
      %148 = vector.load %arg18[%c0_75, %c0_76] : memref<1x32xf32, #tpu.memory_space<vmem>>, vector<1x32xf32>
      %149 = vector.broadcast %148 : vector<1x32xf32> to vector<4x32xf32>
      %150 = arith.addf %147, %149 : vector<4x32xf32>
      %cst_77 = arith.constant 0.000000e+00 : f32
      %151 = vector.broadcast %cst_77 : f32 to vector<4x32xf32>
      %152 = arith.maximumf %150, %151 : vector<4x32xf32>
      %cst_78 = arith.constant dense<0.000000e+00> : vector<32xf32>
      %153 = vector.multi_reduction <add>, %152, %cst_78 [0] : vector<4x32xf32> to vector<32xf32>
      %154 = vector.shape_cast %153 : vector<32xf32> to vector<1x32xf32>
      %cst_79 = arith.constant 4.000000e+00 : f32
      %155 = vector.broadcast %cst_79 : f32 to vector<1x32xf32>
      %156 = arith.divf %154, %155 : vector<1x32xf32>
      %157 = vector.broadcast %156 : vector<1x32xf32> to vector<4x32xf32>
      %158 = arith.subf %152, %157 : vector<4x32xf32>
      %159 = arith.mulf %158, %158 : vector<4x32xf32>
      %cst_80 = arith.constant dense<0.000000e+00> : vector<32xf32>
      %160 = vector.multi_reduction <add>, %159, %cst_80 [0] : vector<4x32xf32> to vector<32xf32>
      %161 = vector.shape_cast %160 : vector<32xf32> to vector<1x32xf32>
      %cst_81 = arith.constant 4.000000e+00 : f32
      %162 = vector.broadcast %cst_81 : f32 to vector<1x32xf32>
      %163 = arith.divf %161, %162 : vector<1x32xf32>
      %164 = vector.broadcast %156 : vector<1x32xf32> to vector<4x32xf32>
      %165 = arith.subf %152, %164 : vector<4x32xf32>
      %cst_82 = arith.constant 9.99999974E-6 : f32
      %166 = vector.broadcast %cst_82 : f32 to vector<1x32xf32>
      %167 = arith.addf %163, %166 : vector<1x32xf32>
      %168 = math.rsqrt %167 : vector<1x32xf32>
      %169 = vector.broadcast %168 : vector<1x32xf32> to vector<4x32xf32>
      %170 = arith.mulf %165, %169 : vector<4x32xf32>
      %c0_83 = arith.constant 0 : index
      %c0_84 = arith.constant 0 : index
      %171 = vector.load %arg19[%c0_83, %c0_84] : memref<1x32xf32, #tpu.memory_space<vmem>>, vector<1x32xf32>
      %172 = vector.broadcast %171 : vector<1x32xf32> to vector<4x32xf32>
      %173 = arith.mulf %170, %172 : vector<4x32xf32>
      %c0_85 = arith.constant 0 : index
      %c0_86 = arith.constant 0 : index
      %174 = vector.load %arg20[%c0_85, %c0_86] : memref<1x32xf32, #tpu.memory_space<vmem>>, vector<1x32xf32>
      %175 = vector.broadcast %174 : vector<1x32xf32> to vector<4x32xf32>
      %176 = arith.addf %173, %175 : vector<4x32xf32>
      %c0_87 = arith.constant 0 : index
      %c0_88 = arith.constant 0 : index
      %177 = vector.load %arg21[%c0_87, %c0_88] : memref<32x4xf32, #tpu.memory_space<vmem>>, vector<32x4xf32>
      %cst_89 = arith.constant dense<0.000000e+00> : vector<4x4xf32>
      %178 = tpu.matmul %176, %177, %cst_89 {dimension_numbers = #tpu.dot_dimension_numbers<[1], [0], [0], [1], [0, 0, 1, 1], [], []>} : vector<4x32xf32>, vector<32x4xf32>, vector<4x4xf32> -> vector<4x4xf32>
      %c0_90 = arith.constant 0 : index
      %c0_91 = arith.constant 0 : index
      %179 = vector.load %arg22[%c0_90, %c0_91] : memref<1x4xf32, #tpu.memory_space<vmem>>, vector<1x4xf32>
      %180 = vector.broadcast %179 : vector<1x4xf32> to vector<4x4xf32>
      %181 = arith.addf %178, %180 : vector<4x4xf32>
      %c0_92 = arith.constant 0 : index
      %c0_93 = arith.constant 0 : index
      %182 = vector.load %arg23[%c0_92, %c0_93] : memref<4x4xf32, #tpu.memory_space<vmem>>, vector<4x4xf32>
      tpu.vector_store %arg23[%c0_92, %c0_93], %181 {strides = array<i32>} : memref<4x4xf32, #tpu.memory_space<vmem>>, vector<4x4xf32>,
    } else {
    }
    return
  }
  func.func @transform_1(%arg0: i32) -> (i32, i32, i32) {
    %c0_i32 = arith.constant 0 : i32
    %c0_i32_0 = arith.constant 0 : i32
    %c0_i32_1 = arith.constant 0 : i32
    %c0_i32_2 = arith.constant 0 : i32
    return %c0_i32, %c0_i32_0, %c0_i32_1 : i32, i32, i32
  }
  func.func @transform_2(%arg0: i32) -> (i32, i32, i32) {
    %c0_i32 = arith.constant 0 : i32
    %c0_i32_0 = arith.constant 0 : i32
    %c0_i32_1 = arith.constant 0 : i32
    return %arg0, %c0_i32, %c0_i32_0 : i32, i32, i32
  }
  func.func @transform_3(%arg0: i32) -> (i32, i32, i32) {
    %c0_i32 = arith.constant 0 : i32
    %c0_i32_0 = arith.constant 0 : i32
    %c0_i32_1 = arith.constant 0 : i32
    return %arg0, %c0_i32, %c0_i32_0 : i32, i32, i32
  }
  func.func @transform_4(%arg0: i32) -> (i32, i32, i32) {
    %c0_i32 = arith.constant 0 : i32
    %c0_i32_0 = arith.constant 0 : i32
    %c0_i32_1 = arith.constant 0 : i32
    return %arg0, %c0_i32, %c0_i32_0 : i32, i32, i32
  }
  func.func @transform_5(%arg0: i32) -> (i32, i32, i32) {
    %c0_i32 = arith.constant 0 : i32
    %c0_i32_0 = arith.constant 0 : i32
    %c0_i32_1 = arith.constant 0 : i32
    return %arg0, %c0_i32, %c0_i32_0 : i32, i32, i32
  }
  func.func @transform_6(%arg0: i32) -> (i32, i32, i32) {
    %c0_i32 = arith.constant 0 : i32
    %c0_i32_0 = arith.constant 0 : i32
    %c0_i32_1 = arith.constant 0 : i32
    return %arg0, %c0_i32, %c0_i32_0 : i32, i32, i32
  }
  func.func @transform_7(%arg0: i32) -> (i32, i32, i32) {
    %c0_i32 = arith.constant 0 : i32
    %c0_i32_0 = arith.constant 0 : i32
    %c0_i32_1 = arith.constant 0 : i32
    return %arg0, %c0_i32, %c0_i32_0 : i32, i32, i32
  }
  func.func @transform_8(%arg0: i32) -> (i32, i32, i32) {
    %c0_i32 = arith.constant 0 : i32
    %c0_i32_0 = arith.constant 0 : i32
    %c0_i32_1 = arith.constant 0 : i32
    return %arg0, %c0_i32, %c0_i32_0 : i32, i32, i32
  }
  func.func @transform_9(%arg0: i32) -> (i32, i32, i32) {
    %c0_i32 = arith.constant 0 : i32
    %c0_i32_0 = arith.constant 0 : i32
    %c0_i32_1 = arith.constant 0 : i32
    return %arg0, %c0_i32, %c0_i32_0 : i32, i32, i32
  }
  func.func @transform_10(%arg0: i32) -> (i32, i32, i32) {
    %c0_i32 = arith.constant 0 : i32
    %c0_i32_0 = arith.constant 0 : i32
    %c0_i32_1 = arith.constant 0 : i32
    return %arg0, %c0_i32, %c0_i32_0 : i32, i32, i32
  }
  func.func @transform_11(%arg0: i32) -> (i32, i32, i32) {
    %c0_i32 = arith.constant 0 : i32
    %c0_i32_0 = arith.constant 0 : i32
    %c0_i32_1 = arith.constant 0 : i32
    return %arg0, %c0_i32, %c0_i32_0 : i32, i32, i32
  }
  func.func @transform_12(%arg0: i32) -> (i32, i32, i32) {
    %c0_i32 = arith.constant 0 : i32
    %c0_i32_0 = arith.constant 0 : i32
    %c0_i32_1 = arith.constant 0 : i32
    return %arg0, %c0_i32, %c0_i32_0 : i32, i32, i32
  }
  func.func @transform_13(%arg0: i32) -> (i32, i32, i32) {
    %c0_i32 = arith.constant 0 : i32
    %c0_i32_0 = arith.constant 0 : i32
    %c0_i32_1 = arith.constant 0 : i32
    return %arg0, %c0_i32, %c0_i32_0 : i32, i32, i32
  }
  func.func @transform_14(%arg0: i32) -> (i32, i32, i32) {
    %c0_i32 = arith.constant 0 : i32
    %c0_i32_0 = arith.constant 0 : i32
    %c0_i32_1 = arith.constant 0 : i32
    return %arg0, %c0_i32, %c0_i32_0 : i32, i32, i32
  }
  func.func @transform_15(%arg0: i32) -> (i32, i32, i32) {
    %c0_i32 = arith.constant 0 : i32
    %c0_i32_0 = arith.constant 0 : i32
    %c0_i32_1 = arith.constant 0 : i32
    return %arg0, %c0_i32, %c0_i32_0 : i32, i32, i32
  }
  func.func @transform_16(%arg0: i32) -> (i32, i32) {
    %c0_i32 = arith.constant 0 : i32
    %c0_i32_0 = arith.constant 0 : i32
    %c0_i32_1 = arith.constant 0 : i32
    return %c0_i32, %c0_i32_0 : i32, i32
  }
  func.func @transform_17(%arg0: i32) -> (i32, i32) {
    %c0_i32 = arith.constant 0 : i32
    %c0_i32_0 = arith.constant 0 : i32
    %c0_i32_1 = arith.constant 0 : i32
    return %c0_i32, %c0_i32_0 : i32, i32
  }
  func.func @transform_18(%arg0: i32) -> (i32, i32) {
    %c0_i32 = arith.constant 0 : i32
    %c0_i32_0 = arith.constant 0 : i32
    %c0_i32_1 = arith.constant 0 : i32
    return %c0_i32, %c0_i32_0 : i32, i32
  }
  func.func @transform_19(%arg0: i32) -> (i32, i32) {
    %c0_i32 = arith.constant 0 : i32
    %c0_i32_0 = arith.constant 0 : i32
    %c0_i32_1 = arith.constant 0 : i32
    return %c0_i32, %c0_i32_0 : i32, i32
  }
  func.func @transform_20(%arg0: i32) -> (i32, i32) {
    %c0_i32 = arith.constant 0 : i32
    %c0_i32_0 = arith.constant 0 : i32
    %c0_i32_1 = arith.constant 0 : i32
    return %c0_i32, %c0_i32_0 : i32, i32
  }
  func.func @transform_21(%arg0: i32) -> (i32, i32) {
    %c0_i32 = arith.constant 0 : i32
    %c0_i32_0 = arith.constant 0 : i32
    %c0_i32_1 = arith.constant 0 : i32
    return %c0_i32, %c0_i32_0 : i32, i32
  }
  func.func @transform_22(%arg0: i32) -> (i32, i32) {
    %c0_i32 = arith.constant 0 : i32
    %c0_i32_0 = arith.constant 0 : i32
    %c0_i32_1 = arith.constant 0 : i32
    return %c0_i32, %c0_i32_0 : i32, i32
  }
}

</mosaic_0001>

<llo_original>
// kernel: k_bert_wcl_forward.1
$region0: #{k_bert_wcl_forward.1}
  #allocation0 [shape = 'u32[]', space=smem, size = 0x4, offset = 0x4, fixed_abs, tag = 'smem constant byte address 0x4 - core index']
  #allocation1 [shape = 'u32[144,128]{1,0:T(1,128)}', space=vmem, size = 0x12000, scoped, tag = 'internal scratch']
  #allocation2 [shape = 'f32[32,32]{1,0:T(8,128)}', space=vmem, size = 0x4000, scoped, tag = 'scratch operand']
  #allocation3 [shape = 's32[1]{0}', space=sflag, size = 0x4, scoped, tag = 'scratch operand']
  #allocation6 [shape = 's32[]', space=sflag, size = 0x4, offset = 0, fixed_abs, tag = 'sflag constant byte address 0x0 - dummy sync flag']
  %s0 = inlined_call_operand.vmem [shape: f32[32,32], index: 0, kind: input, shape index: {}]
  %s1 = inlined_call_operand.vmem [shape: f32[4,1,8], index: 1, kind: input, shape index: {}]
  %s2 = inlined_call_operand.vmem [shape: bf16[2,32,32], index: 2, kind: input, shape index: {}]
  %s3 = inlined_call_operand.vmem [shape: f32[2,1,32], index: 3, kind: input, shape index: {}]
  %s4 = inlined_call_operand.vmem [shape: bf16[2,32,32], index: 4, kind: input, shape index: {}]
  %s5 = inlined_call_operand.vmem [shape: f32[2,1,32], index: 5, kind: input, shape index: {}]
  %s6 = inlined_call_operand.vmem [shape: bf16[2,32,32], index: 6, kind: input, shape index: {}]
  %s7 = inlined_call_operand.vmem [shape: f32[2,1,32], index: 7, kind: input, shape index: {}]
  %s8 = inlined_call_operand.vmem [shape: bf16[2,32,32], index: 8, kind: input, shape index: {}]
  %s9 = inlined_call_operand.vmem [shape: f32[2,1,32], index: 9, kind: input, shape index: {}]
  %s10 = inlined_call_operand.vmem [shape: f32[2,1,32], index: 10, kind: input, shape index: {}]
  %s11 = inlined_call_operand.vmem [shape: f32[2,1,32], index: 11, kind: input, shape index: {}]
  %s12 = inlined_call_operand.vmem [shape: bf16[2,32,64], index: 12, kind: input, shape index: {}]
  %s13 = inlined_call_operand.vmem [shape: bf16[2,64,32], index: 13, kind: input, shape index: {}]
  %s14 = inlined_call_operand.vmem [shape: f32[2,1,32], index: 14, kind: input, shape index: {}]
  %s15 = inlined_call_operand.vmem [shape: f32[2,1,32], index: 15, kind: input, shape index: {}]
  %s16 = inlined_call_operand.vmem [shape: f32[32,32], index: 16, kind: input, shape index: {}]
  %s17 = inlined_call_operand.vmem [shape: f32[1,32], index: 17, kind: input, shape index: {}]
  %s18 = inlined_call_operand.vmem [shape: f32[1,32], index: 18, kind: input, shape index: {}]
  %s19 = inlined_call_operand.vmem [shape: f32[1,32], index: 19, kind: input, shape index: {}]
  %s20 = inlined_call_operand.vmem [shape: f32[32,4], index: 20, kind: input, shape index: {}]
  %s21 = inlined_call_operand.vmem [shape: f32[1,4], index: 21, kind: input, shape index: {}]
  %s22 = inlined_call_operand.hbm [shape: f32[4,4], index: 22, kind: output, shape index: {}]
  %s23 = sld [smem:[#allocation0]]
  $region159: #{k_bert_wcl_forward.1} parent=0
    _
  %s25 = ssub.s32 1, %s23
  %s26 = scalar_select 0, %s25, %s23
  $region1: #{k_bert_wcl_forward.1} parent=0
    #allocation4 [shape = 'u8[2048]{0}', space=vmem, size = 0x800, scoped, tag = 'output window, operand 0, single buffered']
    #allocation5 [shape = 's32[2]{0}', space=sflag, size = 0x8, scoped, tag = 'scoped memory for k_bert_wcl_forward.1']
    %27 = vsyncpa [#allocation5], 0
    loop: start=0, step=1, limit=4
    $region2: #{k_bert_wcl_forward.1} parent=1 // loop_pre_header
      _
    $region3: #{k_bert_wcl_forward.1} parent=1 // loop_header
      %s29 = sphi 0, %s33
      %p30 = scmp.ge.s32.totalorder %s29, 4
      %s37 = sphi 0, %s37
      %s39 = sphi 0, %s37
      %s40 = sphi 0, %s39
      %s54 = sphi 0, %s40
      %s60 = sphi 0, %s62
      %s63 = sphi 0, %s60
      %s64 = sphi 0, %s63
      %s80 = sphi 0, %s64
      %s86 = sphi 0, %s88
      %s89 = sphi 0, %s86
      %s90 = sphi 0, %s89
      %s106 = sphi 0, %s90
      %s112 = sphi 0, %s114
      %s115 = sphi 0, %s112
      %s116 = sphi 0, %s115
      %s132 = sphi 0, %s116
      %s138 = sphi 0, %s140
      %s141 = sphi 0, %s138
      %s142 = sphi 0, %s141
      %s158 = sphi 0, %s142
      %s164 = sphi 0, %s166
      %s167 = sphi 0, %s164
      %s168 = sphi 0, %s167
      %s184 = sphi 0, %s168
      %s190 = sphi 0, %s192
      %s193 = sphi 0, %s190
      %s194 = sphi 0, %s193
      %s210 = sphi 0, %s194
      %s216 = sphi 0, %s218
      %s219 = sphi 0, %s216
      %s220 = sphi 0, %s219
      %s236 = sphi 0, %s220
      %s242 = sphi 0, %s244
      %s245 = sphi 0, %s242
      %s246 = sphi 0, %s245
      %s262 = sphi 0, %s246
      %s268 = sphi 0, %s270
      %s271 = sphi 0, %s268
      %s272 = sphi 0, %s271
      %s288 = sphi 0, %s272
      %s294 = sphi 0, %s296
      %s297 = sphi 0, %s294
      %s298 = sphi 0, %s297
      %s314 = sphi 0, %s298
      %s320 = sphi 0, %s322
      %s323 = sphi 0, %s320
      %s324 = sphi 0, %s323
      %s340 = sphi 0, %s324
      %s346 = sphi 0, %s348
      %s349 = sphi 0, %s346
      %s350 = sphi 0, %s349
      %s366 = sphi 0, %s350
      %s372 = sphi 0, %s374
      %s375 = sphi 0, %s372
      %s376 = sphi 0, %s375
      %s392 = sphi 0, %s376
      %s398 = sphi 0, %s400
      %s401 = sphi 0, %s398
      %s402 = sphi 0, %s401
      %s418 = sphi 0, %s402
      %s422 = sphi 0, %s422
      %s424 = sphi 0, %s422
      %s425 = sphi 0, %s424
      %s439 = sphi 0, %s425
      %s443 = sphi 0, %s443
      %s445 = sphi 0, %s443
      %s446 = sphi 0, %s445
      %s460 = sphi 0, %s446
      %s464 = sphi 0, %s464
      %s466 = sphi 0, %s464
      %s467 = sphi 0, %s466
      %s481 = sphi 0, %s467
      %s485 = sphi 0, %s485
      %s487 = sphi 0, %s485
      %s488 = sphi 0, %s487
      %s502 = sphi 0, %s488
      %s506 = sphi 0, %s506
      %s508 = sphi 0, %s506
      %s509 = sphi 0, %s508
      %s523 = sphi 0, %s509
      %s527 = sphi 0, %s527
      %s529 = sphi 0, %s527
      %s530 = sphi 0, %s529
      %s544 = sphi 0, %s530
      %s548 = sphi 0, %s548
      %s550 = sphi 0, %s548
      %s551 = sphi 0, %s550
      %s565 = sphi 0, %s551
    $region4: #{k_bert_wcl_forward.1} parent=1 // loop_header_branch
      %32 = sbr.rel (%p30) target = $region8
    $region5: #{k_bert_wcl_forward.1} parent=1 // loop_body
      %s34 = ssub.s32 %s29, 1
      %s35 = ssub.s32 %s29, 2
      %s36 = sadd.s32 %s29, 1
      %s38 = sadd.s32 %s37, 1
      %p41 = scmp.eq.s32.totalorder %s29, 1
      %p42 = scmp.ne.s32.totalorder %s37, %s39
      %p43 = scmp.eq.s32.totalorder %s29, 0
      %p44 = por %p42, %p43
      %p45 = scmp.ne.s32.totalorder %s37, %s39
      %p46 = scmp.eq.s32.totalorder %s34, 1
      %p47 = por %p45, %p46
      %p48 = scmp.ne.s32.totalorder %s39, %s40
      %p49 = scmp.eq.s32.totalorder %s34, 0
      %p50 = por %p48, %p49
      %p51 = scmp.ne.s32.totalorder %s39, %s40
      %p52 = scmp.eq.s32.totalorder %s35, 1
      %p53 = por %p51, %p52
      %p55 = scmp.ne.s32.totalorder %s40, %s54
      %p56 = scmp.eq.s32.totalorder %s35, 0
      %p57 = por %p55, %p56
      %s58 = ssub.s32 %s29, %s36
      %p59 = scmp.eq.s32.totalorder %s58, 0
      %s61 = sadd.s32 %s60, 1
      %s62 = scalar_select %p59, %s60, %s61
      %p65 = pneg %p59
      %p66 = scmp.eq.s32.totalorder %s29, 1
      %p67 = por %p65, %p66
      %p68 = scmp.ne.s32.totalorder %s60, %s63
      %p69 = scmp.eq.s32.totalorder %s29, 0
      %p70 = por %p68, %p69
      %p71 = scmp.ne.s32.totalorder %s60, %s63
      %p72 = scmp.eq.s32.totalorder %s34, 1
      %p73 = por %p71, %p72
      %p74 = scmp.ne.s32.totalorder %s63, %s64
      %p75 = scmp.eq.s32.totalorder %s34, 0
      %p76 = por %p74, %p75
      %p77 = scmp.ne.s32.totalorder %s63, %s64
      %p78 = scmp.eq.s32.totalorder %s35, 1
      %p79 = por %p77, %p78
      %p81 = scmp.ne.s32.totalorder %s64, %s80
      %p82 = scmp.eq.s32.totalorder %s35, 0
      %p83 = por %p81, %p82
      %s84 = ssub.s32 %s29, %s36
      %p85 = scmp.eq.s32.totalorder %s84, 0
      %s87 = sadd.s32 %s86, 1
      %s88 = scalar_select %p85, %s86, %s87
      %p91 = pneg %p85
      %p92 = scmp.eq.s32.totalorder %s29, 1
      %p93 = por %p91, %p92
      %p94 = scmp.ne.s32.totalorder %s86, %s89
      %p95 = scmp.eq.s32.totalorder %s29, 0
      %p96 = por %p94, %p95
      %p97 = scmp.ne.s32.totalorder %s86, %s89
      %p98 = scmp.eq.s32.totalorder %s34, 1
      %p99 = por %p97, %p98
      %p100 = scmp.ne.s32.totalorder %s89, %s90
      %p101 = scmp.eq.s32.totalorder %s34, 0
      %p102 = por %p100, %p101
      %p103 = scmp.ne.s32.totalorder %s89, %s90
      %p104 = scmp.eq.s32.totalorder %s35, 1
      %p105 = por %p103, %p104
      %p107 = scmp.ne.s32.totalorder %s90, %s106
      %p108 = scmp.eq.s32.totalorder %s35, 0
      %p109 = por %p107, %p108
      %s110 = ssub.s32 %s29, %s36
      %p111 = scmp.eq.s32.totalorder %s110, 0
      %s113 = sadd.s32 %s112, 1
      %s114 = scalar_select %p111, %s112, %s113
      %p117 = pneg %p111
      %p118 = scmp.eq.s32.totalorder %s29, 1
      %p119 = por %p117, %p118
      %p120 = scmp.ne.s32.totalorder %s112, %s115
      %p121 = scmp.eq.s32.totalorder %s29, 0
      %p122 = por %p120, %p121
      %p123 = scmp.ne.s32.totalorder %s112, %s115
      %p124 = scmp.eq.s32.totalorder %s34, 1
      %p125 = por %p123, %p124
      %p126 = scmp.ne.s32.totalorder %s115, %s116
      %p127 = scmp.eq.s32.totalorder %s34, 0
      %p128 = por %p126, %p127
      %p129 = scmp.ne.s32.totalorder %s115, %s116
      %p130 = scmp.eq.s32.totalorder %s35, 1
      %p131 = por %p129, %p130
      %p133 = scmp.ne.s32.totalorder %s116, %s132
      %p134 = scmp.eq.s32.totalorder %s35, 0
      %p135 = por %p133, %p134
      %s136 = ssub.s32 %s29, %s36
      %p137 = scmp.eq.s32.totalorder %s136, 0
      %s139 = sadd.s32 %s138, 1
      %s140 = scalar_select %p137, %s138, %s139
      %p143 = pneg %p137
      %p144 = scmp.eq.s32.totalorder %s29, 1
      %p145 = por %p143, %p144
      %p146 = scmp.ne.s32.totalorder %s138, %s141
      %p147 = scmp.eq.s32.totalorder %s29, 0
      %p148 = por %p146, %p147
      %p149 = scmp.ne.s32.totalorder %s138, %s141
      %p150 = scmp.eq.s32.totalorder %s34, 1
      %p151 = por %p149, %p150
      %p152 = scmp.ne.s32.totalorder %s141, %s142
      %p153 = scmp.eq.s32.totalorder %s34, 0
      %p154 = por %p152, %p153
      %p155 = scmp.ne.s32.totalorder %s141, %s142
      %p156 = scmp.eq.s32.totalorder %s35, 1
      %p157 = por %p155, %p156
      %p159 = scmp.ne.s32.totalorder %s142, %s158
      %p160 = scmp.eq.s32.totalorder %s35, 0
      %p161 = por %p159, %p160
      %s162 = ssub.s32 %s29, %s36
      %p163 = scmp.eq.s32.totalorder %s162, 0
      %s165 = sadd.s32 %s164, 1
      %s166 = scalar_select %p163, %s164, %s165
      %p169 = pneg %p163
      %p170 = scmp.eq.s32.totalorder %s29, 1
      %p171 = por %p169, %p170
      %p172 = scmp.ne.s32.totalorder %s164, %s167
      %p173 = scmp.eq.s32.totalorder %s29, 0
      %p174 = por %p172, %p173
      %p175 = scmp.ne.s32.totalorder %s164, %s167
      %p176 = scmp.eq.s32.totalorder %s34, 1
      %p177 = por %p175, %p176
      %p178 = scmp.ne.s32.totalorder %s167, %s168
      %p179 = scmp.eq.s32.totalorder %s34, 0
      %p180 = por %p178, %p179
      %p181 = scmp.ne.s32.totalorder %s167, %s168
      %p182 = scmp.eq.s32.totalorder %s35, 1
      %p183 = por %p181, %p182
      %p185 = scmp.ne.s32.totalorder %s168, %s184
      %p186 = scmp.eq.s32.totalorder %s35, 0
      %p187 = por %p185, %p186
      %s188 = ssub.s32 %s29, %s36
      %p189 = scmp.eq.s32.totalorder %s188, 0
      %s191 = sadd.s32 %s190, 1
      %s192 = scalar_select %p189, %s190, %s191
      %p195 = pneg %p189
      %p196 = scmp.eq.s32.totalorder %s29, 1
      %p197 = por %p195, %p196
      %p198 = scmp.ne.s32.totalorder %s190, %s193
      %p199 = scmp.eq.s32.totalorder %s29, 0
      %p200 = por %p198, %p199
      %p201 = scmp.ne.s32.totalorder %s190, %s193
      %p202 = scmp.eq.s32.totalorder %s34, 1
      %p203 = por %p201, %p202
      %p204 = scmp.ne.s32.totalorder %s193, %s194
      %p205 = scmp.eq.s32.totalorder %s34, 0
      %p206 = por %p204, %p205
      %p207 = scmp.ne.s32.totalorder %s193, %s194
      %p208 = scmp.eq.s32.totalorder %s35, 1
      %p209 = por %p207, %p208
      %p211 = scmp.ne.s32.totalorder %s194, %s210
      %p212 = scmp.eq.s32.totalorder %s35, 0
      %p213 = por %p211, %p212
      %s214 = ssub.s32 %s29, %s36
      %p215 = scmp.eq.s32.totalorder %s214, 0
      %s217 = sadd.s32 %s216, 1
      %s218 = scalar_select %p215, %s216, %s217
      %p221 = pneg %p215
      %p222 = scmp.eq.s32.totalorder %s29, 1
      %p223 = por %p221, %p222
      %p224 = scmp.ne.s32.totalorder %s216, %s219
      %p225 = scmp.eq.s32.totalorder %s29, 0
      %p226 = por %p224, %p225
      %p227 = scmp.ne.s32.totalorder %s216, %s219
      %p228 = scmp.eq.s32.totalorder %s34, 1
      %p229 = por %p227, %p228
      %p230 = scmp.ne.s32.totalorder %s219, %s220
      %p231 = scmp.eq.s32.totalorder %s34, 0
      %p232 = por %p230, %p231
      %p233 = scmp.ne.s32.totalorder %s219, %s220
      %p234 = scmp.eq.s32.totalorder %s35, 1
      %p235 = por %p233, %p234
      %p237 = scmp.ne.s32.totalorder %s220, %s236
      %p238 = scmp.eq.s32.totalorder %s35, 0
      %p239 = por %p237, %p238
      %s240 = ssub.s32 %s29, %s36
      %p241 = scmp.eq.s32.totalorder %s240, 0
      %s243 = sadd.s32 %s242, 1
      %s244 = scalar_select %p241, %s242, %s243
      %p247 = pneg %p241
      %p248 = scmp.eq.s32.totalorder %s29, 1
      %p249 = por %p247, %p248
      %p250 = scmp.ne.s32.totalorder %s242, %s245
      %p251 = scmp.eq.s32.totalorder %s29, 0
      %p252 = por %p250, %p251
      %p253 = scmp.ne.s32.totalorder %s242, %s245
      %p254 = scmp.eq.s32.totalorder %s34, 1
      %p255 = por %p253, %p254
      %p256 = scmp.ne.s32.totalorder %s245, %s246
      %p257 = scmp.eq.s32.totalorder %s34, 0
      %p258 = por %p256, %p257
      %p259 = scmp.ne.s32.totalorder %s245, %s246
      %p260 = scmp.eq.s32.totalorder %s35, 1
      %p261 = por %p259, %p260
      %p263 = scmp.ne.s32.totalorder %s246, %s262
      %p264 = scmp.eq.s32.totalorder %s35, 0
      %p265 = por %p263, %p264
      %s266 = ssub.s32 %s29, %s36
      %p267 = scmp.eq.s32.totalorder %s266, 0
      %s269 = sadd.s32 %s268, 1
      %s270 = scalar_select %p267, %s268, %s269
      %p273 = pneg %p267
      %p274 = scmp.eq.s32.totalorder %s29, 1
      %p275 = por %p273, %p274
      %p276 = scmp.ne.s32.totalorder %s268, %s271
      %p277 = scmp.eq.s32.totalorder %s29, 0
      %p278 = por %p276, %p277
      %p279 = scmp.ne.s32.totalorder %s268, %s271
      %p280 = scmp.eq.s32.totalorder %s34, 1
      %p281 = por %p279, %p280
      %p282 = scmp.ne.s32.totalorder %s271, %s272
      %p283 = scmp.eq.s32.totalorder %s34, 0
      %p284 = por %p282, %p283
      %p285 = scmp.ne.s32.totalorder %s271, %s272
      %p286 = scmp.eq.s32.totalorder %s35, 1
      %p287 = por %p285, %p286
      %p289 = scmp.ne.s32.totalorder %s272, %s288
      %p290 = scmp.eq.s32.totalorder %s35, 0
      %p291 = por %p289, %p290
      %s292 = ssub.s32 %s29, %s36
      %p293 = scmp.eq.s32.totalorder %s292, 0
      %s295 = sadd.s32 %s294, 1
      %s296 = scalar_select %p293, %s294, %s295
      %p299 = pneg %p293
      %p300 = scmp.eq.s32.totalorder %s29, 1
      %p301 = por %p299, %p300
      %p302 = scmp.ne.s32.totalorder %s294, %s297
      %p303 = scmp.eq.s32.totalorder %s29, 0
      %p304 = por %p302, %p303
      %p305 = scmp.ne.s32.totalorder %s294, %s297
      %p306 = scmp.eq.s32.totalorder %s34, 1
      %p307 = por %p305, %p306
      %p308 = scmp.ne.s32.totalorder %s297, %s298
      %p309 = scmp.eq.s32.totalorder %s34, 0
      %p310 = por %p308, %p309
      %p311 = scmp.ne.s32.totalorder %s297, %s298
      %p312 = scmp.eq.s32.totalorder %s35, 1
      %p313 = por %p311, %p312
      %p315 = scmp.ne.s32.totalorder %s298, %s314
      %p316 = scmp.eq.s32.totalorder %s35, 0
      %p317 = por %p315, %p316
      %s318 = ssub.s32 %s29, %s36
      %p319 = scmp.eq.s32.totalorder %s318, 0
      %s321 = sadd.s32 %s320, 1
      %s322 = scalar_select %p319, %s320, %s321
      %p325 = pneg %p319
      %p326 = scmp.eq.s32.totalorder %s29, 1
      %p327 = por %p325, %p326
      %p328 = scmp.ne.s32.totalorder %s320, %s323
      %p329 = scmp.eq.s32.totalorder %s29, 0
      %p330 = por %p328, %p329
      %p331 = scmp.ne.s32.totalorder %s320, %s323
      %p332 = scmp.eq.s32.totalorder %s34, 1
      %p333 = por %p331, %p332
      %p334 = scmp.ne.s32.totalorder %s323, %s324
      %p335 = scmp.eq.s32.totalorder %s34, 0
      %p336 = por %p334, %p335
      %p337 = scmp.ne.s32.totalorder %s323, %s324
      %p338 = scmp.eq.s32.totalorder %s35, 1
      %p339 = por %p337, %p338
      %p341 = scmp.ne.s32.totalorder %s324, %s340
      %p342 = scmp.eq.s32.totalorder %s35, 0
      %p343 = por %p341, %p342
      %s344 = ssub.s32 %s29, %s36
      %p345 = scmp.eq.s32.totalorder %s344, 0
      %s347 = sadd.s32 %s346, 1
      %s348 = scalar_select %p345, %s346, %s347
      %p351 = pneg %p345
      %p352 = scmp.eq.s32.totalorder %s29, 1
      %p353 = por %p351, %p352
      %p354 = scmp.ne.s32.totalorder %s346, %s349
      %p355 = scmp.eq.s32.totalorder %s29, 0
      %p356 = por %p354, %p355
      %p357 = scmp.ne.s32.totalorder %s346, %s349
      %p358 = scmp.eq.s32.totalorder %s34, 1
      %p359 = por %p357, %p358
      %p360 = scmp.ne.s32.totalorder %s349, %s350
      %p361 = scmp.eq.s32.totalorder %s34, 0
      %p362 = por %p360, %p361
      %p363 = scmp.ne.s32.totalorder %s349, %s350
      %p364 = scmp.eq.s32.totalorder %s35, 1
      %p365 = por %p363, %p364
      %p367 = scmp.ne.s32.totalorder %s350, %s366
      %p368 = scmp.eq.s32.totalorder %s35, 0
      %p369 = por %p367, %p368
      %s370 = ssub.s32 %s29, %s36
      %p371 = scmp.eq.s32.totalorder %s370, 0
      %s373 = sadd.s32 %s372, 1
      %s374 = scalar_select %p371, %s372, %s373
      %p377 = pneg %p371
      %p378 = scmp.eq.s32.totalorder %s29, 1
      %p379 = por %p377, %p378
      %p380 = scmp.ne.s32.totalorder %s372, %s375
      %p381 = scmp.eq.s32.totalorder %s29, 0
      %p382 = por %p380, %p381
      %p383 = scmp.ne.s32.totalorder %s372, %s375
      %p384 = scmp.eq.s32.totalorder %s34, 1
      %p385 = por %p383, %p384
      %p386 = scmp.ne.s32.totalorder %s375, %s376
      %p387 = scmp.eq.s32.totalorder %s34, 0
      %p388 = por %p386, %p387
      %p389 = scmp.ne.s32.totalorder %s375, %s376
      %p390 = scmp.eq.s32.totalorder %s35, 1
      %p391 = por %p389, %p390
      %p393 = scmp.ne.s32.totalorder %s376, %s392
      %p394 = scmp.eq.s32.totalorder %s35, 0
      %p395 = por %p393, %p394
      %s396 = ssub.s32 %s29, %s36
      %p397 = scmp.eq.s32.totalorder %s396, 0
      %s399 = sadd.s32 %s398, 1
      %s400 = scalar_select %p397, %s398, %s399
      %p403 = pneg %p397
      %p404 = scmp.eq.s32.totalorder %s29, 1
      %p405 = por %p403, %p404
      %p406 = scmp.ne.s32.totalorder %s398, %s401
      %p407 = scmp.eq.s32.totalorder %s29, 0
      %p408 = por %p406, %p407
      %p409 = scmp.ne.s32.totalorder %s398, %s401
      %p410 = scmp.eq.s32.totalorder %s34, 1
      %p411 = por %p409, %p410
      %p412 = scmp.ne.s32.totalorder %s401, %s402
      %p413 = scmp.eq.s32.totalorder %s34, 0
      %p414 = por %p412, %p413
      %p415 = scmp.ne.s32.totalorder %s401, %s402
      %p416 = scmp.eq.s32.totalorder %s35, 1
      %p417 = por %p415, %p416
      %p419 = scmp.ne.s32.totalorder %s402, %s418
      %p420 = scmp.eq.s32.totalorder %s35, 0
      %p421 = por %p419, %p420
      %s423 = sadd.s32 %s422, 1
      %p426 = scmp.eq.s32.totalorder %s29, 1
      %p427 = scmp.ne.s32.totalorder %s422, %s424
      %p428 = scmp.eq.s32.totalorder %s29, 0
      %p429 = por %p427, %p428
      %p430 = scmp.ne.s32.totalorder %s422, %s424
      %p431 = scmp.eq.s32.totalorder %s34, 1
      %p432 = por %p430, %p431
      %p433 = scmp.ne.s32.totalorder %s424, %s425
      %p434 = scmp.eq.s32.totalorder %s34, 0
      %p435 = por %p433, %p434
      %p436 = scmp.ne.s32.totalorder %s424, %s425
      %p437 = scmp.eq.s32.totalorder %s35, 1
      %p438 = por %p436, %p437
      %p440 = scmp.ne.s32.totalorder %s425, %s439
      %p441 = scmp.eq.s32.totalorder %s35, 0
      %p442 = por %p440, %p441
      %s444 = sadd.s32 %s443, 1
      %p447 = scmp.eq.s32.totalorder %s29, 1
      %p448 = scmp.ne.s32.totalorder %s443, %s445
      %p449 = scmp.eq.s32.totalorder %s29, 0
      %p450 = por %p448, %p449
      %p451 = scmp.ne.s32.totalorder %s443, %s445
      %p452 = scmp.eq.s32.totalorder %s34, 1
      %p453 = por %p451, %p452
      %p454 = scmp.ne.s32.totalorder %s445, %s446
      %p455 = scmp.eq.s32.totalorder %s34, 0
      %p456 = por %p454, %p455
      %p457 = scmp.ne.s32.totalorder %s445, %s446
      %p458 = scmp.eq.s32.totalorder %s35, 1
      %p459 = por %p457, %p458
      %p461 = scmp.ne.s32.totalorder %s446, %s460
      %p462 = scmp.eq.s32.totalorder %s35, 0
      %p463 = por %p461, %p462
      %s465 = sadd.s32 %s464, 1
      %p468 = scmp.eq.s32.totalorder %s29, 1
      %p469 = scmp.ne.s32.totalorder %s464, %s466
      %p470 = scmp.eq.s32.totalorder %s29, 0
      %p471 = por %p469, %p470
      %p472 = scmp.ne.s32.totalorder %s464, %s466
      %p473 = scmp.eq.s32.totalorder %s34, 1
      %p474 = por %p472, %p473
      %p475 = scmp.ne.s32.totalorder %s466, %s467
      %p476 = scmp.eq.s32.totalorder %s34, 0
      %p477 = por %p475, %p476
      %p478 = scmp.ne.s32.totalorder %s466, %s467
      %p479 = scmp.eq.s32.totalorder %s35, 1
      %p480 = por %p478, %p479
      %p482 = scmp.ne.s32.totalorder %s467, %s481
      %p483 = scmp.eq.s32.totalorder %s35, 0
      %p484 = por %p482, %p483
      %s486 = sadd.s32 %s485, 1
      %p489 = scmp.eq.s32.totalorder %s29, 1
      %p490 = scmp.ne.s32.totalorder %s485, %s487
      %p491 = scmp.eq.s32.totalorder %s29, 0
      %p492 = por %p490, %p491
      %p493 = scmp.ne.s32.totalorder %s485, %s487
      %p494 = scmp.eq.s32.totalorder %s34, 1
      %p495 = por %p493, %p494
      %p496 = scmp.ne.s32.totalorder %s487, %s488
      %p497 = scmp.eq.s32.totalorder %s34, 0
      %p498 = por %p496, %p497
      %p499 = scmp.ne.s32.totalorder %s487, %s488
      %p500 = scmp.eq.s32.totalorder %s35, 1
      %p501 = por %p499, %p500
      %p503 = scmp.ne.s32.totalorder %s488, %s502
      %p504 = scmp.eq.s32.totalorder %s35, 0
      %p505 = por %p503, %p504
      %s507 = sadd.s32 %s506, 1
      %p510 = scmp.eq.s32.totalorder %s29, 1
      %p511 = scmp.ne.s32.totalorder %s506, %s508
      %p512 = scmp.eq.s32.totalorder %s29, 0
      %p513 = por %p511, %p512
      %p514 = scmp.ne.s32.totalorder %s506, %s508
      %p515 = scmp.eq.s32.totalorder %s34, 1
      %p516 = por %p514, %p515
      %p517 = scmp.ne.s32.totalorder %s508, %s509
      %p518 = scmp.eq.s32.totalorder %s34, 0
      %p519 = por %p517, %p518
      %p520 = scmp.ne.s32.totalorder %s508, %s509
      %p521 = scmp.eq.s32.totalorder %s35, 1
      %p522 = por %p520, %p521
      %p524 = scmp.ne.s32.totalorder %s509, %s523
      %p525 = scmp.eq.s32.totalorder %s35, 0
      %p526 = por %p524, %p525
      %s528 = sadd.s32 %s527, 1
      %p531 = scmp.eq.s32.totalorder %s29, 1
      %p532 = scmp.ne.s32.totalorder %s527, %s529
      %p533 = scmp.eq.s32.totalorder %s29, 0
      %p534 = por %p532, %p533
      %p535 = scmp.ne.s32.totalorder %s527, %s529
      %p536 = scmp.eq.s32.totalorder %s34, 1
      %p537 = por %p535, %p536
      %p538 = scmp.ne.s32.totalorder %s529, %s530
      %p539 = scmp.eq.s32.totalorder %s34, 0
      %p540 = por %p538, %p539
      %p541 = scmp.ne.s32.totalorder %s529, %s530
      %p542 = scmp.eq.s32.totalorder %s35, 1
      %p543 = por %p541, %p542
      %p545 = scmp.ne.s32.totalorder %s530, %s544
      %p546 = scmp.eq.s32.totalorder %s35, 0
      %p547 = por %p545, %p546
      %s549 = sadd.s32 %s548, 1
      %p552 = scmp.eq.s32.totalorder %s29, 1
      %p553 = scmp.ne.s32.totalorder %s548, %s550
      %p554 = scmp.eq.s32.totalorder %s29, 0
      %p555 = por %p553, %p554
      %p556 = scmp.ne.s32.totalorder %s548, %s550
      %p557 = scmp.eq.s32.totalorder %s34, 1
      %p558 = por %p556, %p557
      %p559 = scmp.ne.s32.totalorder %s550, %s551
      %p560 = scmp.eq.s32.totalorder %s34, 0
      %p561 = por %p559, %p560
      %p562 = scmp.ne.s32.totalorder %s550, %s551
      %p563 = scmp.eq.s32.totalorder %s35, 1
      %p564 = por %p562, %p563
      %p566 = scmp.ne.s32.totalorder %s551, %s565
      %p567 = scmp.eq.s32.totalorder %s35, 0
      %p568 = por %p566, %p567
      %p569 = scmp.le.s32.totalorder 1, %s29
      %p570 = scmp.lt.s32.totalorder %s29, 3
      %p571 = pnand %p569, %p570
      %p572 = pneg %p571
      // Predicated region
      $region9: #{k_bert_wcl_forward.1} parent=5 // pred_check
        _
      $region10: #{k_bert_wcl_forward.1} parent=5 // pred_check_branch
        %574 = sbr.rel (%p571) target = $region12
      $region11: #{k_bert_wcl_forward.1} parent=5 // pred_region
        %s575 = ssub.s32 %s29, 1
        // Predicated region
        $region13: #{k_bert_wcl_forward.1} parent=11 // pred_check
          %p576 = pneg %p50
        $region14: #{k_bert_wcl_forward.1} parent=11 // pred_check_branch
          %578 = sbr.rel (%p576) target = $region16
        $region15: #{k_bert_wcl_forward.1} parent=11 // pred_region
          _
        $region16: #{k_bert_wcl_forward.1} parent=11 // pred_fallthru
          _
        // Predicated region
        $region17: #{k_bert_wcl_forward.1} parent=11 // pred_check
          %p579 = pneg %p435
        $region18: #{k_bert_wcl_forward.1} parent=11 // pred_check_branch
          %581 = sbr.rel (%p579) target = $region20
        $region19: #{k_bert_wcl_forward.1} parent=11 // pred_region
          _
        $region20: #{k_bert_wcl_forward.1} parent=11 // pred_fallthru
          _
        // Predicated region
        $region21: #{k_bert_wcl_forward.1} parent=11 // pred_check
          %p582 = pneg %p456
        $region22: #{k_bert_wcl_forward.1} parent=11 // pred_check_branch
          %584 = sbr.rel (%p582) target = $region24
        $region23: #{k_bert_wcl_forward.1} parent=11 // pred_region
          _
        $region24: #{k_bert_wcl_forward.1} parent=11 // pred_fallthru
          _
        // Predicated region
        $region25: #{k_bert_wcl_forward.1} parent=11 // pred_check
          %p585 = pneg %p477
        $region26: #{k_bert_wcl_forward.1} parent=11 // pred_check_branch
          %587 = sbr.rel (%p585) target = $region28
        $region27: #{k_bert_wcl_forward.1} parent=11 // pred_region
          _
        $region28: #{k_bert_wcl_forward.1} parent=11 // pred_fallthru
          _
        // Predicated region
        $region29: #{k_bert_wcl_forward.1} parent=11 // pred_check
          %p588 = pneg %p498
        $region30: #{k_bert_wcl_forward.1} parent=11 // pred_check_branch
          %590 = sbr.rel (%p588) target = $region32
        $region31: #{k_bert_wcl_forward.1} parent=11 // pred_region
          _
        $region32: #{k_bert_wcl_forward.1} parent=11 // pred_fallthru
          _
        // Predicated region
        $region33: #{k_bert_wcl_forward.1} parent=11 // pred_check
          %p591 = pneg %p519
        $region34: #{k_bert_wcl_forward.1} parent=11 // pred_check_branch
          %593 = sbr.rel (%p591) target = $region36
        $region35: #{k_bert_wcl_forward.1} parent=11 // pred_region
          _
        $region36: #{k_bert_wcl_forward.1} parent=11 // pred_fallthru
          _
        // Predicated region
        $region37: #{k_bert_wcl_forward.1} parent=11 // pred_check
          %p594 = pneg %p540
        $region38: #{k_bert_wcl_forward.1} parent=11 // pred_check_branch
          %596 = sbr.rel (%p594) target = $region40
        $region39: #{k_bert_wcl_forward.1} parent=11 // pred_region
          _
        $region40: #{k_bert_wcl_forward.1} parent=11 // pred_fallthru
          _
      $region12: #{k_bert_wcl_forward.1} parent=5 // pred_fallthru
        _
      %p597 = scmp.lt.s32.totalorder %s29, 2
      // Predicated region
      $region41: #{k_bert_wcl_forward.1} parent=5 // pred_check
        %p598 = pneg %p597
      $region42: #{k_bert_wcl_forward.1} parent=5 // pred_check_branch
        %600 = sbr.rel (%p598) target = $region44
      $region43: #{k_bert_wcl_forward.1} parent=5 // pred_region
        // Predicated region
        $region45: #{k_bert_wcl_forward.1} parent=43 // pred_check
          %p601 = pneg %p70
        $region46: #{k_bert_wcl_forward.1} parent=43 // pred_check_branch
          %603 = sbr.rel (%p601) target = $region48
        $region47: #{k_bert_wcl_forward.1} parent=43 // pred_region
          %p604 = scmp.lt.s32.totalorder %s29, 1
          %s605 = scalar_select %p604, %s29, 1
          %s606 = smul.addr %s605, 4
          %s607 = smul.addr %s606, 4
          %s608 = scalar_lea.vmem %s2, %s607
        $region48: #{k_bert_wcl_forward.1} parent=43 // pred_fallthru
          _
        // Predicated region
        $region49: #{k_bert_wcl_forward.1} parent=43 // pred_check
          %p609 = pneg %p96
        $region50: #{k_bert_wcl_forward.1} parent=43 // pred_check_branch
          %611 = sbr.rel (%p609) target = $region52
        $region51: #{k_bert_wcl_forward.1} parent=43 // pred_region
          %p612 = scmp.lt.s32.totalorder %s29, 1
          %s613 = scalar_select %p612, %s29, 1
          %s614 = scalar_lea.vmem %s3, %s613
        $region52: #{k_bert_wcl_forward.1} parent=43 // pred_fallthru
          _
        // Predicated region
        $region53: #{k_bert_wcl_forward.1} parent=43 // pred_check
          %p615 = pneg %p122
        $region54: #{k_bert_wcl_forward.1} parent=43 // pred_check_branch
          %617 = sbr.rel (%p615) target = $region56
        $region55: #{k_bert_wcl_forward.1} parent=43 // pred_region
          %p618 = scmp.lt.s32.totalorder %s29, 1
          %s619 = scalar_select %p618, %s29, 1
          %s620 = smul.addr %s619, 4
          %s621 = smul.addr %s620, 4
          %s622 = scalar_lea.vmem %s4, %s621
        $region56: #{k_bert_wcl_forward.1} parent=43 // pred_fallthru
          _
        // Predicated region
        $region57: #{k_bert_wcl_forward.1} parent=43 // pred_check
          %p623 = pneg %p148
        $region58: #{k_bert_wcl_forward.1} parent=43 // pred_check_branch
          %625 = sbr.rel (%p623) target = $region60
        $region59: #{k_bert_wcl_forward.1} parent=43 // pred_region
          %p626 = scmp.lt.s32.totalorder %s29, 1
          %s627 = scalar_select %p626, %s29, 1
          %s628 = scalar_lea.vmem %s5, %s627
        $region60: #{k_bert_wcl_forward.1} parent=43 // pred_fallthru
          _
        // Predicated region
        $region61: #{k_bert_wcl_forward.1} parent=43 // pred_check
          %p629 = pneg %p174
        $region62: #{k_bert_wcl_forward.1} parent=43 // pred_check_branch
          %631 = sbr.rel (%p629) target = $region64
        $region63: #{k_bert_wcl_forward.1} parent=43 // pred_region
          %p632 = scmp.lt.s32.totalorder %s29, 1
          %s633 = scalar_select %p632, %s29, 1
          %s634 = smul.addr %s633, 4
          %s635 = smul.addr %s634, 4
          %s636 = scalar_lea.vmem %s6, %s635
        $region64: #{k_bert_wcl_forward.1} parent=43 // pred_fallthru
          _
        // Predicated region
        $region65: #{k_bert_wcl_forward.1} parent=43 // pred_check
          %p637 = pneg %p200
        $region66: #{k_bert_wcl_forward.1} parent=43 // pred_check_branch
          %639 = sbr.rel (%p637) target = $region68
        $region67: #{k_bert_wcl_forward.1} parent=43 // pred_region
          %p640 = scmp.lt.s32.totalorder %s29, 1
          %s641 = scalar_select %p640, %s29, 1
          %s642 = scalar_lea.vmem %s7, %s641
        $region68: #{k_bert_wcl_forward.1} parent=43 // pred_fallthru
          _
        // Predicated region
        $region69: #{k_bert_wcl_forward.1} parent=43 // pred_check
          %p643 = pneg %p226
        $region70: #{k_bert_wcl_forward.1} parent=43 // pred_check_branch
          %645 = sbr.rel (%p643) target = $region72
        $region71: #{k_bert_wcl_forward.1} parent=43 // pred_region
          %p646 = scmp.lt.s32.totalorder %s29, 1
          %s647 = scalar_select %p646, %s29, 1
          %s648 = smul.addr %s647, 4
          %s649 = smul.addr %s648, 4
          %s650 = scalar_lea.vmem %s8, %s649
        $region72: #{k_bert_wcl_forward.1} parent=43 // pred_fallthru
          _
        // Predicated region
        $region73: #{k_bert_wcl_forward.1} parent=43 // pred_check
          %p651 = pneg %p252
        $region74: #{k_bert_wcl_forward.1} parent=43 // pred_check_branch
          %653 = sbr.rel (%p651) target = $region76
        $region75: #{k_bert_wcl_forward.1} parent=43 // pred_region
          %p654 = scmp.lt.s32.totalorder %s29, 1
          %s655 = scalar_select %p654, %s29, 1
          %s656 = scalar_lea.vmem %s9, %s655
        $region76: #{k_bert_wcl_forward.1} parent=43 // pred_fallthru
          _
        // Predicated region
        $region77: #{k_bert_wcl_forward.1} parent=43 // pred_check
          %p657 = pneg %p278
        $region78: #{k_bert_wcl_forward.1} parent=43 // pred_check_branch
          %659 = sbr.rel (%p657) target = $region80
        $region79: #{k_bert_wcl_forward.1} parent=43 // pred_region
          %p660 = scmp.lt.s32.totalorder %s29, 1
          %s661 = scalar_select %p660, %s29, 1
          %s662 = scalar_lea.vmem %s10, %s661
        $region80: #{k_bert_wcl_forward.1} parent=43 // pred_fallthru
          _
        // Predicated region
        $region81: #{k_bert_wcl_forward.1} parent=43 // pred_check
          %p663 = pneg %p304
        $region82: #{k_bert_wcl_forward.1} parent=43 // pred_check_branch
          %665 = sbr.rel (%p663) target = $region84
        $region83: #{k_bert_wcl_forward.1} parent=43 // pred_region
          %p666 = scmp.lt.s32.totalorder %s29, 1
          %s667 = scalar_select %p666, %s29, 1
          %s668 = scalar_lea.vmem %s11, %s667
        $region84: #{k_bert_wcl_forward.1} parent=43 // pred_fallthru
          _
        // Predicated region
        $region85: #{k_bert_wcl_forward.1} parent=43 // pred_check
          %p669 = pneg %p330
        $region86: #{k_bert_wcl_forward.1} parent=43 // pred_check_branch
          %671 = sbr.rel (%p669) target = $region88
        $region87: #{k_bert_wcl_forward.1} parent=43 // pred_region
          %p672 = scmp.lt.s32.totalorder %s29, 1
          %s673 = scalar_select %p672, %s29, 1
          %s674 = smul.addr %s673, 4
          %s675 = smul.addr %s674, 4
          %s676 = scalar_lea.vmem %s12, %s675
        $region88: #{k_bert_wcl_forward.1} parent=43 // pred_fallthru
          _
        // Predicated region
        $region89: #{k_bert_wcl_forward.1} parent=43 // pred_check
          %p677 = pneg %p356
        $region90: #{k_bert_wcl_forward.1} parent=43 // pred_check_branch
          %679 = sbr.rel (%p677) target = $region92
        $region91: #{k_bert_wcl_forward.1} parent=43 // pred_region
          %p680 = scmp.lt.s32.totalorder %s29, 1
          %s681 = scalar_select %p680, %s29, 1
          %s682 = smul.addr %s681, 8
          %s683 = smul.addr %s682, 4
          %s684 = scalar_lea.vmem %s13, %s683
        $region92: #{k_bert_wcl_forward.1} parent=43 // pred_fallthru
          _
        // Predicated region
        $region93: #{k_bert_wcl_forward.1} parent=43 // pred_check
          %p685 = pneg %p382
        $region94: #{k_bert_wcl_forward.1} parent=43 // pred_check_branch
          %687 = sbr.rel (%p685) target = $region96
        $region95: #{k_bert_wcl_forward.1} parent=43 // pred_region
          %p688 = scmp.lt.s32.totalorder %s29, 1
          %s689 = scalar_select %p688, %s29, 1
          %s690 = scalar_lea.vmem %s14, %s689
        $region96: #{k_bert_wcl_forward.1} parent=43 // pred_fallthru
          _
        // Predicated region
        $region97: #{k_bert_wcl_forward.1} parent=43 // pred_check
          %p691 = pneg %p408
        $region98: #{k_bert_wcl_forward.1} parent=43 // pred_check_branch
          %693 = sbr.rel (%p691) target = $region100
        $region99: #{k_bert_wcl_forward.1} parent=43 // pred_region
          %p694 = scmp.lt.s32.totalorder %s29, 1
          %s695 = scalar_select %p694, %s29, 1
          %s696 = scalar_lea.vmem %s15, %s695
        $region100: #{k_bert_wcl_forward.1} parent=43 // pred_fallthru
          _
      $region44: #{k_bert_wcl_forward.1} parent=5 // pred_fallthru
        _
      %p697 = scmp.le.s32.totalorder 1, %s29
      %p698 = scmp.lt.s32.totalorder %s29, 3
      %p699 = pnand %p697, %p698
      %p700 = pneg %p699
      // Predicated region
      $region101: #{k_bert_wcl_forward.1} parent=5 // pred_check
        _
      $region102: #{k_bert_wcl_forward.1} parent=5 // pred_check_branch
        %702 = sbr.rel (%p699) target = $region104
      $region103: #{k_bert_wcl_forward.1} parent=5 // pred_region
        %s703 = ssub.s32 %s29, 1
        %p704 = pneg %p50
        %p705 = pneg %p47
        %p706 = scmp.lt.s32.totalorder %s34, 1
        %s707 = scalar_select %p706, %s34, 1
        %s708 = smul.addr %s707, 4
        %s709 = smul.addr %s708, 4
        %s710 = scalar_lea.vmem %s2, %s709
        %p711 = pneg %p76
        %p712 = pneg %p73
        %p713 = scmp.lt.s32.totalorder %s34, 1
        %s714 = scalar_select %p713, %s34, 1
        %s715 = scalar_lea.vmem %s3, %s714
        %p716 = pneg %p102
        %p717 = pneg %p99
        %p718 = scmp.lt.s32.totalorder %s34, 1
        %s719 = scalar_select %p718, %s34, 1
        %s720 = smul.addr %s719, 4
        %s721 = smul.addr %s720, 4
        %s722 = scalar_lea.vmem %s4, %s721
        %p723 = pneg %p128
        %p724 = pneg %p125
        %p725 = scmp.lt.s32.totalorder %s34, 1
        %s726 = scalar_select %p725, %s34, 1
        %s727 = scalar_lea.vmem %s5, %s726
        %p728 = pneg %p154
        %p729 = pneg %p151
        %p730 = scmp.lt.s32.totalorder %s34, 1
        %s731 = scalar_select %p730, %s34, 1
        %s732 = smul.addr %s731, 4
        %s733 = smul.addr %s732, 4
        %s734 = scalar_lea.vmem %s6, %s733
        %p735 = pneg %p180
        %p736 = pneg %p177
        %p737 = scmp.lt.s32.totalorder %s34, 1
        %s738 = scalar_select %p737, %s34, 1
        %s739 = scalar_lea.vmem %s7, %s738
        %p740 = pneg %p206
        %p741 = pneg %p203
        %p742 = scmp.lt.s32.totalorder %s34, 1
        %s743 = scalar_select %p742, %s34, 1
        %s744 = smul.addr %s743, 4
        %s745 = smul.addr %s744, 4
        %s746 = scalar_lea.vmem %s8, %s745
        %p747 = pneg %p232
        %p748 = pneg %p229
        %p749 = scmp.lt.s32.totalorder %s34, 1
        %s750 = scalar_select %p749, %s34, 1
        %s751 = scalar_lea.vmem %s9, %s750
        %p752 = pneg %p258
        %p753 = pneg %p255
        %p754 = scmp.lt.s32.totalorder %s34, 1
        %s755 = scalar_select %p754, %s34, 1
        %s756 = scalar_lea.vmem %s10, %s755
        %p757 = pneg %p284
        %p758 = pneg %p281
        %p759 = scmp.lt.s32.totalorder %s34, 1
        %s760 = scalar_select %p759, %s34, 1
        %s761 = scalar_lea.vmem %s11, %s760
        %p762 = pneg %p310
        %p763 = pneg %p307
        %p764 = scmp.lt.s32.totalorder %s34, 1
        %s765 = scalar_select %p764, %s34, 1
        %s766 = smul.addr %s765, 4
        %s767 = smul.addr %s766, 4
        %s768 = scalar_lea.vmem %s12, %s767
        %p769 = pneg %p336
        %p770 = pneg %p333
        %p771 = scmp.lt.s32.totalorder %s34, 1
        %s772 = scalar_select %p771, %s34, 1
        %s773 = smul.addr %s772, 8
        %s774 = smul.addr %s773, 4
        %s775 = scalar_lea.vmem %s13, %s774
        %p776 = pneg %p362
        %p777 = pneg %p359
        %p778 = scmp.lt.s32.totalorder %s34, 1
        %s779 = scalar_select %p778, %s34, 1
        %s780 = scalar_lea.vmem %s14, %s779
        %p781 = pneg %p388
        %p782 = pneg %p385
        %p783 = scmp.lt.s32.totalorder %s34, 1
        %s784 = scalar_select %p783, %s34, 1
        %s785 = scalar_lea.vmem %s15, %s784
        %p786 = pneg %p414
        %p787 = pneg %p411
        %p788 = pneg %p435
        %p789 = pneg %p432
        %p790 = pneg %p456
        %p791 = pneg %p453
        %p792 = pneg %p477
        %p793 = pneg %p474
        %p794 = pneg %p498
        %p795 = pneg %p495
        %p796 = pneg %p519
        %p797 = pneg %p516
        %p798 = pneg %p540
        %p799 = pneg %p537
        %p800 = pneg %p561
        %p801 = pneg %p558
        %p802 = scmp.lt.s32.totalorder %s34, 1
        %s803 = scalar_select %p802, %s34, 1
        %s804 = smul.addr %s803, 4
        %s805 = smul.addr %s804, 4
        %s806 = scalar_lea.vmem %s2, %s805
        %p807 = scmp.lt.s32.totalorder %s34, 1
        %s808 = scalar_select %p807, %s34, 1
        %s809 = scalar_lea.vmem %s3, %s808
        %p810 = scmp.lt.s32.totalorder %s34, 1
        %s811 = scalar_select %p810, %s34, 1
        %s812 = smul.addr %s811, 4
        %s813 = smul.addr %s812, 4
        %s814 = scalar_lea.vmem %s4, %s813
        %p815 = scmp.lt.s32.totalorder %s34, 1
        %s816 = scalar_select %p815, %s34, 1
        %s817 = scalar_lea.vmem %s5, %s816
        %p818 = scmp.lt.s32.totalorder %s34, 1
        %s819 = scalar_select %p818, %s34, 1
        %s820 = smul.addr %s819, 4
        %s821 = smul.addr %s820, 4
        %s822 = scalar_lea.vmem %s6, %s821
        %p823 = scmp.lt.s32.totalorder %s34, 1
        %s824 = scalar_select %p823, %s34, 1
        %s825 = scalar_lea.vmem %s7, %s824
        %p826 = scmp.lt.s32.totalorder %s34, 1
        %s827 = scalar_select %p826, %s34, 1
        %s828 = smul.addr %s827, 4
        %s829 = smul.addr %s828, 4
        %s830 = scalar_lea.vmem %s8, %s829
        %p831 = scmp.lt.s32.totalorder %s34, 1
        %s832 = scalar_select %p831, %s34, 1
        %s833 = scalar_lea.vmem %s9, %s832
        %p834 = scmp.lt.s32.totalorder %s34, 1
        %s835 = scalar_select %p834, %s34, 1
        %s836 = scalar_lea.vmem %s10, %s835
        %p837 = scmp.lt.s32.totalorder %s34, 1
        %s838 = scalar_select %p837, %s34, 1
        %s839 = scalar_lea.vmem %s11, %s838
        %p840 = scmp.lt.s32.totalorder %s34, 1
        %s841 = scalar_select %p840, %s34, 1
        %s842 = smul.addr %s841, 4
        %s843 = smul.addr %s842, 4
        %s844 = scalar_lea.vmem %s12, %s843
        %p845 = scmp.lt.s32.totalorder %s34, 1
        %s846 = scalar_select %p845, %s34, 1
        %s847 = smul.addr %s846, 8
        %s848 = smul.addr %s847, 4
        %s849 = scalar_lea.vmem %s13, %s848
        %p850 = scmp.lt.s32.totalorder %s34, 1
        %s851 = scalar_select %p850, %s34, 1
        %s852 = scalar_lea.vmem %s14, %s851
        %p853 = scmp.lt.s32.totalorder %s34, 1
        %s854 = scalar_select %p853, %s34, 1
        %s855 = scalar_lea.vmem %s15, %s854
        %p857 = scmp.eq.s32.totalorder %s34, 0
        // Predicated region
        $region105: #{k_bert_wcl_forward.1} parent=103 // pred_check
          %p858 = pneg %p857
        $region106: #{k_bert_wcl_forward.1} parent=103 // pred_check_branch
          %860 = sbr.rel (%p858) target = $region108
        $region107: #{k_bert_wcl_forward.1} parent=103 // pred_region
          %p862 = scmp.lt.u32.totalorder 32, 8
          %p863 = pneg %p862
          // Predicated region
          $region109: #{k_bert_wcl_forward.1} parent=107 // pred_check
            _
          $region110: #{k_bert_wcl_forward.1} parent=107 // pred_check_branch
            %865 = sbr.rel (%p862) target = $region112
          $region111: #{k_bert_wcl_forward.1} parent=107 // pred_region
            %s880 = sand.u32 32, 7
            %p881 = scmp.eq.s32.totalorder %s880, 0
            // Predicated region
            $region124: #{k_bert_wcl_forward.1} parent=111 // pred_check
              %p882 = pneg %p881
            $region125: #{k_bert_wcl_forward.1} parent=111 // pred_check_branch
              %884 = sbr.rel (%p882) target = $region127
            $region126: #{k_bert_wcl_forward.1} parent=111 // pred_region
              loop: start=0, step=1, limit=1
              $region128: #{k_bert_wcl_forward.1} parent=126 // loop_pre_header
                _
              $region129: #{k_bert_wcl_forward.1} parent=126 // loop_header
                %s886 = sphi 0, %s890
                %p887 = scmp.ge.s32.totalorder %s886, 1
                %s891 = sphi %s0, %s0
                %s892 = sphi [#allocation2], [#allocation2]
              $region130: #{k_bert_wcl_forward.1} parent=126 // loop_header_branch
                %889 = sbr.rel (%p887) target = $region134
              $region131: #{k_bert_wcl_forward.1} parent=126 // loop_body
                %v893 = vld [vmem:[%s891] sm:$0xff]
                %894 = vst [vmem:[%s892] sm:$0xff] %v893
                %v895 = vld [vmem:[%s891 + $0x8] sm:$0xff]
                %896 = vst [vmem:[%s892 + $0x8] sm:$0xff] %v895
                %v897 = vld [vmem:[%s891 + $0x10] sm:$0xff]
                %898 = vst [vmem:[%s892 + $0x10] sm:$0xff] %v897
                %v899 = vld [vmem:[%s891 + $0x18] sm:$0xff]
                %900 = vst [vmem:[%s892 + $0x18] sm:$0xff] %v899
              $region132: #{k_bert_wcl_forward.1} parent=126 // loop_footer
                %s890 = sadd.s32 1, %s886
              $region133: #{k_bert_wcl_forward.1} parent=126 // loop_footer_branch
                %885 = sbr.rel target = $region129
              $region134: #{k_bert_wcl_forward.1} parent=126 // loop_exit
                _
            $region127: #{k_bert_wcl_forward.1} parent=111 // pred_fallthru
              _
            %p901 = pneg %p881
            // Predicated region
            $region135: #{k_bert_wcl_forward.1} parent=111 // pred_check
              _
            $region136: #{k_bert_wcl_forward.1} parent=111 // pred_check_branch
              %903 = sbr.rel (%p881) target = $region138
            $region137: #{k_bert_wcl_forward.1} parent=111 // pred_region
              %s904 = sand.u32 32, 7
            $region138: #{k_bert_wcl_forward.1} parent=111 // pred_fallthru
              _
          $region112: #{k_bert_wcl_forward.1} parent=107 // pred_fallthru
            _
          // Predicated region
          $region113: #{k_bert_wcl_forward.1} parent=107 // pred_check
            %p866 = pneg %p862
          $region114: #{k_bert_wcl_forward.1} parent=107 // pred_check_branch
            %868 = sbr.rel (%p866) target = $region116
          $region115: #{k_bert_wcl_forward.1} parent=107 // pred_region
            %s869 = sshllo.u32 0, 32
            loop: start=0, step=1, limit=1
            $region117: #{k_bert_wcl_forward.1} parent=115 // loop_pre_header
              _
            $region118: #{k_bert_wcl_forward.1} parent=115 // loop_header
              %s871 = sphi 0, %s875
              %p872 = scmp.ge.s32.totalorder %s871, 1
              %s876 = sphi %s0, %s0
              %s877 = sphi [#allocation2], [#allocation2]
            $region119: #{k_bert_wcl_forward.1} parent=115 // loop_header_branch
              %874 = sbr.rel (%p872) target = $region123
            $region120: #{k_bert_wcl_forward.1} parent=115 // loop_body
              %v878 = vld [vmem:[%s876] sm:%s869]
              %879 = vst [vmem:[%s877] sm:%s869] %v878
            $region121: #{k_bert_wcl_forward.1} parent=115 // loop_footer
              %s875 = sadd.s32 1, %s871
            $region122: #{k_bert_wcl_forward.1} parent=115 // loop_footer_branch
              %870 = sbr.rel target = $region118
            $region123: #{k_bert_wcl_forward.1} parent=115 // loop_exit
              _
          $region116: #{k_bert_wcl_forward.1} parent=107 // pred_fallthru
            _
          // Predicated region
          $region139: #{k_bert_wcl_forward.1} parent=107 // pred_check
            _
          $region140: #{k_bert_wcl_forward.1} parent=107 // pred_check_branch
            %907 = sbr.rel (0) target = $region142
          $region141: #{k_bert_wcl_forward.1} parent=107 // pred_region
            %908 = vsyncadd [#allocation3], 512
          $region142: #{k_bert_wcl_forward.1} parent=107 // pred_fallthru
            _
          %s909 = smul.u32 32, 1
          %s910 = sshll.u32 %s909, 4
          %911 = dma.done [#allocation3], %s910
        $region108: #{k_bert_wcl_forward.1} parent=103 // pred_fallthru
          _
        %v912 = vld [vmem:[#allocation2] sm:$0xff]
        %v913 = vld [vmem:[#allocation2 + $0x8] sm:$0xff]
        %v914 = vld [vmem:[#allocation2 + $0x10] sm:$0xff]
        %v915 = vld [vmem:[#allocation2 + $0x18] sm:$0xff]
        %v916 = vpack.c.bf16 %v913, %v912
        %v917 = vpack.c.bf16 %v915, %v914
        %v918 = vld [vmem:[%s806] sm:$0xf]
        %v919 = vld [vmem:[%s806 + $0x4] sm:$0xf]
        %v920 = vld [vmem:[%s806 + $0x8] sm:$0xf]
        %v921 = vld [vmem:[%s806 + $0xc] sm:$0xf]
        %v922 = vld [vmem:[%s809] sm:$0x1]
        %v924 = vlaneseq
        %v925 = vshrl.u32 %v924, 7
        %v926 = vsub.s32 0, %v925
        %v927 = vrot.slane %v922, %v926
        %v933 = vunpack.c.l.b16 %v918
        %v934 = vunpack.c.l.b16 %v919
        %v935 = vunpack.c.l.b16 %v920
        %v936 = vunpack.c.l.b16 %v921
        %v937 = vpack.c.b16 %v934, %v933
        %v938 = vpack.c.b16 %v936, %v935
        %vm941 = vcmask 261120
        %v943 = vsel %vm941, %v916, 0
        %v946 = vsel %vm941, %v917, 0
        %948 = vmatprep.subr.bf16.mxu0 0
        %949 = vmatpush1.bf16.msra.mxu0 %v937
        %950 = vmatprep.subr.bf16.mxu0 0
        %951 = vmatpush1.bf16.msra.mxu0 %v938
        %952 = vmatprep.subr.bf16.mxu0 0
        %953 = vmatpush1.bf16.msra.mxu0 0
        %954 = vmatprep.subr.bf16.mxu0 0
        %955 = vmatpush1.bf16.msra.mxu0 0
        %956 = vmatprep.subr.bf16.mxu0 0
        %957 = vmatpush1.bf16.msra.mxu0 0
        %958 = vmatprep.subr.bf16.mxu0 0
        %959 = vmatpush1.bf16.msra.mxu0 0
        %960 = vmatprep.subr.bf16.mxu0 0
        %961 = vmatpush1.bf16.msra.mxu0 0
        %962 = vmatprep.subr.bf16.mxu0 0
        %963 = vmatpush1.bf16.msra.mxu0 0
        %964 = vmatprep.subr.bf16.mxu0 0
        %965 = vmatpush1.bf16.msra.mxu0 0
        %966 = vmatprep.subr.bf16.mxu0 0
        %967 = vmatpush1.bf16.msra.mxu0 0
        %968 = vmatprep.subr.bf16.mxu0 0
        %969 = vmatpush1.bf16.msra.mxu0 0
        %970 = vmatprep.subr.bf16.mxu0 0
        %971 = vmatpush1.bf16.msra.mxu0 0
        %972 = vmatprep.subr.bf16.mxu0 0
        %973 = vmatpush1.bf16.msra.mxu0 0
        %974 = vmatprep.subr.bf16.mxu0 0
        %975 = vmatpush1.bf16.msra.mxu0 0
        %976 = vmatprep.subr.bf16.mxu0 0
        %977 = vmatpush1.bf16.msra.mxu0 0
        %978 = vmatprep.subr.bf16.mxu0 0
        %979 = vmatpush1.bf16.msra.mxu0 0
        %980 = vmatprep.mubr.bf16.mxu0 0
        %981 = vmatmul.mubr.bf16.gmra.mrb[0].mxu0 %v943
        %v982 = vpop.f32.mrb[0].mxu0
        %v983 = vadd.f32 %v927, %v982
        %v984 = vpop.f32.mrb[0].mxu0
        %v985 = vpop.f32.mrb[0].mxu0
        %v986 = vadd.f32 %v927, %v985
        %v987 = vpop.f32.mrb[0].mxu0
        %988 = vmatprep.mubr.bf16.mxu0 0
        %989 = vmatmul.mubr.bf16.gmra.mrb[0].mxu0 %v946
        %v990 = vpop.f32.mrb[0].mxu0
        %v991 = vadd.f32 %v927, %v990
        %v992 = vpop.f32.mrb[0].mxu0
        %v993 = vpop.f32.mrb[0].mxu0
        %v994 = vadd.f32 %v927, %v993
        %v995 = vpop.f32.mrb[0].mxu0
        %996 = vdwg.mxu0
        %v997 = vld [vmem:[%s814] sm:$0xf]
        %v998 = vld [vmem:[%s814 + $0x4] sm:$0xf]
        %v999 = vld [vmem:[%s814 + $0x8] sm:$0xf]
        %v1000 = vld [vmem:[%s814 + $0xc] sm:$0xf]
        %v1001 = vld [vmem:[%s817] sm:$0x1]
        %v1003 = vlaneseq
        %v1004 = vshrl.u32 %v1003, 7
        %v1005 = vsub.s32 0, %v1004
        %v1006 = vrot.slane %v1001, %v1005
        %v1012 = vunpack.c.l.b16 %v997
        %v1013 = vunpack.c.l.b16 %v998
        %v1014 = vunpack.c.l.b16 %v999
        %v1015 = vunpack.c.l.b16 %v1000
        %v1016 = vpack.c.b16 %v1013, %v1012
        %v1017 = vpack.c.b16 %v1015, %v1014
        %1020 = vmatprep.subr.bf16.mxu0 0
        %1021 = vmatpush1.bf16.msra.mxu0 %v1016
        %1022 = vmatprep.subr.bf16.mxu0 0
        %1023 = vmatpush1.bf16.msra.mxu0 %v1017
        %1024 = vmatprep.subr.bf16.mxu0 0
        %1025 = vmatpush1.bf16.msra.mxu0 0
        %1026 = vmatprep.subr.bf16.mxu0 0
        %1027 = vmatpush1.bf16.msra.mxu0 0
        %1028 = vmatprep.subr.bf16.mxu0 0
        %1029 = vmatpush1.bf16.msra.mxu0 0
        %1030 = vmatprep.subr.bf16.mxu0 0
        %1031 = vmatpush1.bf16.msra.mxu0 0
        %1032 = vmatprep.subr.bf16.mxu0 0
        %1033 = vmatpush1.bf16.msra.mxu0 0
        %1034 = vmatprep.subr.bf16.mxu0 0
        %1035 = vmatpush1.bf16.msra.mxu0 0
        %1036 = vmatprep.subr.bf16.mxu0 0
        %1037 = vmatpush1.bf16.msra.mxu0 0
        %1038 = vmatprep.subr.bf16.mxu0 0
        %1039 = vmatpush1.bf16.msra.mxu0 0
        %1040 = vmatprep.subr.bf16.mxu0 0
        %1041 = vmatpush1.bf16.msra.mxu0 0
        %1042 = vmatprep.subr.bf16.mxu0 0
        %1043 = vmatpush1.bf16.msra.mxu0 0
        %1044 = vmatprep.subr.bf16.mxu0 0
        %1045 = vmatpush1.bf16.msra.mxu0 0
        %1046 = vmatprep.subr.bf16.mxu0 0
        %1047 = vmatpush1.bf16.msra.mxu0 0
        %1048 = vmatprep.subr.bf16.mxu0 0
        %1049 = vmatpush1.bf16.msra.mxu0 0
        %1050 = vmatprep.subr.bf16.mxu0 0
        %1051 = vmatpush1.bf16.msra.mxu0 0
        %1052 = vmatprep.mubr.bf16.mxu0 0
        %1053 = vmatmul.mubr.bf16.gmra.mrb[0].mxu0 %v943
        %v1054 = vpop.f32.mrb[0].mxu0
        %v1055 = vadd.f32 %v1006, %v1054
        %v1056 = vpop.f32.mrb[0].mxu0
        %v1057 = vpop.f32.mrb[0].mxu0
        %v1058 = vadd.f32 %v1006, %v1057
        %v1059 = vpop.f32.mrb[0].mxu0
        %1060 = vmatprep.mubr.bf16.mxu0 0
        %1061 = vmatmul.mubr.bf16.gmra.mrb[0].mxu0 %v946
        %v1062 = vpop.f32.mrb[0].mxu0
        %v1063 = vadd.f32 %v1006, %v1062
        %v1064 = vpop.f32.mrb[0].mxu0
        %v1065 = vpop.f32.mrb[0].mxu0
        %v1066 = vadd.f32 %v1006, %v1065
        %v1067 = vpop.f32.mrb[0].mxu0
        %1068 = vdwg.mxu0
        %v1069 = vld [vmem:[%s822] sm:$0xf]
        %v1070 = vld [vmem:[%s822 + $0x4] sm:$0xf]
        %v1071 = vld [vmem:[%s822 + $0x8] sm:$0xf]
        %v1072 = vld [vmem:[%s822 + $0xc] sm:$0xf]
        %v1073 = vld [vmem:[%s825] sm:$0x1]
        %v1075 = vlaneseq
        %v1076 = vshrl.u32 %v1075, 7
        %v1077 = vsub.s32 0, %v1076
        %v1078 = vrot.slane %v1073, %v1077
        %v1084 = vunpack.c.l.b16 %v1069
        %v1085 = vunpack.c.l.b16 %v1070
        %v1086 = vunpack.c.l.b16 %v1071
        %v1087 = vunpack.c.l.b16 %v1072
        %v1088 = vpack.c.b16 %v1085, %v1084
        %v1089 = vpack.c.b16 %v1087, %v1086
        %1092 = vmatprep.subr.bf16.mxu0 0
        %1093 = vmatpush1.bf16.msra.mxu0 %v1088
        %1094 = vmatprep.subr.bf16.mxu0 0
        %1095 = vmatpush1.bf16.msra.mxu0 %v1089
        %1096 = vmatprep.subr.bf16.mxu0 0
        %1097 = vmatpush1.bf16.msra.mxu0 0
        %1098 = vmatprep.subr.bf16.mxu0 0
        %1099 = vmatpush1.bf16.msra.mxu0 0
        %1100 = vmatprep.subr.bf16.mxu0 0
        %1101 = vmatpush1.bf16.msra.mxu0 0
        %1102 = vmatprep.subr.bf16.mxu0 0
        %1103 = vmatpush1.bf16.msra.mxu0 0
        %1104 = vmatprep.subr.bf16.mxu0 0
        %1105 = vmatpush1.bf16.msra.mxu0 0
        %1106 = vmatprep.subr.bf16.mxu0 0
        %1107 = vmatpush1.bf16.msra.mxu0 0
        %1108 = vmatprep.subr.bf16.mxu0 0
        %1109 = vmatpush1.bf16.msra.mxu0 0
        %1110 = vmatprep.subr.bf16.mxu0 0
        %1111 = vmatpush1.bf16.msra.mxu0 0
        %1112 = vmatprep.subr.bf16.mxu0 0
        %1113 = vmatpush1.bf16.msra.mxu0 0
        %1114 = vmatprep.subr.bf16.mxu0 0
        %1115 = vmatpush1.bf16.msra.mxu0 0
        %1116 = vmatprep.subr.bf16.mxu0 0
        %1117 = vmatpush1.bf16.msra.mxu0 0
        %1118 = vmatprep.subr.bf16.mxu0 0
        %1119 = vmatpush1.bf16.msra.mxu0 0
        %1120 = vmatprep.subr.bf16.mxu0 0
        %1121 = vmatpush1.bf16.msra.mxu0 0
        %1122 = vmatprep.subr.bf16.mxu0 0
        %1123 = vmatpush1.bf16.msra.mxu0 0
        %1124 = vmatprep.mubr.bf16.mxu0 0
        %1125 = vmatmul.mubr.bf16.gmra.mrb[0].mxu0 %v943
        %v1126 = vpop.f32.mrb[0].mxu0
        %v1127 = vadd.f32 %v1078, %v1126
        %v1128 = vpop.f32.mrb[0].mxu0
        %v1129 = vpop.f32.mrb[0].mxu0
        %v1130 = vadd.f32 %v1078, %v1129
        %v1131 = vpop.f32.mrb[0].mxu0
        %1132 = vmatprep.mubr.bf16.mxu0 0
        %1133 = vmatmul.mubr.bf16.gmra.mrb[0].mxu0 %v946
        %v1134 = vpop.f32.mrb[0].mxu0
        %v1135 = vadd.f32 %v1078, %v1134
        %v1136 = vpop.f32.mrb[0].mxu0
        %v1137 = vpop.f32.mrb[0].mxu0
        %v1138 = vadd.f32 %v1078, %v1137
        %v1139 = vpop.f32.mrb[0].mxu0
        %1140 = vdwg.mxu0
        %1145 = vrot.lane.b32.xlu0 %v983, 112
        %v1146 = vpop.permute.xlu0 %1145
        %1147 = vrot.lane.b32.xlu0 %v986, 112
        %v1148 = vpop.permute.xlu0 %1147
        %1149 = vrot.lane.b32.xlu0 %v991, 112
        %v1150 = vpop.permute.xlu0 %1149
        %1151 = vrot.lane.b32.xlu0 %v994, 112
        %v1152 = vpop.permute.xlu0 %1151
        %v1157 = vpack.c.bf16 %v983, %v983
        %v1158 = vpack.c.bf16 %v986, %v986
        %v1159 = vpack.c.bf16 %v991, %v991
        %v1160 = vpack.c.bf16 %v994, %v994
        %v1161 = vpack.c.bf16 %v1146, %v1146
        %v1162 = vpack.c.bf16 %v1148, %v1148
        %v1163 = vpack.c.bf16 %v1150, %v1150
        %v1164 = vpack.c.bf16 %v1152, %v1152
        %1169 = vrot.lane.b32.xlu0 %v1055, 112
        %v1170 = vpop.permute.xlu0 %1169
        %1171 = vrot.lane.b32.xlu0 %v1058, 112
        %v1172 = vpop.permute.xlu0 %1171
        %1173 = vrot.lane.b32.xlu0 %v1063, 112
        %v1174 = vpop.permute.xlu0 %1173
        %1175 = vrot.lane.b32.xlu0 %v1066, 112
        %v1176 = vpop.permute.xlu0 %1175
        %v1181 = vpack.c.bf16 %v1055, %v1055
        %v1182 = vpack.c.bf16 %v1058, %v1058
        %v1183 = vpack.c.bf16 %v1063, %v1063
        %v1184 = vpack.c.bf16 %v1066, %v1066
        %v1185 = vpack.c.bf16 %v1170, %v1170
        %v1186 = vpack.c.bf16 %v1172, %v1172
        %v1187 = vpack.c.bf16 %v1174, %v1174
        %v1188 = vpack.c.bf16 %v1176, %v1176
        %1193 = vrot.lane.b32.xlu0 %v1127, 112
        %v1194 = vpop.permute.xlu0 %1193
        %1195 = vrot.lane.b32.xlu0 %v1130, 112
        %v1196 = vpop.permute.xlu0 %1195
        %1197 = vrot.lane.b32.xlu0 %v1135, 112
        %v1198 = vpop.permute.xlu0 %1197
        %1199 = vrot.lane.b32.xlu0 %v1138, 112
        %v1200 = vpop.permute.xlu0 %1199
        %v1205 = vpack.c.bf16 %v1127, %v1127
        %v1206 = vpack.c.bf16 %v1130, %v1130
        %v1207 = vpack.c.bf16 %v1135, %v1135
        %v1208 = vpack.c.bf16 %v1138, %v1138
        %v1209 = vpack.c.bf16 %v1194, %v1194
        %v1210 = vpack.c.bf16 %v1196, %v1196
        %v1211 = vpack.c.bf16 %v1198, %v1198
        %v1212 = vpack.c.bf16 %v1200, %v1200
        %v1213 = vld [vmem:[%s1] sm:$0x1]
        %v1214 = vld [vmem:[%s1 + $0x1] sm:$0x1]
        %v1215 = vld [vmem:[%s1 + $0x2] sm:$0x1]
        %v1216 = vld [vmem:[%s1 + $0x3] sm:$0x1]
        %v1221 = vlaneseq
        %v1222 = vshrl.u32 %v1221, 7
        %v1223 = vsub.s32 0, %v1222
        %v1224 = vrot.slane %v1213, %v1223
        %v1225 = vlaneseq
        %v1226 = vshrl.u32 %v1225, 7
        %v1227 = vsub.s32 0, %v1226
        %v1228 = vrot.slane %v1214, %v1227
        %v1229 = vlaneseq
        %v1230 = vshrl.u32 %v1229, 7
        %v1231 = vsub.s32 0, %v1230
        %v1232 = vrot.slane %v1215, %v1231
        %v1233 = vlaneseq
        %v1234 = vshrl.u32 %v1233, 7
        %v1235 = vsub.s32 0, %v1234
        %v1236 = vrot.slane %v1216, %v1235
        %vm1241 = vcmask 130048
        %v1243 = vsel %vm1241, %v1157, 0
        %v1246 = vsel %vm1241, %v1181, 0
        %1248 = vmatprep.subr.bf16.mxu0 0
        %1249 = vmatpush1.bf16.xpose.msra.mxu0 %v1246
        %1250 = vmatprep.subr.bf16.mxu0 0
        %1251 = vmatpush1.bf16.xpose.msra.mxu0 0
        %1252 = vmatprep.subr.bf16.mxu0 0
        %1253 = vmatpush1.bf16.xpose.msra.mxu0 0
        %1254 = vmatprep.subr.bf16.mxu0 0
        %1255 = vmatpush1.bf16.xpose.msra.mxu0 0
        %1256 = vmatprep.subr.bf16.mxu0 0
        %1257 = vmatpush1.bf16.xpose.msra.mxu0 0
        %1258 = vmatprep.subr.bf16.mxu0 0
        %1259 = vmatpush1.bf16.xpose.msra.mxu0 0
        %1260 = vmatprep.subr.bf16.mxu0 0
        %1261 = vmatpush1.bf16.xpose.msra.mxu0 0
        %1262 = vmatprep.subr.bf16.mxu0 0
        %1263 = vmatpush1.bf16.xpose.msra.mxu0 0
        %1264 = vmatprep.subr.bf16.mxu0 0
        %1265 = vmatpush1.bf16.xpose.msra.mxu0 0
        %1266 = vmatprep.subr.bf16.mxu0 0
        %1267 = vmatpush1.bf16.xpose.msra.mxu0 0
        %1268 = vmatprep.subr.bf16.mxu0 0
        %1269 = vmatpush1.bf16.xpose.msra.mxu0 0
        %1270 = vmatprep.subr.bf16.mxu0 0
        %1271 = vmatpush1.bf16.xpose.msra.mxu0 0
        %1272 = vmatprep.subr.bf16.mxu0 0
        %1273 = vmatpush1.bf16.xpose.msra.mxu0 0
        %1274 = vmatprep.subr.bf16.mxu0 0
        %1275 = vmatpush1.bf16.xpose.msra.mxu0 0
        %1276 = vmatprep.subr.bf16.mxu0 0
        %1277 = vmatpush1.bf16.xpose.msra.mxu0 0
        %1278 = vmatprep.subr.bf16.mxu0 0
        %1279 = vmatpush1.bf16.xpose.msra.mxu0 0
        %1280 = vmatprep.mubr.bf16.mxu0 0
        %1281 = vmatmul.mubr.bf16.gmra.mrb[0].mxu0 %v1243
        %v1282 = vpop.f32.mrb[0].mxu0
        %v1283 = vadd.f32 %v1224, %v1282
        %v1284 = vpop.f32.mrb[0].mxu0
        %v1285 = vpop.f32.mrb[0].mxu0
        %v1286 = vpop.f32.mrb[0].mxu0
        %1287 = vdwg.mxu0
        %v1289 = vsel %vm1241, %v1158, 0
        %v1292 = vsel %vm1241, %v1182, 0
        %1294 = vmatprep.subr.bf16.mxu0 0
        %1295 = vmatpush1.bf16.xpose.msra.mxu0 %v1292
        %1296 = vmatprep.subr.bf16.mxu0 0
        %1297 = vmatpush1.bf16.xpose.msra.mxu0 0
        %1298 = vmatprep.subr.bf16.mxu0 0
        %1299 = vmatpush1.bf16.xpose.msra.mxu0 0
        %1300 = vmatprep.subr.bf16.mxu0 0
        %1301 = vmatpush1.bf16.xpose.msra.mxu0 0
        %1302 = vmatprep.subr.bf16.mxu0 0
        %1303 = vmatpush1.bf16.xpose.msra.mxu0 0
        %1304 = vmatprep.subr.bf16.mxu0 0
        %1305 = vmatpush1.bf16.xpose.msra.mxu0 0
        %1306 = vmatprep.subr.bf16.mxu0 0
        %1307 = vmatpush1.bf16.xpose.msra.mxu0 0
        %1308 = vmatprep.subr.bf16.mxu0 0
        %1309 = vmatpush1.bf16.xpose.msra.mxu0 0
        %1310 = vmatprep.subr.bf16.mxu0 0
        %1311 = vmatpush1.bf16.xpose.msra.mxu0 0
        %1312 = vmatprep.subr.bf16.mxu0 0
        %1313 = vmatpush1.bf16.xpose.msra.mxu0 0
        %1314 = vmatprep.subr.bf16.mxu0 0
        %1315 = vmatpush1.bf16.xpose.msra.mxu0 0
        %1316 = vmatprep.subr.bf16.mxu0 0
        %1317 = vmatpush1.bf16.xpose.msra.mxu0 0
        %1318 = vmatprep.subr.bf16.mxu0 0
        %1319 = vmatpush1.bf16.xpose.msra.mxu0 0
        %1320 = vmatprep.subr.bf16.mxu0 0
        %1321 = vmatpush1.bf16.xpose.msra.mxu0 0
        %1322 = vmatprep.subr.bf16.mxu0 0
        %1323 = vmatpush1.bf16.xpose.msra.mxu0 0
        %1324 = vmatprep.subr.bf16.mxu0 0
        %1325 = vmatpush1.bf16.xpose.msra.mxu0 0
        %1326 = vmatprep.mubr.bf16.mxu0 0
        %1327 = vmatmul.mubr.bf16.gmra.mrb[0].mxu0 %v1289
        %v1328 = vpop.f32.mrb[0].mxu0
        %v1329 = vadd.f32 %v1228, %v1328
        %v1330 = vpop.f32.mrb[0].mxu0
        %v1331 = vpop.f32.mrb[0].mxu0
        %v1332 = vpop.f32.mrb[0].mxu0
        %1333 = vdwg.mxu0
        %v1335 = vsel %vm1241, %v1159, 0
        %v1338 = vsel %vm1241, %v1183, 0
        %1340 = vmatprep.subr.bf16.mxu0 0
        %1341 = vmatpush1.bf16.xpose.msra.mxu0 %v1338
        %1342 = vmatprep.subr.bf16.mxu0 0
        %1343 = vmatpush1.bf16.xpose.msra.mxu0 0
        %1344 = vmatprep.subr.bf16.mxu0 0
        %1345 = vmatpush1.bf16.xpose.msra.mxu0 0
        %1346 = vmatprep.subr.bf16.mxu0 0
        %1347 = vmatpush1.bf16.xpose.msra.mxu0 0
        %1348 = vmatprep.subr.bf16.mxu0 0
        %1349 = vmatpush1.bf16.xpose.msra.mxu0 0
        %1350 = vmatprep.subr.bf16.mxu0 0
        %1351 = vmatpush1.bf16.xpose.msra.mxu0 0
        %1352 = vmatprep.subr.bf16.mxu0 0
        %1353 = vmatpush1.bf16.xpose.msra.mxu0 0
        %1354 = vmatprep.subr.bf16.mxu0 0
        %1355 = vmatpush1.bf16.xpose.msra.mxu0 0
        %1356 = vmatprep.subr.bf16.mxu0 0
        %1357 = vmatpush1.bf16.xpose.msra.mxu0 0
        %1358 = vmatprep.subr.bf16.mxu0 0
        %1359 = vmatpush1.bf16.xpose.msra.mxu0 0
        %1360 = vmatprep.subr.bf16.mxu0 0
        %1361 = vmatpush1.bf16.xpose.msra.mxu0 0
        %1362 = vmatprep.subr.bf16.mxu0 0
        %1363 = vmatpush1.bf16.xpose.msra.mxu0 0
        %1364 = vmatprep.subr.bf16.mxu0 0
        %1365 = vmatpush1.bf16.xpose.msra.mxu0 0
        %1366 = vmatprep.subr.bf16.mxu0 0
        %1367 = vmatpush1.bf16.xpose.msra.mxu0 0
        %1368 = vmatprep.subr.bf16.mxu0 0
        %1369 = vmatpush1.bf16.xpose.msra.mxu0 0
        %1370 = vmatprep.subr.bf16.mxu0 0
        %1371 = vmatpush1.bf16.xpose.msra.mxu0 0
        %1372 = vmatprep.mubr.bf16.mxu0 0
        %1373 = vmatmul.mubr.bf16.gmra.mrb[0].mxu0 %v1335
        %v1374 = vpop.f32.mrb[0].mxu0
        %v1375 = vadd.f32 %v1232, %v1374
        %v1376 = vpop.f32.mrb[0].mxu0
        %v1377 = vpop.f32.mrb[0].mxu0
        %v1378 = vpop.f32.mrb[0].mxu0
        %1379 = vdwg.mxu0
        %v1381 = vsel %vm1241, %v1160, 0
        %v1384 = vsel %vm1241, %v1184, 0
        %1386 = vmatprep.subr.bf16.mxu0 0
        %1387 = vmatpush1.bf16.xpose.msra.mxu0 %v1384
        %1388 = vmatprep.subr.bf16.mxu0 0
        %1389 = vmatpush1.bf16.xpose.msra.mxu0 0
        %1390 = vmatprep.subr.bf16.mxu0 0
        %1391 = vmatpush1.bf16.xpose.msra.mxu0 0
        %1392 = vmatprep.subr.bf16.mxu0 0
        %1393 = vmatpush1.bf16.xpose.msra.mxu0 0
        %1394 = vmatprep.subr.bf16.mxu0 0
        %1395 = vmatpush1.bf16.xpose.msra.mxu0 0
        %1396 = vmatprep.subr.bf16.mxu0 0
        %1397 = vmatpush1.bf16.xpose.msra.mxu0 0
        %1398 = vmatprep.subr.bf16.mxu0 0
        %1399 = vmatpush1.bf16.xpose.msra.mxu0 0
        %1400 = vmatprep.subr.bf16.mxu0 0
        %1401 = vmatpush1.bf16.xpose.msra.mxu0 0
        %1402 = vmatprep.subr.bf16.mxu0 0
        %1403 = vmatpush1.bf16.xpose.msra.mxu0 0
        %1404 = vmatprep.subr.bf16.mxu0 0
        %1405 = vmatpush1.bf16.xpose.msra.mxu0 0
        %1406 = vmatprep.subr.bf16.mxu0 0
        %1407 = vmatpush1.bf16.xpose.msra.mxu0 0
        %1408 = vmatprep.subr.bf16.mxu0 0
        %1409 = vmatpush1.bf16.xpose.msra.mxu0 0
        %1410 = vmatprep.subr.bf16.mxu0 0
        %1411 = vmatpush1.bf16.xpose.msra.mxu0 0
        %1412 = vmatprep.subr.bf16.mxu0 0
        %1413 = vmatpush1.bf16.xpose.msra.mxu0 0
        %1414 = vmatprep.subr.bf16.mxu0 0
        %1415 = vmatpush1.bf16.xpose.msra.mxu0 0
        %1416 = vmatprep.subr.bf16.mxu0 0
        %1417 = vmatpush1.bf16.xpose.msra.mxu0 0
        %1418 = vmatprep.mubr.bf16.mxu0 0
        %1419 = vmatmul.mubr.bf16.gmra.mrb[0].mxu0 %v1381
        %v1420 = vpop.f32.mrb[0].mxu0
        %v1421 = vadd.f32 %v1236, %v1420
        %v1422 = vpop.f32.mrb[0].mxu0
        %v1423 = vpop.f32.mrb[0].mxu0
        %v1424 = vpop.f32.mrb[0].mxu0
        %1425 = vdwg.mxu0
        %v1427 = vsel %vm1241, %v1161, 0
        %v1430 = vsel %vm1241, %v1185, 0
        %1432 = vmatprep.subr.bf16.mxu0 0
        %1433 = vmatpush1.bf16.xpose.msra.mxu0 %v1430
        %1434 = vmatprep.subr.bf16.mxu0 0
        %1435 = vmatpush1.bf16.xpose.msra.mxu0 0
        %1436 = vmatprep.subr.bf16.mxu0 0
        %1437 = vmatpush1.bf16.xpose.msra.mxu0 0
        %1438 = vmatprep.subr.bf16.mxu0 0
        %1439 = vmatpush1.bf16.xpose.msra.mxu0 0
        %1440 = vmatprep.subr.bf16.mxu0 0
        %1441 = vmatpush1.bf16.xpose.msra.mxu0 0
        %1442 = vmatprep.subr.bf16.mxu0 0
        %1443 = vmatpush1.bf16.xpose.msra.mxu0 0
        %1444 = vmatprep.subr.bf16.mxu0 0
        %1445 = vmatpush1.bf16.xpose.msra.mxu0 0
        %1446 = vmatprep.subr.bf16.mxu0 0
        %1447 = vmatpush1.bf16.xpose.msra.mxu0 0
        %1448 = vmatprep.subr.bf16.mxu0 0
        %1449 = vmatpush1.bf16.xpose.msra.mxu0 0
        %1450 = vmatprep.subr.bf16.mxu0 0
        %1451 = vmatpush1.bf16.xpose.msra.mxu0 0
        %1452 = vmatprep.subr.bf16.mxu0 0
        %1453 = vmatpush1.bf16.xpose.msra.mxu0 0
        %1454 = vmatprep.subr.bf16.mxu0 0
        %1455 = vmatpush1.bf16.xpose.msra.mxu0 0
        %1456 = vmatprep.subr.bf16.mxu0 0
        %1457 = vmatpush1.bf16.xpose.msra.mxu0 0
        %1458 = vmatprep.subr.bf16.mxu0 0
        %1459 = vmatpush1.bf16.xpose.msra.mxu0 0
        %1460 = vmatprep.subr.bf16.mxu0 0
        %1461 = vmatpush1.bf16.xpose.msra.mxu0 0
        %1462 = vmatprep.subr.bf16.mxu0 0
        %1463 = vmatpush1.bf16.xpose.msra.mxu0 0
        %1464 = vmatprep.mubr.bf16.mxu0 0
        %1465 = vmatmul.mubr.bf16.gmra.mrb[0].mxu0 %v1427
        %v1466 = vpop.f32.mrb[0].mxu0
        %v1467 = vadd.f32 %v1224, %v1466
        %v1468 = vpop.f32.mrb[0].mxu0
        %v1469 = vpop.f32.mrb[0].mxu0
        %v1470 = vpop.f32.mrb[0].mxu0
        %1471 = vdwg.mxu0
        %v1473 = vsel %vm1241, %v1162, 0
        %v1476 = vsel %vm1241, %v1186, 0
        %1478 = vmatprep.subr.bf16.mxu0 0
        %1479 = vmatpush1.bf16.xpose.msra.mxu0 %v1476
        %1480 = vmatprep.subr.bf16.mxu0 0
        %1481 = vmatpush1.bf16.xpose.msra.mxu0 0
        %1482 = vmatprep.subr.bf16.mxu0 0
        %1483 = vmatpush1.bf16.xpose.msra.mxu0 0
        %1484 = vmatprep.subr.bf16.mxu0 0
        %1485 = vmatpush1.bf16.xpose.msra.mxu0 0
        %1486 = vmatprep.subr.bf16.mxu0 0
        %1487 = vmatpush1.bf16.xpose.msra.mxu0 0
        %1488 = vmatprep.subr.bf16.mxu0 0
        %1489 = vmatpush1.bf16.xpose.msra.mxu0 0
        %1490 = vmatprep.subr.bf16.mxu0 0
        %1491 = vmatpush1.bf16.xpose.msra.mxu0 0
        %1492 = vmatprep.subr.bf16.mxu0 0
        %1493 = vmatpush1.bf16.xpose.msra.mxu0 0
        %1494 = vmatprep.subr.bf16.mxu0 0
        %1495 = vmatpush1.bf16.xpose.msra.mxu0 0
        %1496 = vmatprep.subr.bf16.mxu0 0
        %1497 = vmatpush1.bf16.xpose.msra.mxu0 0
        %1498 = vmatprep.subr.bf16.mxu0 0
        %1499 = vmatpush1.bf16.xpose.msra.mxu0 0
        %1500 = vmatprep.subr.bf16.mxu0 0
        %1501 = vmatpush1.bf16.xpose.msra.mxu0 0
        %1502 = vmatprep.subr.bf16.mxu0 0
        %1503 = vmatpush1.bf16.xpose.msra.mxu0 0
        %1504 = vmatprep.subr.bf16.mxu0 0
        %1505 = vmatpush1.bf16.xpose.msra.mxu0 0
        %1506 = vmatprep.subr.bf16.mxu0 0
        %1507 = vmatpush1.bf16.xpose.msra.mxu0 0
        %1508 = vmatprep.subr.bf16.mxu0 0
        %1509 = vmatpush1.bf16.xpose.msra.mxu0 0
        %1510 = vmatprep.mubr.bf16.mxu0 0
        %1511 = vmatmul.mubr.bf16.gmra.mrb[0].mxu0 %v1473
        %v1512 = vpop.f32.mrb[0].mxu0
        %v1513 = vadd.f32 %v1228, %v1512
        %v1514 = vpop.f32.mrb[0].mxu0
        %v1515 = vpop.f32.mrb[0].mxu0
        %v1516 = vpop.f32.mrb[0].mxu0
        %1517 = vdwg.mxu0
        %v1519 = vsel %vm1241, %v1163, 0
        %v1522 = vsel %vm1241, %v1187, 0
        %1524 = vmatprep.subr.bf16.mxu0 0
        %1525 = vmatpush1.bf16.xpose.msra.mxu0 %v1522
        %1526 = vmatprep.subr.bf16.mxu0 0
        %1527 = vmatpush1.bf16.xpose.msra.mxu0 0
        %1528 = vmatprep.subr.bf16.mxu0 0
        %1529 = vmatpush1.bf16.xpose.msra.mxu0 0
        %1530 = vmatprep.subr.bf16.mxu0 0
        %1531 = vmatpush1.bf16.xpose.msra.mxu0 0
        %1532 = vmatprep.subr.bf16.mxu0 0
        %1533 = vmatpush1.bf16.xpose.msra.mxu0 0
        %1534 = vmatprep.subr.bf16.mxu0 0
        %1535 = vmatpush1.bf16.xpose.msra.mxu0 0
        %1536 = vmatprep.subr.bf16.mxu0 0
        %1537 = vmatpush1.bf16.xpose.msra.mxu0 0
        %1538 = vmatprep.subr.bf16.mxu0 0
        %1539 = vmatpush1.bf16.xpose.msra.mxu0 0
        %1540 = vmatprep.subr.bf16.mxu0 0
        %1541 = vmatpush1.bf16.xpose.msra.mxu0 0
        %1542 = vmatprep.subr.bf16.mxu0 0
        %1543 = vmatpush1.bf16.xpose.msra.mxu0 0
        %1544 = vmatprep.subr.bf16.mxu0 0
        %1545 = vmatpush1.bf16.xpose.msra.mxu0 0
        %1546 = vmatprep.subr.bf16.mxu0 0
        %1547 = vmatpush1.bf16.xpose.msra.mxu0 0
        %1548 = vmatprep.subr.bf16.mxu0 0
        %1549 = vmatpush1.bf16.xpose.msra.mxu0 0
        %1550 = vmatprep.subr.bf16.mxu0 0
        %1551 = vmatpush1.bf16.xpose.msra.mxu0 0
        %1552 = vmatprep.subr.bf16.mxu0 0
        %1553 = vmatpush1.bf16.xpose.msra.mxu0 0
        %1554 = vmatprep.subr.bf16.mxu0 0
        %1555 = vmatpush1.bf16.xpose.msra.mxu0 0
        %1556 = vmatprep.mubr.bf16.mxu0 0
        %1557 = vmatmul.mubr.bf16.gmra.mrb[0].mxu0 %v1519
        %v1558 = vpop.f32.mrb[0].mxu0
        %v1559 = vadd.f32 %v1232, %v1558
        %v1560 = vpop.f32.mrb[0].mxu0
        %v1561 = vpop.f32.mrb[0].mxu0
        %v1562 = vpop.f32.mrb[0].mxu0
        %1563 = vdwg.mxu0
        %v1565 = vsel %vm1241, %v1164, 0
        %v1568 = vsel %vm1241, %v1188, 0
        %1570 = vmatprep.subr.bf16.mxu0 0
        %1571 = vmatpush1.bf16.xpose.msra.mxu0 %v1568
        %1572 = vmatprep.subr.bf16.mxu0 0
        %1573 = vmatpush1.bf16.xpose.msra.mxu0 0
        %1574 = vmatprep.subr.bf16.mxu0 0
        %1575 = vmatpush1.bf16.xpose.msra.mxu0 0
        %1576 = vmatprep.subr.bf16.mxu0 0
        %1577 = vmatpush1.bf16.xpose.msra.mxu0 0
        %1578 = vmatprep.subr.bf16.mxu0 0
        %1579 = vmatpush1.bf16.xpose.msra.mxu0 0
        %1580 = vmatprep.subr.bf16.mxu0 0
        %1581 = vmatpush1.bf16.xpose.msra.mxu0 0
        %1582 = vmatprep.subr.bf16.mxu0 0
        %1583 = vmatpush1.bf16.xpose.msra.mxu0 0
        %1584 = vmatprep.subr.bf16.mxu0 0
        %1585 = vmatpush1.bf16.xpose.msra.mxu0 0
        %1586 = vmatprep.subr.bf16.mxu0 0
        %1587 = vmatpush1.bf16.xpose.msra.mxu0 0
        %1588 = vmatprep.subr.bf16.mxu0 0
        %1589 = vmatpush1.bf16.xpose.msra.mxu0 0
        %1590 = vmatprep.subr.bf16.mxu0 0
        %1591 = vmatpush1.bf16.xpose.msra.mxu0 0
        %1592 = vmatprep.subr.bf16.mxu0 0
        %1593 = vmatpush1.bf16.xpose.msra.mxu0 0
        %1594 = vmatprep.subr.bf16.mxu0 0
        %1595 = vmatpush1.bf16.xpose.msra.mxu0 0
        %1596 = vmatprep.subr.bf16.mxu0 0
        %1597 = vmatpush1.bf16.xpose.msra.mxu0 0
        %1598 = vmatprep.subr.bf16.mxu0 0
        %1599 = vmatpush1.bf16.xpose.msra.mxu0 0
        %1600 = vmatprep.subr.bf16.mxu0 0
        %1601 = vmatpush1.bf16.xpose.msra.mxu0 0
        %1602 = vmatprep.mubr.bf16.mxu0 0
        %1603 = vmatmul.mubr.bf16.gmra.mrb[0].mxu0 %v1565
        %v1604 = vpop.f32.mrb[0].mxu0
        %v1605 = vadd.f32 %v1236, %v1604
        %v1606 = vpop.f32.mrb[0].mxu0
        %v1607 = vpop.f32.mrb[0].mxu0
        %v1608 = vpop.f32.mrb[0].mxu0
        %1609 = vdwg.mxu0
        %vm1610 = vcmask 64512
        %v1611 = vsel %vm1610, %v1283, -inf
        %1612 = vmax.xlane.f32.xlu0 %v1611
        %v1613 = vpop.xlane.xlu0 %1612
        %v1614 = vsel %vm1610, %v1329, -inf
        %1615 = vmax.xlane.f32.xlu0 %v1614
        %v1616 = vpop.xlane.xlu0 %1615
        %v1617 = vsel %vm1610, %v1375, -inf
        %1618 = vmax.xlane.f32.xlu0 %v1617
        %v1619 = vpop.xlane.xlu0 %1618
        %v1620 = vsel %vm1610, %v1421, -inf
        %1621 = vmax.xlane.f32.xlu0 %v1620
        %v1622 = vpop.xlane.xlu0 %1621
        %v1623 = vsel %vm1610, %v1467, -inf
        %1624 = vmax.xlane.f32.xlu0 %v1623
        %v1625 = vpop.xlane.xlu0 %1624
        %v1626 = vsel %vm1610, %v1513, -inf
        %1627 = vmax.xlane.f32.xlu0 %v1626
        %v1628 = vpop.xlane.xlu0 %1627
        %v1629 = vsel %vm1610, %v1559, -inf
        %1630 = vmax.xlane.f32.xlu0 %v1629
        %v1631 = vpop.xlane.xlu0 %1630
        %v1632 = vsel %vm1610, %v1605, -inf
        %1633 = vmax.xlane.f32.xlu0 %v1632
        %v1634 = vpop.xlane.xlu0 %1633
        %v1635 = vsub.f32 %v1283, %v1613
        %v1636 = vsub.f32 %v1329, %v1616
        %v1637 = vsub.f32 %v1375, %v1619
        %v1638 = vsub.f32 %v1421, %v1622
        %v1639 = vsub.f32 %v1467, %v1625
        %v1640 = vsub.f32 %v1513, %v1628
        %v1641 = vsub.f32 %v1559, %v1631
        %v1642 = vsub.f32 %v1605, %v1634
        %v1643 = vmul.f32 %v1635, 1.442695
        %v1644 = vpow.pop %v1643
        %v1645 = vmul.f32 %v1636, 1.442695
        %v1646 = vpow.pop %v1645
        %v1647 = vmul.f32 %v1637, 1.442695
        %v1648 = vpow.pop %v1647
        %v1649 = vmul.f32 %v1638, 1.442695
        %v1650 = vpow.pop %v1649
        %v1651 = vmul.f32 %v1639, 1.442695
        %v1652 = vpow.pop %v1651
        %v1653 = vmul.f32 %v1640, 1.442695
        %v1654 = vpow.pop %v1653
        %v1655 = vmul.f32 %v1641, 1.442695
        %v1656 = vpow.pop %v1655
        %v1657 = vmul.f32 %v1642, 1.442695
        %v1658 = vpow.pop %v1657
        %v1659 = vsel %vm1610, %v1644, 0.0
        %1660 = vadd.xlane.f32.xlu0 %v1659
        %v1661 = vpop.xlane.xlu0 %1660
        %v1662 = vsel %vm1610, %v1646, 0.0
        %1663 = vadd.xlane.f32.xlu0 %v1662
        %v1664 = vpop.xlane.xlu0 %1663
        %v1665 = vsel %vm1610, %v1648, 0.0
        %1666 = vadd.xlane.f32.xlu0 %v1665
        %v1667 = vpop.xlane.xlu0 %1666
        %v1668 = vsel %vm1610, %v1650, 0.0
        %1669 = vadd.xlane.f32.xlu0 %v1668
        %v1670 = vpop.xlane.xlu0 %1669
        %v1671 = vsel %vm1610, %v1652, 0.0
        %1672 = vadd.xlane.f32.xlu0 %v1671
        %v1673 = vpop.xlane.xlu0 %1672
        %v1674 = vsel %vm1610, %v1654, 0.0
        %1675 = vadd.xlane.f32.xlu0 %v1674
        %v1676 = vpop.xlane.xlu0 %1675
        %v1677 = vsel %vm1610, %v1656, 0.0
        %1678 = vadd.xlane.f32.xlu0 %v1677
        %v1679 = vpop.xlane.xlu0 %1678
        %v1680 = vsel %vm1610, %v1658, 0.0
        %1681 = vadd.xlane.f32.xlu0 %v1680
        %v1682 = vpop.xlane.xlu0 %1681
        %v1683 = vrcp.pop %v1661
        %v1684 = vrcp.pop %v1664
        %v1685 = vrcp.pop %v1667
        %v1686 = vrcp.pop %v1670
        %v1687 = vrcp.pop %v1673
        %v1688 = vrcp.pop %v1676
        %v1689 = vrcp.pop %v1679
        %v1690 = vrcp.pop %v1682
        %v1691 = vmul.f32 %v1644, %v1683
        %v1692 = vmul.f32 %v1646, %v1684
        %v1693 = vmul.f32 %v1648, %v1685
        %v1694 = vmul.f32 %v1650, %v1686
        %v1695 = vmul.f32 %v1652, %v1687
        %v1696 = vmul.f32 %v1654, %v1688
        %v1697 = vmul.f32 %v1656, %v1689
        %v1698 = vmul.f32 %v1658, %v1690
        %v1699 = vpack.c.bf16 %v1691, %v1691
        %v1700 = vpack.c.bf16 %v1692, %v1692
        %v1701 = vpack.c.bf16 %v1693, %v1693
        %v1702 = vpack.c.bf16 %v1694, %v1694
        %v1703 = vpack.c.bf16 %v1695, %v1695
        %v1704 = vpack.c.bf16 %v1696, %v1696
        %v1705 = vpack.c.bf16 %v1697, %v1697
        %v1706 = vpack.c.bf16 %v1698, %v1698
        %v1708 = vsel %vm1610, %v1699, 0
        %vm1710 = vcmask 1043456
        %v1712 = vsel %vm1710, %v1205, 0
        %1714 = vmatprep.subr.bf16.mxu0 0
        %1715 = vmatpush1.bf16.msra.mxu0 %v1712
        %1716 = vmatprep.subr.bf16.mxu0 0
        %1717 = vmatpush1.bf16.msra.mxu0 0
        %1718 = vmatprep.subr.bf16.mxu0 0
        %1719 = vmatpush1.bf16.msra.mxu0 0
        %1720 = vmatprep.subr.bf16.mxu0 0
        %1721 = vmatpush1.bf16.msra.mxu0 0
        %1722 = vmatprep.subr.bf16.mxu0 0
        %1723 = vmatpush1.bf16.msra.mxu0 0
        %1724 = vmatprep.subr.bf16.mxu0 0
        %1725 = vmatpush1.bf16.msra.mxu0 0
        %1726 = vmatprep.subr.bf16.mxu0 0
        %1727 = vmatpush1.bf16.msra.mxu0 0
        %1728 = vmatprep.subr.bf16.mxu0 0
        %1729 = vmatpush1.bf16.msra.mxu0 0
        %1730 = vmatprep.subr.bf16.mxu0 0
        %1731 = vmatpush1.bf16.msra.mxu0 0
        %1732 = vmatprep.subr.bf16.mxu0 0
        %1733 = vmatpush1.bf16.msra.mxu0 0
        %1734 = vmatprep.subr.bf16.mxu0 0
        %1735 = vmatpush1.bf16.msra.mxu0 0
        %1736 = vmatprep.subr.bf16.mxu0 0
        %1737 = vmatpush1.bf16.msra.mxu0 0
        %1738 = vmatprep.subr.bf16.mxu0 0
        %1739 = vmatpush1.bf16.msra.mxu0 0
        %1740 = vmatprep.subr.bf16.mxu0 0
        %1741 = vmatpush1.bf16.msra.mxu0 0
        %1742 = vmatprep.subr.bf16.mxu0 0
        %1743 = vmatpush1.bf16.msra.mxu0 0
        %1744 = vmatprep.subr.bf16.mxu0 0
        %1745 = vmatpush1.bf16.msra.mxu0 0
        %1746 = vmatprep.mubr.bf16.mxu0 0
        %1747 = vmatmul.mubr.bf16.gmra.mrb[0].mxu0 %v1708
        %v1748 = vpop.f32.mrb[0].mxu0
        %v1749 = vadd.f32 0.0, %v1748
        %v1750 = vpop.f32.mrb[0].mxu0
        %v1751 = vpop.f32.mrb[0].mxu0
        %v1752 = vpop.f32.mrb[0].mxu0
        %1753 = vdwg.mxu0
        %v1755 = vsel %vm1610, %v1700, 0
        %v1758 = vsel %vm1710, %v1206, 0
        %1760 = vmatprep.subr.bf16.mxu0 0
        %1761 = vmatpush1.bf16.msra.mxu0 %v1758
        %1762 = vmatprep.subr.bf16.mxu0 0
        %1763 = vmatpush1.bf16.msra.mxu0 0
        %1764 = vmatprep.subr.bf16.mxu0 0
        %1765 = vmatpush1.bf16.msra.mxu0 0
        %1766 = vmatprep.subr.bf16.mxu0 0
        %1767 = vmatpush1.bf16.msra.mxu0 0
        %1768 = vmatprep.subr.bf16.mxu0 0
        %1769 = vmatpush1.bf16.msra.mxu0 0
        %1770 = vmatprep.subr.bf16.mxu0 0
        %1771 = vmatpush1.bf16.msra.mxu0 0
        %1772 = vmatprep.subr.bf16.mxu0 0
        %1773 = vmatpush1.bf16.msra.mxu0 0
        %1774 = vmatprep.subr.bf16.mxu0 0
        %1775 = vmatpush1.bf16.msra.mxu0 0
        %1776 = vmatprep.subr.bf16.mxu0 0
        %1777 = vmatpush1.bf16.msra.mxu0 0
        %1778 = vmatprep.subr.bf16.mxu0 0
        %1779 = vmatpush1.bf16.msra.mxu0 0
        %1780 = vmatprep.subr.bf16.mxu0 0
        %1781 = vmatpush1.bf16.msra.mxu0 0
        %1782 = vmatprep.subr.bf16.mxu0 0
        %1783 = vmatpush1.bf16.msra.mxu0 0
        %1784 = vmatprep.subr.bf16.mxu0 0
        %1785 = vmatpush1.bf16.msra.mxu0 0
        %1786 = vmatprep.subr.bf16.mxu0 0
        %1787 = vmatpush1.bf16.msra.mxu0 0
        %1788 = vmatprep.subr.bf16.mxu0 0
        %1789 = vmatpush1.bf16.msra.mxu0 0
        %1790 = vmatprep.subr.bf16.mxu0 0
        %1791 = vmatpush1.bf16.msra.mxu0 0
        %1792 = vmatprep.mubr.bf16.mxu0 0
        %1793 = vmatmul.mubr.bf16.gmra.mrb[0].mxu0 %v1755
        %v1794 = vpop.f32.mrb[0].mxu0
        %v1795 = vadd.f32 0.0, %v1794
        %v1796 = vpop.f32.mrb[0].mxu0
        %v1797 = vpop.f32.mrb[0].mxu0
        %v1798 = vpop.f32.mrb[0].mxu0
        %1799 = vdwg.mxu0
        %v1801 = vsel %vm1610, %v1701, 0
        %v1804 = vsel %vm1710, %v1207, 0
        %1806 = vmatprep.subr.bf16.mxu0 0
        %1807 = vmatpush1.bf16.msra.mxu0 %v1804
        %1808 = vmatprep.subr.bf16.mxu0 0
        %1809 = vmatpush1.bf16.msra.mxu0 0
        %1810 = vmatprep.subr.bf16.mxu0 0
        %1811 = vmatpush1.bf16.msra.mxu0 0
        %1812 = vmatprep.subr.bf16.mxu0 0
        %1813 = vmatpush1.bf16.msra.mxu0 0
        %1814 = vmatprep.subr.bf16.mxu0 0
        %1815 = vmatpush1.bf16.msra.mxu0 0
        %1816 = vmatprep.subr.bf16.mxu0 0
        %1817 = vmatpush1.bf16.msra.mxu0 0
        %1818 = vmatprep.subr.bf16.mxu0 0
        %1819 = vmatpush1.bf16.msra.mxu0 0
        %1820 = vmatprep.subr.bf16.mxu0 0
        %1821 = vmatpush1.bf16.msra.mxu0 0
        %1822 = vmatprep.subr.bf16.mxu0 0
        %1823 = vmatpush1.bf16.msra.mxu0 0
        %1824 = vmatprep.subr.bf16.mxu0 0
        %1825 = vmatpush1.bf16.msra.mxu0 0
        %1826 = vmatprep.subr.bf16.mxu0 0
        %1827 = vmatpush1.bf16.msra.mxu0 0
        %1828 = vmatprep.subr.bf16.mxu0 0
        %1829 = vmatpush1.bf16.msra.mxu0 0
        %1830 = vmatprep.subr.bf16.mxu0 0
        %1831 = vmatpush1.bf16.msra.mxu0 0
        %1832 = vmatprep.subr.bf16.mxu0 0
        %1833 = vmatpush1.bf16.msra.mxu0 0
        %1834 = vmatprep.subr.bf16.mxu0 0
        %1835 = vmatpush1.bf16.msra.mxu0 0
        %1836 = vmatprep.subr.bf16.mxu0 0
        %1837 = vmatpush1.bf16.msra.mxu0 0
        %1838 = vmatprep.mubr.bf16.mxu0 0
        %1839 = vmatmul.mubr.bf16.gmra.mrb[0].mxu0 %v1801
        %v1840 = vpop.f32.mrb[0].mxu0
        %v1841 = vadd.f32 0.0, %v1840
        %v1842 = vpop.f32.mrb[0].mxu0
        %v1843 = vpop.f32.mrb[0].mxu0
        %v1844 = vpop.f32.mrb[0].mxu0
        %1845 = vdwg.mxu0
        %v1847 = vsel %vm1610, %v1702, 0
        %v1850 = vsel %vm1710, %v1208, 0
        %1852 = vmatprep.subr.bf16.mxu0 0
        %1853 = vmatpush1.bf16.msra.mxu0 %v1850
        %1854 = vmatprep.subr.bf16.mxu0 0
        %1855 = vmatpush1.bf16.msra.mxu0 0
        %1856 = vmatprep.subr.bf16.mxu0 0
        %1857 = vmatpush1.bf16.msra.mxu0 0
        %1858 = vmatprep.subr.bf16.mxu0 0
        %1859 = vmatpush1.bf16.msra.mxu0 0
        %1860 = vmatprep.subr.bf16.mxu0 0
        %1861 = vmatpush1.bf16.msra.mxu0 0
        %1862 = vmatprep.subr.bf16.mxu0 0
        %1863 = vmatpush1.bf16.msra.mxu0 0
        %1864 = vmatprep.subr.bf16.mxu0 0
        %1865 = vmatpush1.bf16.msra.mxu0 0
        %1866 = vmatprep.subr.bf16.mxu0 0
        %1867 = vmatpush1.bf16.msra.mxu0 0
        %1868 = vmatprep.subr.bf16.mxu0 0
        %1869 = vmatpush1.bf16.msra.mxu0 0
        %1870 = vmatprep.subr.bf16.mxu0 0
        %1871 = vmatpush1.bf16.msra.mxu0 0
        %1872 = vmatprep.subr.bf16.mxu0 0
        %1873 = vmatpush1.bf16.msra.mxu0 0
        %1874 = vmatprep.subr.bf16.mxu0 0
        %1875 = vmatpush1.bf16.msra.mxu0 0
        %1876 = vmatprep.subr.bf16.mxu0 0
        %1877 = vmatpush1.bf16.msra.mxu0 0
        %1878 = vmatprep.subr.bf16.mxu0 0
        %1879 = vmatpush1.bf16.msra.mxu0 0
        %1880 = vmatprep.subr.bf16.mxu0 0
        %1881 = vmatpush1.bf16.msra.mxu0 0
        %1882 = vmatprep.subr.bf16.mxu0 0
        %1883 = vmatpush1.bf16.msra.mxu0 0
        %1884 = vmatprep.mubr.bf16.mxu0 0
        %1885 = vmatmul.mubr.bf16.gmra.mrb[0].mxu0 %v1847
        %v1886 = vpop.f32.mrb[0].mxu0
        %v1887 = vadd.f32 0.0, %v1886
        %v1888 = vpop.f32.mrb[0].mxu0
        %v1889 = vpop.f32.mrb[0].mxu0
        %v1890 = vpop.f32.mrb[0].mxu0
        %1891 = vdwg.mxu0
        %v1893 = vsel %vm1610, %v1703, 0
        %v1896 = vsel %vm1710, %v1209, 0
        %1898 = vmatprep.subr.bf16.mxu0 0
        %1899 = vmatpush1.bf16.msra.mxu0 %v1896
        %1900 = vmatprep.subr.bf16.mxu0 0
        %1901 = vmatpush1.bf16.msra.mxu0 0
        %1902 = vmatprep.subr.bf16.mxu0 0
        %1903 = vmatpush1.bf16.msra.mxu0 0
        %1904 = vmatprep.subr.bf16.mxu0 0
        %1905 = vmatpush1.bf16.msra.mxu0 0
        %1906 = vmatprep.subr.bf16.mxu0 0
        %1907 = vmatpush1.bf16.msra.mxu0 0
        %1908 = vmatprep.subr.bf16.mxu0 0
        %1909 = vmatpush1.bf16.msra.mxu0 0
        %1910 = vmatprep.subr.bf16.mxu0 0
        %1911 = vmatpush1.bf16.msra.mxu0 0
        %1912 = vmatprep.subr.bf16.mxu0 0
        %1913 = vmatpush1.bf16.msra.mxu0 0
        %1914 = vmatprep.subr.bf16.mxu0 0
        %1915 = vmatpush1.bf16.msra.mxu0 0
        %1916 = vmatprep.subr.bf16.mxu0 0
        %1917 = vmatpush1.bf16.msra.mxu0 0
        %1918 = vmatprep.subr.bf16.mxu0 0
        %1919 = vmatpush1.bf16.msra.mxu0 0
        %1920 = vmatprep.subr.bf16.mxu0 0
        %1921 = vmatpush1.bf16.msra.mxu0 0
        %1922 = vmatprep.subr.bf16.mxu0 0
        %1923 = vmatpush1.bf16.msra.mxu0 0
        %1924 = vmatprep.subr.bf16.mxu0 0
        %1925 = vmatpush1.bf16.msra.mxu0 0
        %1926 = vmatprep.subr.bf16.mxu0 0
        %1927 = vmatpush1.bf16.msra.mxu0 0
        %1928 = vmatprep.subr.bf16.mxu0 0
        %1929 = vmatpush1.bf16.msra.mxu0 0
        %1930 = vmatprep.mubr.bf16.mxu0 0
        %1931 = vmatmul.mubr.bf16.gmra.mrb[0].mxu0 %v1893
        %v1932 = vpop.f32.mrb[0].mxu0
        %v1933 = vadd.f32 0.0, %v1932
        %v1934 = vpop.f32.mrb[0].mxu0
        %v1935 = vpop.f32.mrb[0].mxu0
        %v1936 = vpop.f32.mrb[0].mxu0
        %1937 = vdwg.mxu0
        %v1939 = vsel %vm1610, %v1704, 0
        %v1942 = vsel %vm1710, %v1210, 0
        %1944 = vmatprep.subr.bf16.mxu0 0
        %1945 = vmatpush1.bf16.msra.mxu0 %v1942
        %1946 = vmatprep.subr.bf16.mxu0 0
        %1947 = vmatpush1.bf16.msra.mxu0 0
        %1948 = vmatprep.subr.bf16.mxu0 0
        %1949 = vmatpush1.bf16.msra.mxu0 0
        %1950 = vmatprep.subr.bf16.mxu0 0
        %1951 = vmatpush1.bf16.msra.mxu0 0
        %1952 = vmatprep.subr.bf16.mxu0 0
        %1953 = vmatpush1.bf16.msra.mxu0 0
        %1954 = vmatprep.subr.bf16.mxu0 0
        %1955 = vmatpush1.bf16.msra.mxu0 0
        %1956 = vmatprep.subr.bf16.mxu0 0
        %1957 = vmatpush1.bf16.msra.mxu0 0
        %1958 = vmatprep.subr.bf16.mxu0 0
        %1959 = vmatpush1.bf16.msra.mxu0 0
        %1960 = vmatprep.subr.bf16.mxu0 0
        %1961 = vmatpush1.bf16.msra.mxu0 0
        %1962 = vmatprep.subr.bf16.mxu0 0
        %1963 = vmatpush1.bf16.msra.mxu0 0
        %1964 = vmatprep.subr.bf16.mxu0 0
        %1965 = vmatpush1.bf16.msra.mxu0 0
        %1966 = vmatprep.subr.bf16.mxu0 0
        %1967 = vmatpush1.bf16.msra.mxu0 0
        %1968 = vmatprep.subr.bf16.mxu0 0
        %1969 = vmatpush1.bf16.msra.mxu0 0
        %1970 = vmatprep.subr.bf16.mxu0 0
        %1971 = vmatpush1.bf16.msra.mxu0 0
        %1972 = vmatprep.subr.bf16.mxu0 0
        %1973 = vmatpush1.bf16.msra.mxu0 0
        %1974 = vmatprep.subr.bf16.mxu0 0
        %1975 = vmatpush1.bf16.msra.mxu0 0
        %1976 = vmatprep.mubr.bf16.mxu0 0
        %1977 = vmatmul.mubr.bf16.gmra.mrb[0].mxu0 %v1939
        %v1978 = vpop.f32.mrb[0].mxu0
        %v1979 = vadd.f32 0.0, %v1978
        %v1980 = vpop.f32.mrb[0].mxu0
        %v1981 = vpop.f32.mrb[0].mxu0
        %v1982 = vpop.f32.mrb[0].mxu0
        %1983 = vdwg.mxu0
        %v1985 = vsel %vm1610, %v1705, 0
        %v1988 = vsel %vm1710, %v1211, 0
        %1990 = vmatprep.subr.bf16.mxu0 0
        %1991 = vmatpush1.bf16.msra.mxu0 %v1988
        %1992 = vmatprep.subr.bf16.mxu0 0
        %1993 = vmatpush1.bf16.msra.mxu0 0
        %1994 = vmatprep.subr.bf16.mxu0 0
        %1995 = vmatpush1.bf16.msra.mxu0 0
        %1996 = vmatprep.subr.bf16.mxu0 0
        %1997 = vmatpush1.bf16.msra.mxu0 0
        %1998 = vmatprep.subr.bf16.mxu0 0
        %1999 = vmatpush1.bf16.msra.mxu0 0
        %2000 = vmatprep.subr.bf16.mxu0 0
        %2001 = vmatpush1.bf16.msra.mxu0 0
        %2002 = vmatprep.subr.bf16.mxu0 0
        %2003 = vmatpush1.bf16.msra.mxu0 0
        %2004 = vmatprep.subr.bf16.mxu0 0
        %2005 = vmatpush1.bf16.msra.mxu0 0
        %2006 = vmatprep.subr.bf16.mxu0 0
        %2007 = vmatpush1.bf16.msra.mxu0 0
        %2008 = vmatprep.subr.bf16.mxu0 0
        %2009 = vmatpush1.bf16.msra.mxu0 0
        %2010 = vmatprep.subr.bf16.mxu0 0
        %2011 = vmatpush1.bf16.msra.mxu0 0
        %2012 = vmatprep.subr.bf16.mxu0 0
        %2013 = vmatpush1.bf16.msra.mxu0 0
        %2014 = vmatprep.subr.bf16.mxu0 0
        %2015 = vmatpush1.bf16.msra.mxu0 0
        %2016 = vmatprep.subr.bf16.mxu0 0
        %2017 = vmatpush1.bf16.msra.mxu0 0
        %2018 = vmatprep.subr.bf16.mxu0 0
        %2019 = vmatpush1.bf16.msra.mxu0 0
        %2020 = vmatprep.subr.bf16.mxu0 0
        %2021 = vmatpush1.bf16.msra.mxu0 0
        %2022 = vmatprep.mubr.bf16.mxu0 0
        %2023 = vmatmul.mubr.bf16.gmra.mrb[0].mxu0 %v1985
        %v2024 = vpop.f32.mrb[0].mxu0
        %v2025 = vadd.f32 0.0, %v2024
        %v2026 = vpop.f32.mrb[0].mxu0
        %v2027 = vpop.f32.mrb[0].mxu0
        %v2028 = vpop.f32.mrb[0].mxu0
        %2029 = vdwg.mxu0
        %v2031 = vsel %vm1610, %v1706, 0
        %v2034 = vsel %vm1710, %v1212, 0
        %2036 = vmatprep.subr.bf16.mxu0 0
        %2037 = vmatpush1.bf16.msra.mxu0 %v2034
        %2038 = vmatprep.subr.bf16.mxu0 0
        %2039 = vmatpush1.bf16.msra.mxu0 0
        %2040 = vmatprep.subr.bf16.mxu0 0
        %2041 = vmatpush1.bf16.msra.mxu0 0
        %2042 = vmatprep.subr.bf16.mxu0 0
        %2043 = vmatpush1.bf16.msra.mxu0 0
        %2044 = vmatprep.subr.bf16.mxu0 0
        %2045 = vmatpush1.bf16.msra.mxu0 0
        %2046 = vmatprep.subr.bf16.mxu0 0
        %2047 = vmatpush1.bf16.msra.mxu0 0
        %2048 = vmatprep.subr.bf16.mxu0 0
        %2049 = vmatpush1.bf16.msra.mxu0 0
        %2050 = vmatprep.subr.bf16.mxu0 0
        %2051 = vmatpush1.bf16.msra.mxu0 0
        %2052 = vmatprep.subr.bf16.mxu0 0
        %2053 = vmatpush1.bf16.msra.mxu0 0
        %2054 = vmatprep.subr.bf16.mxu0 0
        %2055 = vmatpush1.bf16.msra.mxu0 0
        %2056 = vmatprep.subr.bf16.mxu0 0
        %2057 = vmatpush1.bf16.msra.mxu0 0
        %2058 = vmatprep.subr.bf16.mxu0 0
        %2059 = vmatpush1.bf16.msra.mxu0 0
        %2060 = vmatprep.subr.bf16.mxu0 0
        %2061 = vmatpush1.bf16.msra.mxu0 0
        %2062 = vmatprep.subr.bf16.mxu0 0
        %2063 = vmatpush1.bf16.msra.mxu0 0
        %2064 = vmatprep.subr.bf16.mxu0 0
        %2065 = vmatpush1.bf16.msra.mxu0 0
        %2066 = vmatprep.subr.bf16.mxu0 0
        %2067 = vmatpush1.bf16.msra.mxu0 0
        %2068 = vmatprep.mubr.bf16.mxu0 0
        %2069 = vmatmul.mubr.bf16.gmra.mrb[0].mxu0 %v2031
        %v2070 = vpop.f32.mrb[0].mxu0
        %v2071 = vadd.f32 0.0, %v2070
        %v2072 = vpop.f32.mrb[0].mxu0
        %v2073 = vpop.f32.mrb[0].mxu0
        %v2074 = vpop.f32.mrb[0].mxu0
        %2075 = vdwg.mxu0
        %2080 = vrot.lane.b32.xlu0 %v1933, 16
        %v2081 = vpop.permute.xlu0 %2080
        %2082 = vrot.lane.b32.xlu0 %v1979, 16
        %v2083 = vpop.permute.xlu0 %2082
        %2084 = vrot.lane.b32.xlu0 %v2025, 16
        %v2085 = vpop.permute.xlu0 %2084
        %2086 = vrot.lane.b32.xlu0 %v2071, 16
        %v2087 = vpop.permute.xlu0 %2086
        %v2092 = vsel %vm1241, %v1749, %v2081
        %v2093 = vsel %vm1241, %v1795, %v2083
        %v2094 = vsel %vm1241, %v1841, %v2085
        %v2095 = vsel %vm1241, %v1887, %v2087
        %v2096 = vpack.c.bf16 %v2093, %v2092
        %v2097 = vpack.c.bf16 %v2095, %v2094
        %v2098 = vld [vmem:[%s830] sm:$0xf]
        %v2099 = vld [vmem:[%s830 + $0x4] sm:$0xf]
        %v2100 = vld [vmem:[%s830 + $0x8] sm:$0xf]
        %v2101 = vld [vmem:[%s830 + $0xc] sm:$0xf]
        %v2102 = vld [vmem:[%s833] sm:$0x1]
        %v2104 = vlaneseq
        %v2105 = vshrl.u32 %v2104, 7
        %v2106 = vsub.s32 0, %v2105
        %v2107 = vrot.slane %v2102, %v2106
        %v2113 = vunpack.c.l.b16 %v2098
        %v2114 = vunpack.c.l.b16 %v2099
        %v2115 = vunpack.c.l.b16 %v2100
        %v2116 = vunpack.c.l.b16 %v2101
        %v2117 = vpack.c.b16 %v2114, %v2113
        %v2118 = vpack.c.b16 %v2116, %v2115
        %v2122 = vsel %vm941, %v2096, 0
        %v2125 = vsel %vm941, %v2097, 0
        %2127 = vmatprep.subr.bf16.mxu0 0
        %2128 = vmatpush1.bf16.msra.mxu0 %v2117
        %2129 = vmatprep.subr.bf16.mxu0 0
        %2130 = vmatpush1.bf16.msra.mxu0 %v2118
        %2131 = vmatprep.subr.bf16.mxu0 0
        %2132 = vmatpush1.bf16.msra.mxu0 0
        %2133 = vmatprep.subr.bf16.mxu0 0
        %2134 = vmatpush1.bf16.msra.mxu0 0
        %2135 = vmatprep.subr.bf16.mxu0 0
        %2136 = vmatpush1.bf16.msra.mxu0 0
        %2137 = vmatprep.subr.bf16.mxu0 0
        %2138 = vmatpush1.bf16.msra.mxu0 0
        %2139 = vmatprep.subr.bf16.mxu0 0
        %2140 = vmatpush1.bf16.msra.mxu0 0
        %2141 = vmatprep.subr.bf16.mxu0 0
        %2142 = vmatpush1.bf16.msra.mxu0 0
        %2143 = vmatprep.subr.bf16.mxu0 0
        %2144 = vmatpush1.bf16.msra.mxu0 0
        %2145 = vmatprep.subr.bf16.mxu0 0
        %2146 = vmatpush1.bf16.msra.mxu0 0
        %2147 = vmatprep.subr.bf16.mxu0 0
        %2148 = vmatpush1.bf16.msra.mxu0 0
        %2149 = vmatprep.subr.bf16.mxu0 0
        %2150 = vmatpush1.bf16.msra.mxu0 0
        %2151 = vmatprep.subr.bf16.mxu0 0
        %2152 = vmatpush1.bf16.msra.mxu0 0
        %2153 = vmatprep.subr.bf16.mxu0 0
        %2154 = vmatpush1.bf16.msra.mxu0 0
        %2155 = vmatprep.subr.bf16.mxu0 0
        %2156 = vmatpush1.bf16.msra.mxu0 0
        %2157 = vmatprep.subr.bf16.mxu0 0
        %2158 = vmatpush1.bf16.msra.mxu0 0
        %2159 = vmatprep.mubr.bf16.mxu0 0
        %2160 = vmatmul.mubr.bf16.gmra.mrb[0].mxu0 %v2122
        %v2161 = vpop.f32.mrb[0].mxu0
        %v2162 = vadd.f32 %v2107, %v2161
        %v2163 = vpop.f32.mrb[0].mxu0
        %v2164 = vpop.f32.mrb[0].mxu0
        %v2165 = vadd.f32 %v2107, %v2164
        %v2166 = vpop.f32.mrb[0].mxu0
        %2167 = vmatprep.mubr.bf16.mxu0 0
        %2168 = vmatmul.mubr.bf16.gmra.mrb[0].mxu0 %v2125
        %v2169 = vpop.f32.mrb[0].mxu0
        %v2170 = vadd.f32 %v2107, %v2169
        %v2171 = vpop.f32.mrb[0].mxu0
        %v2172 = vpop.f32.mrb[0].mxu0
        %v2173 = vadd.f32 %v2107, %v2172
        %v2174 = vpop.f32.mrb[0].mxu0
        %2175 = vdwg.mxu0
        %v2176 = vadd.f32 %v2162, %v912
        %v2177 = vadd.f32 %v2165, %v913
        %v2178 = vadd.f32 %v2170, %v914
        %v2179 = vadd.f32 %v2173, %v915
        %v2180 = vld [vmem:[%s836] sm:$0x1]
        %v2181 = vld [vmem:[%s839] sm:$0x1]
        %v2182 = vsel %vm941, %v2176, 0.0
        %2183 = vadd.xlane.f32.xlu0 %v2182
        %v2184 = vpop.xlane.xlu0 %2183
        %v2185 = vsel %vm941, %v2177, 0.0
        %2186 = vadd.xlane.f32.xlu0 %v2185
        %v2187 = vpop.xlane.xlu0 %2186
        %v2188 = vsel %vm941, %v2178, 0.0
        %2189 = vadd.xlane.f32.xlu0 %v2188
        %v2190 = vpop.xlane.xlu0 %2189
        %v2191 = vsel %vm941, %v2179, 0.0
        %2192 = vadd.xlane.f32.xlu0 %v2191
        %v2193 = vpop.xlane.xlu0 %2192
        %v2194 = vrcp.pop 32.0
        %v2195 = vmul.f32 %v2184, %v2194
        %v2196 = vmul.f32 %v2187, %v2194
        %v2197 = vmul.f32 %v2190, %v2194
        %v2198 = vmul.f32 %v2193, %v2194
        %v2199 = vsub.f32 %v2176, %v2195
        %v2200 = vsub.f32 %v2177, %v2196
        %v2201 = vsub.f32 %v2178, %v2197
        %v2202 = vsub.f32 %v2179, %v2198
        %v2203 = vmul.f32 %v2199, %v2199
        %v2204 = vmul.f32 %v2200, %v2200
        %v2205 = vmul.f32 %v2201, %v2201
        %v2206 = vmul.f32 %v2202, %v2202
        %v2207 = vsel %vm941, %v2203, 0.0
        %2208 = vadd.xlane.f32.xlu0 %v2207
        %v2209 = vpop.xlane.xlu0 %2208
        %v2210 = vsel %vm941, %v2204, 0.0
        %2211 = vadd.xlane.f32.xlu0 %v2210
        %v2212 = vpop.xlane.xlu0 %2211
        %v2213 = vsel %vm941, %v2205, 0.0
        %2214 = vadd.xlane.f32.xlu0 %v2213
        %v2215 = vpop.xlane.xlu0 %2214
        %v2216 = vsel %vm941, %v2206, 0.0
        %2217 = vadd.xlane.f32.xlu0 %v2216
        %v2218 = vpop.xlane.xlu0 %2217
        %v2219 = vmul.f32 %v2209, %v2194
        %v2220 = vmul.f32 %v2212, %v2194
        %v2221 = vmul.f32 %v2215, %v2194
        %v2222 = vmul.f32 %v2218, %v2194
        %v2223 = vadd.f32 %v2219, 1e-05
        %v2224 = vadd.f32 %v2220, 1e-05
        %v2225 = vadd.f32 %v2221, 1e-05
        %v2226 = vadd.f32 %v2222, 1e-05
        %v2227 = vrsqrt.pop %v2223
        %v2228 = vrsqrt.pop %v2224
        %v2229 = vrsqrt.pop %v2225
        %v2230 = vrsqrt.pop %v2226
        %v2231 = vmul.f32 %v2199, %v2227
        %v2232 = vmul.f32 %v2200, %v2228
        %v2233 = vmul.f32 %v2201, %v2229
        %v2234 = vmul.f32 %v2202, %v2230
        %v2236 = vlaneseq
        %v2237 = vshrl.u32 %v2236, 7
        %v2238 = vsub.s32 0, %v2237
        %v2239 = vrot.slane %v2180, %v2238
        %v2241 = vmul.f32 %v2231, %v2239
        %v2242 = vmul.f32 %v2232, %v2239
        %v2243 = vmul.f32 %v2233, %v2239
        %v2244 = vmul.f32 %v2234, %v2239
        %v2246 = vlaneseq
        %v2247 = vshrl.u32 %v2246, 7
        %v2248 = vsub.s32 0, %v2247
        %v2249 = vrot.slane %v2181, %v2248
        %v2251 = vadd.f32 %v2241, %v2249
        %v2252 = vadd.f32 %v2242, %v2249
        %v2253 = vadd.f32 %v2243, %v2249
        %v2254 = vadd.f32 %v2244, %v2249
        %v2255 = vpack.c.bf16 %v2252, %v2251
        %v2256 = vpack.c.bf16 %v2254, %v2253
        %v2257 = vld [vmem:[%s844] sm:$0xf]
        %v2258 = vld [vmem:[%s844 + $0x4] sm:$0xf]
        %v2259 = vld [vmem:[%s844 + $0x8] sm:$0xf]
        %v2260 = vld [vmem:[%s844 + $0xc] sm:$0xf]
        %v2265 = vunpack.c.l.b16 %v2257
        %v2266 = vunpack.c.l.b16 %v2258
        %v2267 = vunpack.c.l.b16 %v2259
        %v2268 = vunpack.c.l.b16 %v2260
        %v2269 = vpack.c.b16 %v2266, %v2265
        %v2270 = vpack.c.b16 %v2268, %v2267
        %v2274 = vsel %vm941, %v2255, 0
        %v2277 = vsel %vm941, %v2256, 0
        %2279 = vmatprep.subr.bf16.mxu0 0
        %2280 = vmatpush1.bf16.msra.mxu0 %v2269
        %2281 = vmatprep.subr.bf16.mxu0 0
        %2282 = vmatpush1.bf16.msra.mxu0 %v2270
        %2283 = vmatprep.subr.bf16.mxu0 0
        %2284 = vmatpush1.bf16.msra.mxu0 0
        %2285 = vmatprep.subr.bf16.mxu0 0
        %2286 = vmatpush1.bf16.msra.mxu0 0
        %2287 = vmatprep.subr.bf16.mxu0 0
        %2288 = vmatpush1.bf16.msra.mxu0 0
        %2289 = vmatprep.subr.bf16.mxu0 0
        %2290 = vmatpush1.bf16.msra.mxu0 0
        %2291 = vmatprep.subr.bf16.mxu0 0
        %2292 = vmatpush1.bf16.msra.mxu0 0
        %2293 = vmatprep.subr.bf16.mxu0 0
        %2294 = vmatpush1.bf16.msra.mxu0 0
        %2295 = vmatprep.subr.bf16.mxu0 0
        %2296 = vmatpush1.bf16.msra.mxu0 0
        %2297 = vmatprep.subr.bf16.mxu0 0
        %2298 = vmatpush1.bf16.msra.mxu0 0
        %2299 = vmatprep.subr.bf16.mxu0 0
        %2300 = vmatpush1.bf16.msra.mxu0 0
        %2301 = vmatprep.subr.bf16.mxu0 0
        %2302 = vmatpush1.bf16.msra.mxu0 0
        %2303 = vmatprep.subr.bf16.mxu0 0
        %2304 = vmatpush1.bf16.msra.mxu0 0
        %2305 = vmatprep.subr.bf16.mxu0 0
        %2306 = vmatpush1.bf16.msra.mxu0 0
        %2307 = vmatprep.subr.bf16.mxu0 0
        %2308 = vmatpush1.bf16.msra.mxu0 0
        %2309 = vmatprep.subr.bf16.mxu0 0
        %2310 = vmatpush1.bf16.msra.mxu0 0
        %2311 = vmatprep.mubr.bf16.mxu0 0
        %2312 = vmatmul.mubr.bf16.gmra.mrb[0].mxu0 %v2274
        %v2313 = vpop.f32.mrb[0].mxu0
        %v2314 = vadd.f32 0.0, %v2313
        %v2315 = vpop.f32.mrb[0].mxu0
        %v2316 = vpop.f32.mrb[0].mxu0
        %v2317 = vadd.f32 0.0, %v2316
        %v2318 = vpop.f32.mrb[0].mxu0
        %2319 = vmatprep.mubr.bf16.mxu0 0
        %2320 = vmatmul.mubr.bf16.gmra.mrb[0].mxu0 %v2277
        %v2321 = vpop.f32.mrb[0].mxu0
        %v2322 = vadd.f32 0.0, %v2321
        %v2323 = vpop.f32.mrb[0].mxu0
        %v2324 = vpop.f32.mrb[0].mxu0
        %v2325 = vadd.f32 0.0, %v2324
        %v2326 = vpop.f32.mrb[0].mxu0
        %2327 = vdwg.mxu0
        %v2328 = vmax.f32 %v2314, 0.0
        %v2329 = vmax.f32 %v2317, 0.0
        %v2330 = vmax.f32 %v2322, 0.0
        %v2331 = vmax.f32 %v2325, 0.0
        %v2332 = vpack.c.bf16 %v2329, %v2328
        %v2333 = vpack.c.bf16 %v2331, %v2330
        %v2334 = vld [vmem:[%s849] sm:$0xf]
        %v2335 = vld [vmem:[%s849 + $0x4] sm:$0xf]
        %v2336 = vld [vmem:[%s849 + $0x8] sm:$0xf]
        %v2337 = vld [vmem:[%s849 + $0xc] sm:$0xf]
        %v2338 = vld [vmem:[%s849 + $0x10] sm:$0xf]
        %v2339 = vld [vmem:[%s849 + $0x14] sm:$0xf]
        %v2340 = vld [vmem:[%s849 + $0x18] sm:$0xf]
        %v2341 = vld [vmem:[%s849 + $0x1c] sm:$0xf]
        %v2350 = vunpack.c.l.b16 %v2334
        %v2351 = vunpack.c.l.b16 %v2335
        %v2352 = vunpack.c.l.b16 %v2336
        %v2353 = vunpack.c.l.b16 %v2337
        %v2354 = vunpack.c.l.b16 %v2338
        %v2355 = vunpack.c.l.b16 %v2339
        %v2356 = vunpack.c.l.b16 %v2340
        %v2357 = vunpack.c.l.b16 %v2341
        %v2358 = vpack.c.b16 %v2351, %v2350
        %v2359 = vpack.c.b16 %v2353, %v2352
        %v2360 = vpack.c.b16 %v2355, %v2354
        %v2361 = vpack.c.b16 %v2357, %v2356
        %vm2366 = vcmask 523264
        %v2368 = vsel %vm2366, %v2332, 0
        %v2371 = vsel %vm2366, %v2333, 0
        %2373 = vmatprep.subr.bf16.mxu0 0
        %2374 = vmatpush1.bf16.msra.mxu0 %v2358
        %2375 = vmatprep.subr.bf16.mxu0 0
        %2376 = vmatpush1.bf16.msra.mxu0 %v2359
        %2377 = vmatprep.subr.bf16.mxu0 0
        %2378 = vmatpush1.bf16.msra.mxu0 %v2360
        %2379 = vmatprep.subr.bf16.mxu0 0
        %2380 = vmatpush1.bf16.msra.mxu0 %v2361
        %2381 = vmatprep.subr.bf16.mxu0 0
        %2382 = vmatpush1.bf16.msra.mxu0 0
        %2383 = vmatprep.subr.bf16.mxu0 0
        %2384 = vmatpush1.bf16.msra.mxu0 0
        %2385 = vmatprep.subr.bf16.mxu0 0
        %2386 = vmatpush1.bf16.msra.mxu0 0
        %2387 = vmatprep.subr.bf16.mxu0 0
        %2388 = vmatpush1.bf16.msra.mxu0 0
        %2389 = vmatprep.subr.bf16.mxu0 0
        %2390 = vmatpush1.bf16.msra.mxu0 0
        %2391 = vmatprep.subr.bf16.mxu0 0
        %2392 = vmatpush1.bf16.msra.mxu0 0
        %2393 = vmatprep.subr.bf16.mxu0 0
        %2394 = vmatpush1.bf16.msra.mxu0 0
        %2395 = vmatprep.subr.bf16.mxu0 0
        %2396 = vmatpush1.bf16.msra.mxu0 0
        %2397 = vmatprep.subr.bf16.mxu0 0
        %2398 = vmatpush1.bf16.msra.mxu0 0
        %2399 = vmatprep.subr.bf16.mxu0 0
        %2400 = vmatpush1.bf16.msra.mxu0 0
        %2401 = vmatprep.subr.bf16.mxu0 0
        %2402 = vmatpush1.bf16.msra.mxu0 0
        %2403 = vmatprep.subr.bf16.mxu0 0
        %2404 = vmatpush1.bf16.msra.mxu0 0
        %2405 = vmatprep.mubr.bf16.mxu0 0
        %2406 = vmatmul.mubr.bf16.gmra.mrb[0].mxu0 %v2368
        %v2407 = vpop.f32.mrb[0].mxu0
        %v2408 = vadd.f32 %v2251, %v2407
        %v2409 = vpop.f32.mrb[0].mxu0
        %v2410 = vpop.f32.mrb[0].mxu0
        %v2411 = vadd.f32 %v2252, %v2410
        %v2412 = vpop.f32.mrb[0].mxu0
        %2413 = vmatprep.mubr.bf16.mxu0 0
        %2414 = vmatmul.mubr.bf16.gmra.mrb[0].mxu0 %v2371
        %v2415 = vpop.f32.mrb[0].mxu0
        %v2416 = vadd.f32 %v2253, %v2415
        %v2417 = vpop.f32.mrb[0].mxu0
        %v2418 = vpop.f32.mrb[0].mxu0
        %v2419 = vadd.f32 %v2254, %v2418
        %v2420 = vpop.f32.mrb[0].mxu0
        %2421 = vdwg.mxu0
        %v2422 = vld [vmem:[%s852] sm:$0x1]
        %v2423 = vld [vmem:[%s855] sm:$0x1]
        %v2424 = vsel %vm941, %v2408, 0.0
        %2425 = vadd.xlane.f32.xlu0 %v2424
        %v2426 = vpop.xlane.xlu0 %2425
        %v2427 = vsel %vm941, %v2411, 0.0
        %2428 = vadd.xlane.f32.xlu0 %v2427
        %v2429 = vpop.xlane.xlu0 %2428
        %v2430 = vsel %vm941, %v2416, 0.0
        %2431 = vadd.xlane.f32.xlu0 %v2430
        %v2432 = vpop.xlane.xlu0 %2431
        %v2433 = vsel %vm941, %v2419, 0.0
        %2434 = vadd.xlane.f32.xlu0 %v2433
        %v2435 = vpop.xlane.xlu0 %2434
        %v2436 = vmul.f32 %v2426, %v2194
        %v2437 = vmul.f32 %v2429, %v2194
        %v2438 = vmul.f32 %v2432, %v2194
        %v2439 = vmul.f32 %v2435, %v2194
        %v2440 = vsub.f32 %v2408, %v2436
        %v2441 = vsub.f32 %v2411, %v2437
        %v2442 = vsub.f32 %v2416, %v2438
        %v2443 = vsub.f32 %v2419, %v2439
        %v2444 = vmul.f32 %v2440, %v2440
        %v2445 = vmul.f32 %v2441, %v2441
        %v2446 = vmul.f32 %v2442, %v2442
        %v2447 = vmul.f32 %v2443, %v2443
        %v2448 = vsel %vm941, %v2444, 0.0
        %2449 = vadd.xlane.f32.xlu0 %v2448
        %v2450 = vpop.xlane.xlu0 %2449
        %v2451 = vsel %vm941, %v2445, 0.0
        %2452 = vadd.xlane.f32.xlu0 %v2451
        %v2453 = vpop.xlane.xlu0 %2452
        %v2454 = vsel %vm941, %v2446, 0.0
        %2455 = vadd.xlane.f32.xlu0 %v2454
        %v2456 = vpop.xlane.xlu0 %2455
        %v2457 = vsel %vm941, %v2447, 0.0
        %2458 = vadd.xlane.f32.xlu0 %v2457
        %v2459 = vpop.xlane.xlu0 %2458
        %v2460 = vmul.f32 %v2450, %v2194
        %v2461 = vmul.f32 %v2453, %v2194
        %v2462 = vmul.f32 %v2456, %v2194
        %v2463 = vmul.f32 %v2459, %v2194
        %v2464 = vadd.f32 %v2460, 1e-05
        %v2465 = vadd.f32 %v2461, 1e-05
        %v2466 = vadd.f32 %v2462, 1e-05
        %v2467 = vadd.f32 %v2463, 1e-05
        %v2468 = vrsqrt.pop %v2464
        %v2469 = vrsqrt.pop %v2465
        %v2470 = vrsqrt.pop %v2466
        %v2471 = vrsqrt.pop %v2467
        %v2472 = vmul.f32 %v2440, %v2468
        %v2473 = vmul.f32 %v2441, %v2469
        %v2474 = vmul.f32 %v2442, %v2470
        %v2475 = vmul.f32 %v2443, %v2471
        %v2477 = vlaneseq
        %v2478 = vshrl.u32 %v2477, 7
        %v2479 = vsub.s32 0, %v2478
        %v2480 = vrot.slane %v2422, %v2479
        %v2482 = vmul.f32 %v2472, %v2480
        %v2483 = vmul.f32 %v2473, %v2480
        %v2484 = vmul.f32 %v2474, %v2480
        %v2485 = vmul.f32 %v2475, %v2480
        %v2487 = vlaneseq
        %v2488 = vshrl.u32 %v2487, 7
        %v2489 = vsub.s32 0, %v2488
        %v2490 = vrot.slane %v2423, %v2489
        %v2492 = vadd.f32 %v2482, %v2490
        %v2493 = vadd.f32 %v2483, %v2490
        %v2494 = vadd.f32 %v2484, %v2490
        %v2495 = vadd.f32 %v2485, %v2490
        %2496 = vst.msk [vmem:[#allocation2] sm:$0xff] %vm941, %v2492
        %2497 = vst.msk [vmem:[#allocation2 + $0x8] sm:$0xff] %vm941, %v2493
        %2498 = vst.msk [vmem:[#allocation2 + $0x10] sm:$0xff] %vm941, %v2494
        %2499 = vst.msk [vmem:[#allocation2 + $0x18] sm:$0xff] %vm941, %v2495
        %p2500 = scmp.eq.s32.totalorder %s34, 1
        // Predicated region
        $region143: #{k_bert_wcl_forward.1} parent=103 // pred_check
          %p2501 = pneg %p2500
        $region144: #{k_bert_wcl_forward.1} parent=103 // pred_check_branch
          %2503 = sbr.rel (%p2501) target = $region146
        $region145: #{k_bert_wcl_forward.1} parent=103 // pred_region
          %v2504 = vld [vmem:[#allocation2] ss:$8 sm:$0xf]
          %v2505 = vld [vmem:[%s16] sm:$0xff]
          %v2506 = vld [vmem:[%s16 + $0x8] sm:$0xff]
          %v2507 = vld [vmem:[%s16 + $0x10] sm:$0xff]
          %v2508 = vld [vmem:[%s16 + $0x18] sm:$0xff]
          %v2509 = vld [vmem:[%s17] sm:$0x1]
          %v2511 = vlaneseq
          %v2512 = vshrl.u32 %v2511, 7
          %v2513 = vsub.s32 0, %v2512
          %v2514 = vrot.slane %v2509, %v2513
          %v2517 = vsel %vm941, %v2504, 0
          %2519 = vmatprep.subr.mxu0 0.0
          %2520 = vmatpush1.msra.mxu0 %v2505
          %2521 = vmatprep.subr.mxu0 0.0
          %2522 = vmatpush1.msra.mxu0 %v2506
          %2523 = vmatprep.subr.mxu0 0.0
          %2524 = vmatpush1.msra.mxu0 %v2507
          %2525 = vmatprep.subr.mxu0 0.0
          %2526 = vmatpush1.msra.mxu0 %v2508
          %2527 = vmatprep.subr.mxu0 0.0
          %2528 = vmatpush1.msra.mxu0 0.0
          %2529 = vmatprep.subr.mxu0 0.0
          %2530 = vmatpush1.msra.mxu0 0.0
          %2531 = vmatprep.subr.mxu0 0.0
          %2532 = vmatpush1.msra.mxu0 0.0
          %2533 = vmatprep.subr.mxu0 0.0
          %2534 = vmatpush1.msra.mxu0 0.0
          %2535 = vmatprep.subr.mxu0 0.0
          %2536 = vmatpush1.msra.mxu0 0.0
          %2537 = vmatprep.subr.mxu0 0.0
          %2538 = vmatpush1.msra.mxu0 0.0
          %2539 = vmatprep.subr.mxu0 0.0
          %2540 = vmatpush1.msra.mxu0 0.0
          %2541 = vmatprep.subr.mxu0 0.0
          %2542 = vmatpush1.msra.mxu0 0.0
          %2543 = vmatprep.subr.mxu0 0.0
          %2544 = vmatpush1.msra.mxu0 0.0
          %2545 = vmatprep.subr.mxu0 0.0
          %2546 = vmatpush1.msra.mxu0 0.0
          %2547 = vmatprep.subr.mxu0 0.0
          %2548 = vmatpush1.msra.mxu0 0.0
          %2549 = vmatprep.subr.mxu0 0.0
          %2550 = vmatpush1.msra.mxu0 0.0
          %2551 = vmatprep.subr.mxu0 0.0
          %2552 = vmatpush1.msra.mxu0 0.0
          %2553 = vmatprep.subr.mxu0 0.0
          %2554 = vmatpush1.msra.mxu0 0.0
          %2555 = vmatprep.subr.mxu0 0.0
          %2556 = vmatpush1.msra.mxu0 0.0
          %2557 = vmatprep.subr.mxu0 0.0
          %2558 = vmatpush1.msra.mxu0 0.0
          %2559 = vmatprep.subr.mxu0 0.0
          %2560 = vmatpush1.msra.mxu0 0.0
          %2561 = vmatprep.subr.mxu0 0.0
          %2562 = vmatpush1.msra.mxu0 0.0
          %2563 = vmatprep.subr.mxu0 0.0
          %2564 = vmatpush1.msra.mxu0 0.0
          %2565 = vmatprep.subr.mxu0 0.0
          %2566 = vmatpush1.msra.mxu0 0.0
          %2567 = vmatprep.subr.mxu0 0.0
          %2568 = vmatpush1.msra.mxu0 0.0
          %2569 = vmatprep.subr.mxu0 0.0
          %2570 = vmatpush1.msra.mxu0 0.0
          %2571 = vmatprep.subr.mxu0 0.0
          %2572 = vmatpush1.msra.mxu0 0.0
          %2573 = vmatprep.subr.mxu0 0.0
          %2574 = vmatpush1.msra.mxu0 0.0
          %2575 = vmatprep.subr.mxu0 0.0
          %2576 = vmatpush1.msra.mxu0 0.0
          %2577 = vmatprep.subr.mxu0 0.0
          %2578 = vmatpush1.msra.mxu0 0.0
          %2579 = vmatprep.subr.mxu0 0.0
          %2580 = vmatpush1.msra.mxu0 0.0
          %2581 = vmatprep.subr.mxu0 0.0
          %2582 = vmatpush1.msra.mxu0 0.0
          %2583 = vmatprep.mubr.f32.mxu0 0.0
          %2584 = vmatmul.mubr.f32.gmra.mrb[0].mxu0 %v2517
          %v2585 = vpop.f32.mrb[0].mxu0
          %v2586 = vadd.f32 %v2514, %v2585
          %v2587 = vpop.f32.mrb[0].mxu0
          %2588 = vdwg.mxu0
          %v2589 = vmax.f32 %v2586, 0.0
          %vm2590 = vcmask 257024
          %v2591 = vsel %vm2590, %v2589, 0.0
          %v2592 = vrot.slane %v2591, 4
          %v2593 = vadd.f32 %v2591, %v2592
          %v2594 = vrot.slane %v2593, 2
          %v2595 = vadd.f32 %v2593, %v2594
          %v2596 = vrot.slane %v2595, 1
          %v2597 = vadd.f32 %v2595, %v2596
          %v2598 = vrcp.pop 4.0
          %v2599 = vmul.f32 %v2597, %v2598
          %v2600 = vsub.f32 %v2589, %v2599
          %v2601 = vmul.f32 %v2600, %v2600
          %v2602 = vsel %vm2590, %v2601, 0.0
          %v2603 = vrot.slane %v2602, 4
          %v2604 = vadd.f32 %v2602, %v2603
          %v2605 = vrot.slane %v2604, 2
          %v2606 = vadd.f32 %v2604, %v2605
          %v2607 = vrot.slane %v2606, 1
          %v2608 = vadd.f32 %v2606, %v2607
          %v2609 = vmul.f32 %v2608, %v2598
          %v2610 = vadd.f32 %v2609, 1e-05
          %v2611 = vrsqrt.pop %v2610
          %v2612 = vmul.f32 %v2600, %v2611
          %v2613 = vld [vmem:[%s18] sm:$0x1]
          %v2615 = vlaneseq
          %v2616 = vshrl.u32 %v2615, 7
          %v2617 = vsub.s32 0, %v2616
          %v2618 = vrot.slane %v2613, %v2617
          %v2620 = vmul.f32 %v2612, %v2618
          %v2621 = vld [vmem:[%s19] sm:$0x1]
          %v2623 = vlaneseq
          %v2624 = vshrl.u32 %v2623, 7
          %v2625 = vsub.s32 0, %v2624
          %v2626 = vrot.slane %v2621, %v2625
          %v2628 = vadd.f32 %v2620, %v2626
          %v2629 = vld [vmem:[%s20] sm:$0xff]
          %v2630 = vld [vmem:[%s20 + $0x8] sm:$0xff]
          %v2631 = vld [vmem:[%s20 + $0x10] sm:$0xff]
          %v2632 = vld [vmem:[%s20 + $0x18] sm:$0xff]
          %v2633 = vld [vmem:[%s21] sm:$0x1]
          %v2635 = vlaneseq
          %v2636 = vshrl.u32 %v2635, 7
          %v2637 = vsub.s32 0, %v2636
          %v2638 = vrot.slane %v2633, %v2637
          %v2641 = vsel %vm941, %v2628, 0
          %2643 = vmatprep.subr.mxu0 0.0
          %2644 = vmatpush1.msra.mxu0 %v2629
          %2645 = vmatprep.subr.mxu0 0.0
          %2646 = vmatpush1.msra.mxu0 %v2630
          %2647 = vmatprep.subr.mxu0 0.0
          %2648 = vmatpush1.msra.mxu0 %v2631
          %2649 = vmatprep.subr.mxu0 0.0
          %2650 = vmatpush1.msra.mxu0 %v2632
          %2651 = vmatprep.subr.mxu0 0.0
          %2652 = vmatpush1.msra.mxu0 0.0
          %2653 = vmatprep.subr.mxu0 0.0
          %2654 = vmatpush1.msra.mxu0 0.0
          %2655 = vmatprep.subr.mxu0 0.0
          %2656 = vmatpush1.msra.mxu0 0.0
          %2657 = vmatprep.subr.mxu0 0.0
          %2658 = vmatpush1.msra.mxu0 0.0
          %2659 = vmatprep.subr.mxu0 0.0
          %2660 = vmatpush1.msra.mxu0 0.0
          %2661 = vmatprep.subr.mxu0 0.0
          %2662 = vmatpush1.msra.mxu0 0.0
          %2663 = vmatprep.subr.mxu0 0.0
          %2664 = vmatpush1.msra.mxu0 0.0
          %2665 = vmatprep.subr.mxu0 0.0
          %2666 = vmatpush1.msra.mxu0 0.0
          %2667 = vmatprep.subr.mxu0 0.0
          %2668 = vmatpush1.msra.mxu0 0.0
          %2669 = vmatprep.subr.mxu0 0.0
          %2670 = vmatpush1.msra.mxu0 0.0
          %2671 = vmatprep.subr.mxu0 0.0
          %2672 = vmatpush1.msra.mxu0 0.0
          %2673 = vmatprep.subr.mxu0 0.0
          %2674 = vmatpush1.msra.mxu0 0.0
          %2675 = vmatprep.subr.mxu0 0.0
          %2676 = vmatpush1.msra.mxu0 0.0
          %2677 = vmatprep.subr.mxu0 0.0
          %2678 = vmatpush1.msra.mxu0 0.0
          %2679 = vmatprep.subr.mxu0 0.0
          %2680 = vmatpush1.msra.mxu0 0.0
          %2681 = vmatprep.subr.mxu0 0.0
          %2682 = vmatpush1.msra.mxu0 0.0
          %2683 = vmatprep.subr.mxu0 0.0
          %2684 = vmatpush1.msra.mxu0 0.0
          %2685 = vmatprep.subr.mxu0 0.0
          %2686 = vmatpush1.msra.mxu0 0.0
          %2687 = vmatprep.subr.mxu0 0.0
          %2688 = vmatpush1.msra.mxu0 0.0
          %2689 = vmatprep.subr.mxu0 0.0
          %2690 = vmatpush1.msra.mxu0 0.0
          %2691 = vmatprep.subr.mxu0 0.0
          %2692 = vmatpush1.msra.mxu0 0.0
          %2693 = vmatprep.subr.mxu0 0.0
          %2694 = vmatpush1.msra.mxu0 0.0
          %2695 = vmatprep.subr.mxu0 0.0
          %2696 = vmatpush1.msra.mxu0 0.0
          %2697 = vmatprep.subr.mxu0 0.0
          %2698 = vmatpush1.msra.mxu0 0.0
          %2699 = vmatprep.subr.mxu0 0.0
          %2700 = vmatpush1.msra.mxu0 0.0
          %2701 = vmatprep.subr.mxu0 0.0
          %2702 = vmatpush1.msra.mxu0 0.0
          %2703 = vmatprep.subr.mxu0 0.0
          %2704 = vmatpush1.msra.mxu0 0.0
          %2705 = vmatprep.subr.mxu0 0.0
          %2706 = vmatpush1.msra.mxu0 0.0
          %2707 = vmatprep.mubr.f32.mxu0 0.0
          %2708 = vmatmul.mubr.f32.gmra.mrb[0].mxu0 %v2641
          %v2709 = vpop.f32.mrb[0].mxu0
          %v2710 = vadd.f32 %v2638, %v2709
          %v2711 = vpop.f32.mrb[0].mxu0
          %2712 = vdwg.mxu0
          %vm2713 = vcmask 27648
          %2714 = vst.msk [vmem:[#allocation4] sm:$0xf] %vm2713, %v2710
        $region146: #{k_bert_wcl_forward.1} parent=103 // pred_fallthru
          _
        // Predicated region
        $region147: #{k_bert_wcl_forward.1} parent=103 // pred_check
          %p2715 = pneg %p558
        $region148: #{k_bert_wcl_forward.1} parent=103 // pred_check_branch
          %2717 = sbr.rel (%p2715) target = $region150
        $region149: #{k_bert_wcl_forward.1} parent=103 // pred_region
          %s2719 = ssub.s32 64, 64
          %2720 = vsyncadd [#allocation5], %s2719
          %s2722 = sshll.u32 [#allocation4], 4
          %s2723 = int_to_ptr.vmem [resolvable:$true] %s2722
          %2725 = dma.vmem_to_hbm [thread:$0]  %s2723, 64, %s22, [#allocation5]
        $region150: #{k_bert_wcl_forward.1} parent=103 // pred_fallthru
          _
        // Predicated region
        $region151: #{k_bert_wcl_forward.1} parent=103 // pred_check
          %p2726 = pneg %p558
        $region152: #{k_bert_wcl_forward.1} parent=103 // pred_check_branch
          %2728 = sbr.rel (%p2726) target = $region154
        $region153: #{k_bert_wcl_forward.1} parent=103 // pred_region
          %2729 = dma.done [#allocation5], 64
        $region154: #{k_bert_wcl_forward.1} parent=103 // pred_fallthru
          _
      $region104: #{k_bert_wcl_forward.1} parent=5 // pred_fallthru
        _
      %p2730 = scmp.le.s32.totalorder 2, %s29
      // Predicated region
      $region155: #{k_bert_wcl_forward.1} parent=5 // pred_check
        %p2731 = pneg %p2730
      $region156: #{k_bert_wcl_forward.1} parent=5 // pred_check_branch
        %2733 = sbr.rel (%p2731) target = $region158
      $region157: #{k_bert_wcl_forward.1} parent=5 // pred_region
        %s2734 = ssub.s32 %s29, 2
      $region158: #{k_bert_wcl_forward.1} parent=5 // pred_fallthru
        _
    $region6: #{k_bert_wcl_forward.1} parent=1 // loop_footer
      %s33 = sadd.s32 1, %s29
    $region7: #{k_bert_wcl_forward.1} parent=1 // loop_footer_branch
      %28 = sbr.rel target = $region3
    $region8: #{k_bert_wcl_forward.1} parent=1 // loop_exit
      _
    %2735 = vsyncpa [#allocation5], 1
    %s2736 = scalar_lea.sflag [#allocation5], 1
    %2737 = vsyncpa %s2736, 1
  %2738 = vsyncmov [#allocation3]
  %s2739 = vpop.sfrf %2738
  %p2740 = scmp.eq.s32.totalorder %s2739, 0
  %p2741 = pneg %p2740
  %2743 = shalt.err (%p2741)

</llo_original>
